<compile_context>
chip_gen: v5e
topology: v5e:2x2
jax: 0.10.0
libtpu: 0.0.40
codegen_flags: <defaults>
</compile_context>

<pallas_src>
import functools

import jax
import jax.numpy as jnp
from jax.experimental import pallas as pl
from jax.experimental.pallas import tpu as pltpu

EPS = 1e-5
LANE = 128                     # channel dims padded to lane width
STATS_ROWS = 8                 # sublane-aligned (sum, sumsq) accumulator rows
ROW_TARGET = 512               # rows of the (rows, C) matmul tile per grid step
VMEM_LIMIT = 48 * 1024 * 1024  # safe on v5e/v6e (128 MiB) and v7x (64 MiB)


def _round_up(x, m):
    return (x + m - 1) // m * m


def _cparams(dims):
    return pltpu.CompilerParams(dimension_semantics=dims,
                                vmem_limit_bytes=VMEM_LIMIT)


def _single_buffer_mode():
    """Single-buffer grid-invariant blocks (weights / stats / gamma-beta): they
    are DMA'd once, so double-buffering only wastes VMEM (matters on v7x)."""
    try:
        try:
            mode = pl.Buffered(1)
        except TypeError:
            mode = pl.Buffered(buffer_count=1)
        pl.BlockSpec((8, 128), None, pipeline_mode=mode)   # probe kwarg support
        return {"pipeline_mode": mode}
    except Exception:
        return {}


_SINGLE_BUF = _single_buffer_mode()


def _rep_spec(shape):
    nd = len(shape)
    return pl.BlockSpec(shape, lambda *_: (0,) * nd, **_SINGLE_BUF)


def _row_block(h, w, target=ROW_TARGET):
    """Largest divisor th of h such that th*w rows fit the per-step row target."""
    best = 1
    for d in range(1, h + 1):
        if h % d == 0 and d * w <= target:
            best = d
    return best


# ------------------------------ kernel helpers ------------------------------ #

def _bn_scale_shift(stats, gamma_beta, inv_n):
    """stats: (P, STATS_ROWS, C) per-image partial sums; returns (1, C) scale/shift."""
    s = jnp.sum(stats, axis=0)                       # combine per-image partials
    mean = s[0:1, :] * inv_n
    var = jnp.maximum(s[1:2, :] * inv_n - mean * mean, 0.0)
    scale = jax.lax.rsqrt(var + EPS) * gamma_beta[0:1, :]
    shift = gamma_beta[1:2, :] - mean * scale
    return scale, shift


# ------------------------------- kernel bodies ------------------------------ #

def _conv1x1_stats_kernel(x_ref, w_ref, y_ref, s_ref):
    """1x1 conv (matmul) -> bf16 output + per-image (sum, sumsq) on bf16 values."""
    @pl.when(pl.program_id(1) == 0)
    def _():
        s_ref[...] = jnp.zeros_like(s_ref)

    th, w, cin = x_ref.shape
    x2 = x_ref[...].reshape(th * w, cin)
    y = jnp.dot(x2, w_ref[...], preferred_element_type=jnp.float32)
    yb = y.astype(jnp.bfloat16)
    y_ref[...] = yb.reshape(th, w, -1)
    yf = yb.astype(jnp.float32)                 # stats on the stored (bf16) values
    s_ref[0:1, :] = s_ref[0:1, :] + jnp.sum(yf, axis=0, keepdims=True)
    s_ref[1:2, :] = s_ref[1:2, :] + jnp.sum(yf * yf, axis=0, keepdims=True)


def _conv3x3_kernel(ym_ref, yc_ref, yp_ref, s1_ref, gb_ref, w2_ref,
                    y2_ref, s2_ref, hrow, *, stride, H, W, Wo, inv_n1):
    """In-kernel im2col for the 3x3 conv: conv1's BN is applied to each row tap,
    the column-padded row lives in VMEM scratch, 9 tap matmuls accumulate in f32."""
    r = pl.program_id(1)

    @pl.when(r == 0)
    def _():
        s2_ref[...] = jnp.zeros_like(s2_ref)

    scale, shift = _bn_scale_shift(s1_ref[...], gb_ref[...], inv_n1)

    # Zero the scratch so padded columns 0 and W+1 (and the tail) stay zero.
    hrow[...] = jnp.zeros_like(hrow)

    cout = w2_ref.shape[2]
    acc = jnp.zeros((Wo, cout), jnp.float32)
    for ky, yref in enumerate((ym_ref, yc_ref, yp_ref)):
        in_row = r * stride + (ky - 1)
        valid = jnp.logical_and(in_row >= 0, in_row < H).astype(jnp.float32)
        h = (yref[...].astype(jnp.float32) * scale + shift) * valid      # (W, Cin)
        hrow[1:W + 1, :] = h
        for kx in range(3):
            if stride == 1:
                col = hrow[kx:kx + Wo, :]
            else:
                col = hrow[pl.ds(kx, Wo, stride), :]
            acc = acc + jnp.dot(col.astype(jnp.bfloat16), w2_ref[3 * ky + kx],
                                preferred_element_type=jnp.float32)

    yb = acc.astype(jnp.bfloat16)
    y2_ref[...] = yb
    yf = yb.astype(jnp.float32)
    s2_ref[0:1, :] = s2_ref[0:1, :] + jnp.sum(yf, axis=0, keepdims=True)
    s2_ref[1:2, :] = s2_ref[1:2, :] + jnp.sum(yf * yf, axis=0, keepdims=True)


def _conv1x1_bn_in_stats_kernel(y_ref, s_in_ref, gb_ref, w_ref, o_ref, s_ref,
                                *, inv_n):
    """BN-apply the previous conv's output (global batch stats), then 1x1 conv + stats."""
    @pl.when(pl.program_id(1) == 0)
    def _():
        s_ref[...] = jnp.zeros_like(s_ref)

    th, wo, c = y_ref.shape
    scale, shift = _bn_scale_shift(s_in_ref[...], gb_ref[...], inv_n)
    h = y_ref[...].astype(jnp.float32).reshape(th * wo, c) * scale + shift
    y = jnp.dot(h.astype(jnp.bfloat16), w_ref[...],
                preferred_element_type=jnp.float32)
    yb = y.astype(jnp.bfloat16)
    o_ref[...] = yb.reshape(th, wo, -1)
    yf = yb.astype(jnp.float32)
    s_ref[0:1, :] = s_ref[0:1, :] + jnp.sum(yf, axis=0, keepdims=True)
    s_ref[1:2, :] = s_ref[1:2, :] + jnp.sum(yf * yf, axis=0, keepdims=True)


def _conv3_plus_shortcut_kernel(y_ref, xs_ref, s_in_ref, gb_ref, w3_ref, w4_ref,
                                y3_ref, y4_ref, s3_ref, s4_ref, *, inv_n):
    """Fused: BN(conv2) -> conv3 matmul+stats  and  shortcut conv4 matmul+stats."""
    @pl.when(pl.program_id(1) == 0)
    def _():
        s3_ref[...] = jnp.zeros_like(s3_ref)
        s4_ref[...] = jnp.zeros_like(s4_ref)

    th, wo, c = y_ref.shape
    scale, shift = _bn_scale_shift(s_in_ref[...], gb_ref[...], inv_n)
    h = y_ref[...].astype(jnp.float32).reshape(th * wo, c) * scale + shift
    y3 = jnp.dot(h.astype(jnp.bfloat16), w3_ref[...],
                 preferred_element_type=jnp.float32)
    y3b = y3.astype(jnp.bfloat16)
    y3_ref[...] = y3b.reshape(th, wo, -1)
    y3f = y3b.astype(jnp.float32)
    s3_ref[0:1, :] = s3_ref[0:1, :] + jnp.sum(y3f, axis=0, keepdims=True)
    s3_ref[1:2, :] = s3_ref[1:2, :] + jnp.sum(y3f * y3f, axis=0, keepdims=True)

    cin = xs_ref.shape[2]
    x2 = xs_ref[...].reshape(th * wo, cin)
    y4 = jnp.dot(x2, w4_ref[...], preferred_element_type=jnp.float32)
    y4b = y4.astype(jnp.bfloat16)
    y4_ref[...] = y4b.reshape(th, wo, -1)
    y4f = y4b.astype(jnp.float32)
    s4_ref[0:1, :] = s4_ref[0:1, :] + jnp.sum(y4f, axis=0, keepdims=True)
    s4_ref[1:2, :] = s4_ref[1:2, :] + jnp.sum(y4f * y4f, axis=0, keepdims=True)


def _bn_relu_kernel(y_ref, s_ref, gb_ref, o_ref, *, inv_n):
    scale, shift = _bn_scale_shift(s_ref[...], gb_ref[...], inv_n)
    y = y_ref[...].astype(jnp.float32)
    o_ref[...] = jnp.maximum(y * scale.reshape(1, 1, -1)
                             + shift.reshape(1, 1, -1), 0.0)


def _bn_relu_add_bn_kernel(y3_ref, y4_ref, s3_ref, s4_ref, gb_ref, o_ref, *, inv_n):
    sc3, sh3 = _bn_scale_shift(s3_ref[...], gb_ref[...], inv_n)
    sc4, sh4 = _bn_scale_shift(s4_ref[...], gb_ref[...], inv_n)
    a = jnp.maximum(y3_ref[...].astype(jnp.float32) * sc3.reshape(1, 1, -1)
                    + sh3.reshape(1, 1, -1), 0.0)
    b = (y4_ref[...].astype(jnp.float32) * sc4.reshape(1, 1, -1)
         + sh4.reshape(1, 1, -1))
    o_ref[...] = a + b


# ------------------------------ pallas wrappers ------------------------------ #

def conv1x1_stats(x, w, th):
    n, h, wd, cin = x.shape
    cout = w.shape[1]
    return pl.pallas_call(
        _conv1x1_stats_kernel,
        grid=(n, h // th),
        in_specs=[pl.BlockSpec((None, th, wd, cin), lambda b, i: (b, i, 0, 0)),
                  _rep_spec((cin, cout))],
        out_specs=(pl.BlockSpec((None, th, wd, cout), lambda b, i: (b, i, 0, 0)),
                   pl.BlockSpec((None, STATS_ROWS, cout), lambda b, i: (b, 0, 0))),
        out_shape=(jax.ShapeDtypeStruct((n, h, wd, cout), jnp.bfloat16),
                   jax.ShapeDtypeStruct((n, STATS_ROWS, cout), jnp.float32)),
        compiler_params=_cparams(("parallel", "arbitrary")),
    )(x, w)


def conv3x3_bn_stats(y1, s1, gb, w2, *, stride, Ho, Wo, inv_n1):
    n, H, W, c = y1.shape
    cout = w2.shape[2]
    hrow_rows = _round_up(W + 2, 8)
    kern = functools.partial(_conv3x3_kernel, stride=stride, H=H, W=W, Wo=Wo,
                             inv_n1=inv_n1)

    def row_spec(ky):
        def imap(b, r):
            row = r * stride + (ky - 1)
            row = jnp.minimum(jnp.maximum(row, 0), H - 1)   # clamp; masked in-kernel
            return (b, row, 0, 0)
        return pl.BlockSpec((None, None, W, c), imap)

    # TODO(synk): a multi-row halo (manual DMA) variant would amortize the
    # per-row DMA overhead for large images; one output row per step is enough
    # to keep the MXU fed here.
    return pl.pallas_call(
        kern,
        grid=(n, Ho),
        in_specs=[row_spec(0), row_spec(1), row_spec(2),
                  _rep_spec(s1.shape), _rep_spec(gb.shape), _rep_spec(w2.shape)],
        out_specs=(pl.BlockSpec((None, None, Wo, cout), lambda b, r: (b, r, 0, 0)),
                   pl.BlockSpec((None, STATS_ROWS, cout), lambda b, r: (b, 0, 0))),
        out_shape=(jax.ShapeDtypeStruct((n, Ho, Wo, cout), jnp.bfloat16),
                   jax.ShapeDtypeStruct((n, STATS_ROWS, cout), jnp.float32)),
        scratch_shapes=[pltpu.VMEM((hrow_rows, c), jnp.float32)],
        compiler_params=_cparams(("parallel", "arbitrary")),
    )(y1, y1, y1, s1, gb, w2)


def conv3_only(y2, s2, gb, w3, *, tho, inv_n):
    n, ho, wo, c = y2.shape
    cout = w3.shape[1]
    kern = functools.partial(_conv1x1_bn_in_stats_kernel, inv_n=inv_n)
    return pl.pallas_call(
        kern,
        grid=(n, ho // tho),
        in_specs=[pl.BlockSpec((None, tho, wo, c), lambda b, i: (b, i, 0, 0)),
                  _rep_spec(s2.shape), _rep_spec(gb.shape), _rep_spec(w3.shape)],
        out_specs=(pl.BlockSpec((None, tho, wo, cout), lambda b, i: (b, i, 0, 0)),
                   pl.BlockSpec((None, STATS_ROWS, cout), lambda b, i: (b, 0, 0))),
        out_shape=(jax.ShapeDtypeStruct((n, ho, wo, cout), jnp.bfloat16),
                   jax.ShapeDtypeStruct((n, STATS_ROWS, cout), jnp.float32)),
        compiler_params=_cparams(("parallel", "arbitrary")),
    )(y2, s2, gb, w3)


def conv3_with_shortcut(y2, xs, s2, gb, w3, w4, *, tho, inv_n):
    n, ho, wo, c = y2.shape
    cin = xs.shape[3]
    cout = w3.shape[1]
    kern = functools.partial(_conv3_plus_shortcut_kernel, inv_n=inv_n)
    spec_in = pl.BlockSpec((None, tho, wo, c), lambda b, i: (b, i, 0, 0))
    spec_xs = pl.BlockSpec((None, tho, wo, cin), lambda b, i: (b, i, 0, 0))
    spec_y = pl.BlockSpec((None, tho, wo, cout), lambda b, i: (b, i, 0, 0))
    spec_s = pl.BlockSpec((None, STATS_ROWS, cout), lambda b, i: (b, 0, 0))
    return pl.pallas_call(
        kern,
        grid=(n, ho // tho),
        in_specs=[spec_in, spec_xs, _rep_spec(s2.shape), _rep_spec(gb.shape),
                  _rep_spec(w3.shape), _rep_spec(w4.shape)],
        out_specs=(spec_y, spec_y, spec_s, spec_s),
        out_shape=(jax.ShapeDtypeStruct((n, ho, wo, cout), jnp.bfloat16),
                   jax.ShapeDtypeStruct((n, ho, wo, cout), jnp.bfloat16),
                   jax.ShapeDtypeStruct((n, STATS_ROWS, cout), jnp.float32),
                   jax.ShapeDtypeStruct((n, STATS_ROWS, cout), jnp.float32)),
        compiler_params=_cparams(("parallel", "arbitrary")),
    )(y2, xs, s2, gb, w3, w4)


def bn_relu(y3, s3, gb, *, tho, inv_n):
    n, ho, wo, c = y3.shape
    kern = functools.partial(_bn_relu_kernel, inv_n=inv_n)
    spec = pl.BlockSpec((None, tho, wo, c), lambda b, i: (b, i, 0, 0))
    return pl.pallas_call(
        kern,
        grid=(n, ho // tho),
        in_specs=[spec, _rep_spec(s3.shape), _rep_spec(gb.shape)],
        out_specs=spec,
        out_shape=jax.ShapeDtypeStruct((n, ho, wo, c), jnp.float32),
        compiler_params=_cparams(("parallel", "parallel")),
    )(y3, s3, gb)


def bn_relu_add_bn(y3, y4, s3, s4, gb, *, tho, inv_n):
    n, ho, wo, c = y3.shape
    kern = functools.partial(_bn_relu_add_bn_kernel, inv_n=inv_n)
    spec = pl.BlockSpec((None, tho, wo, c), lambda b, i: (b, i, 0, 0))
    return pl.pallas_call(
        kern,
        grid=(n, ho // tho),
        in_specs=[spec, spec, _rep_spec(s3.shape), _rep_spec(s4.shape),
                  _rep_spec(gb.shape)],
        out_specs=spec,
        out_shape=jax.ShapeDtypeStruct((n, ho, wo, c), jnp.float32),
        compiler_params=_cparams(("parallel", "parallel")),
    )(y3, y4, s3, s4, gb)


# ---------------------------------- glue ------------------------------------ #

def _pad_last(a, c):
    return jnp.pad(a, ((0, 0),) * (a.ndim - 1) + ((0, c - a.shape[-1]),))


def _gb_rows(gamma, beta, c_pad):
    gb = jnp.zeros((STATS_ROWS, c_pad), jnp.float32)
    gb = gb.at[0, :gamma.shape[0]].set(gamma)
    gb = gb.at[1, :beta.shape[0]].set(beta)
    return gb


def init_bottleneck_params(key, in_c, out_c, hid_c):
    ks = jax.random.split(key, 12)

    def nrm(k, shape, scale=0.1):
        return scale * jax.random.normal(k, shape, dtype=jnp.float32)

    return dict(
        # conv weights kept in torch layout (Cout, Cin, kh, kw)
        w1=nrm(ks[0], (hid_c, in_c, 1, 1)), b1=nrm(ks[1], (hid_c,)),
        w2=nrm(ks[2], (hid_c, hid_c, 3, 3)), b2=nrm(ks[3], (hid_c,)),
        w3=nrm(ks[4], (out_c, hid_c, 1, 1)), b3=nrm(ks[5], (out_c,)),
        w4=nrm(ks[6], (out_c, in_c, 1, 1)), b4=nrm(ks[7], (out_c,)),
        g_h=1.0 + nrm(ks[8], (hid_c,)), be_h=nrm(ks[9], (hid_c,)),
        g_o=1.0 + nrm(ks[10], (out_c,)), be_o=nrm(ks[11], (out_c,)),
    )


def bottleneck_forward(params, x_nchw, *, stride):
    """Pallas implementation of BottleNeck.forward. Input/output are NCHW."""
    N, cin, H, W = x_nchw.shape
    hid = params["w1"].shape[0]
    out_c = params["w3"].shape[0]
    Ho = (H - 1) // stride + 1
    Wo = (W - 1) // stride + 1

    cin_p = _round_up(cin, LANE)
    hid_p = _round_up(hid, LANE)
    out_p = _round_up(out_c, LANE)

    x = jnp.transpose(x_nchw, (0, 2, 3, 1)).astype(jnp.float32)       # NHWC
    x = _pad_last(x, cin_p).astype(jnp.bfloat16)                      # (N,H,W,cin_p)

    # Weights: torch (Cout, Cin, kh, kw) -> zero-padded bf16 matmul layouts.
    def mat1x1(w, ci, co):
        m = jnp.zeros((ci, co), jnp.float32)
        m = m.at[:w.shape[1], :w.shape[0]].set(w[:, :, 0, 0].T)
        return m.astype(jnp.bfloat16)

    w1 = mat1x1(params["w1"], cin_p, hid_p)
    w3 = mat1x1(params["w3"], hid_p, out_p)
    w4 = mat1x1(params["w4"], cin_p, out_p)
    w2_taps = jnp.transpose(params["w2"], (2, 3, 1, 0))               # (3,3,Cin,Cout)
    w2 = jnp.zeros((3, 3, hid_p, hid_p), jnp.float32)
    w2 = w2.at[:, :, :hid, :hid].set(w2_taps)
    w2 = w2.reshape(9, hid_p, hid_p).astype(jnp.bfloat16)

    gb_h = _gb_rows(params["g_h"], params["be_h"], hid_p)
    gb_o = _gb_rows(params["g_o"], params["be_o"], out_p)
    # NOTE: conv biases (b1..b4) are dropped: a per-channel constant added
    # before batch-stat BatchNorm cancels exactly in the forward output.

    inv_n1 = 1.0 / (N * H * W)
    inv_n2 = 1.0 / (N * Ho * Wo)

    th1 = _row_block(H, W)
    tho = _row_block(Ho, Wo)

    # conv1 (1x1): matmul + per-image partial BN stats (bf16 out; its BN apply
    # is fused into conv2's tap reads).
    y1, s1 = conv1x1_stats(x, w1, th1)

    # conv2 (3x3, stride, pad=1): in-kernel im2col (row-tap BlockSpecs + VMEM
    # column-padded scratch) with conv1's BN applied per tap.
    y2, s2 = conv3x3_bn_stats(y1, s1, gb_h, w2, stride=stride, Ho=Ho, Wo=Wo,
                              inv_n1=inv_n1)

    if stride == 2:
        xs = x[:, ::stride, ::stride, :]          # shortcut conv4 input (1x1, stride 2)
        y3, y4, s3, s4 = conv3_with_shortcut(y2, xs, s2, gb_h, w3, w4,
                                             tho=tho, inv_n=inv_n2)
        out = bn_relu_add_bn(y3, y4, s3, s4, gb_o, tho=tho, inv_n=inv_n2)
    else:
        y3, s3 = conv3_only(y2, s2, gb_h, w3, tho=tho, inv_n=inv_n2)
        out = bn_relu(y3, s3, gb_o, tho=tho, inv_n=inv_n2)

    out = out[..., :out_c]
    return jnp.transpose(out, (0, 3, 1, 2))                           # NCHW


# ---------------------------- pure-JAX references ---------------------------- #

def reference_forward(params, x_nchw, stride, *, bf16_matmul=False):
    """Faithful BottleNeck forward (training-mode BN). bf16_matmul=True applies
    the same bf16 cast on conv operands as the Pallas kernels (f32 accumulate)."""
    x = jnp.transpose(x_nchw, (0, 2, 3, 1)).astype(jnp.float32)

    def conv(h, w, b, s, p):
        w_hwio = jnp.transpose(w, (2, 3, 1, 0))
        if bf16_matmul:
            h = h.astype(jnp.bfloat16)
            w_hwio = w_hwio.astype(jnp.bfloat16)
        y = jax.lax.conv_general_dilated(
            h, w_hwio, (s, s), [(p, p), (p, p)],
            dimension_numbers=("NHWC", "HWIO", "NHWC"),
            preferred_element_type=jnp.float32,
            precision=None if bf16_matmul else jax.lax.Precision.HIGHEST)
        return y + b.reshape(1, 1, 1, -1)

    def bn(h, g, be):
        m = h.mean(axis=(0, 1, 2), keepdims=True)
        v = ((h - m) ** 2).mean(axis=(0, 1, 2), keepdims=True)
        return ((h - m) * jax.lax.rsqrt(v + EPS) * g.reshape(1, 1, 1, -1)
                + be.reshape(1, 1, 1, -1))

    x1 = bn(conv(x, params["w1"], params["b1"], 1, 0), params["g_h"], params["be_h"])
    x1 = bn(conv(x1, params["w2"], params["b2"], stride, 1), params["g_h"], params["be_h"])
    x1 = jnp.maximum(bn(conv(x1, params["w3"], params["b3"], 1, 0),
                        params["g_o"], params["be_o"]), 0.0)
    if stride == 2:
        x2 = bn(conv(x, params["w4"], params["b4"], stride, 0),
                params["g_o"], params["be_o"])
        x1 = x1 + x2
    return jnp.transpose(x1, (0, 3, 1, 2))


# ----------------------------------- main ------------------------------------ #

if __name__ == "__main__":
    key = jax.random.PRNGKey(0)
    kx_, kp = jax.random.split(key)

    N, Cin, H, W = 2, 4, 16, 16
    Cout, Chid = 8, 4

    x = jax.random.normal(kx_, (N, Cin, H, W), dtype=jnp.float32)
    params = init_bottleneck_params(kp, Cin, Cout, Chid)

    for stride in (2, 1):
        fwd = jax.jit(functools.partial(bottleneck_forward, stride=stride))
        out = jax.block_until_ready(fwd(params, x))

        assert out.shape == (N, Cout, H // stride, W // stride), out.shape

        # Tight check vs a reference that applies the same bf16-operand matmul
        # casts (verifies kernel logic), plus a looser sanity check vs the pure
        # f32 reference (bounds the bf16 MXU / bf16-intermediate precision loss).
        ref_mp = reference_forward(params, x, stride, bf16_matmul=True)
        ref_f32 = reference_forward(params, x, stride, bf16_matmul=False)
        err_mp = float(jnp.max(jnp.abs(out - ref_mp)))
        err_f32 = float(jnp.max(jnp.abs(out - ref_f32)))
        if not jnp.allclose(out, ref_mp, atol=3e-2, rtol=3e-2):
            raise AssertionError(
                f"stride={stride}: mismatch vs bf16-matmul reference "
                f"(max abs err {err_mp:.2e})")
        if not jnp.allclose(out, ref_f32, atol=1.5e-1, rtol=1.5e-1):
            raise AssertionError(
                f"stride={stride}: mismatch vs f32 reference "
                f"(max abs err {err_f32:.2e})")

    print("KERNEL_OK")
</pallas_src>

<mosaic_0001>
module attributes {stable_mosaic.version = 11 : i64} {
  func.func @_conv1x1_stats_kernel(%arg0: i32, %arg1: i32, %arg2: memref<1x16x16x128xbf16, #tpu.memory_space<vmem>>, %arg3: memref<128x128xbf16, #tpu.memory_space<vmem>>, %arg4: memref<1x16x16x128xbf16, #tpu.memory_space<vmem>>, %arg5: memref<1x8x128xf32, #tpu.memory_space<vmem>>) attributes {dimension_semantics = [#tpu.dimension_semantics<parallel>, #tpu.dimension_semantics<arbitrary>], iteration_bounds = array<i64: 2, 1>, scalar_prefetch = 0 : i64, scratch_operands = 0 : i64, tpu.core_type = #tpu.core_type<tc>, window_params = [{transform_indices = @transform_0, window_bounds = array<i64: 1, 16, 16, 128>}, {pipeline_mode = #tpu.pipeline_mode<synchronous>, transform_indices = @transform_1, window_bounds = array<i64: 128, 128>}, {transform_indices = @transform_2, window_bounds = array<i64: 1, 16, 16, 128>}, {transform_indices = @transform_3, window_bounds = array<i64: 1, 8, 128>}]} {
    %c0_i32 = arith.constant 0 : i32
    %0 = arith.cmpi eq, %arg1, %c0_i32 : i32
    %1 = arith.extui %0 : i1 to i32
    %c0_i32_0 = arith.constant 0 : i32
    %2 = arith.cmpi ne, %1, %c0_i32_0 : i32
    scf.if %2 {
      %cst_23 = arith.constant 0.000000e+00 : f32
      %31 = vector.broadcast %cst_23 : f32 to vector<8x128xf32>
      %c0_24 = arith.constant 0 : index
      %c0_25 = arith.constant 0 : index
      %c0_26 = arith.constant 0 : index
      %32 = vector.load %arg5[%c0_24, %c0_25, %c0_26] : memref<1x8x128xf32, #tpu.memory_space<vmem>>, vector<1x8x128xf32>
      %33 = vector.shape_cast %32 : vector<1x8x128xf32> to vector<8x128xf32>
      %34 = vector.shape_cast %31 : vector<8x128xf32> to vector<1x8x128xf32>
      tpu.vector_store %arg5[%c0_24, %c0_25, %c0_26], %34 {strides = array<i32>} : memref<1x8x128xf32, #tpu.memory_space<vmem>>, vector<1x8x128xf32>,
    } else {
    }
    %c0 = arith.constant 0 : index
    %c0_1 = arith.constant 0 : index
    %c0_2 = arith.constant 0 : index
    %c0_3 = arith.constant 0 : index
    %3 = vector.load %arg2[%c0, %c0_1, %c0_2, %c0_3] : memref<1x16x16x128xbf16, #tpu.memory_space<vmem>>, vector<1x16x16x128xbf16>
    %4 = vector.shape_cast %3 : vector<1x16x16x128xbf16> to vector<16x16x128xbf16>
    %5 = vector.shape_cast %4 : vector<16x16x128xbf16> to vector<256x128xbf16>
    %c0_4 = arith.constant 0 : index
    %c0_5 = arith.constant 0 : index
    %6 = vector.load %arg3[%c0_4, %c0_5] : memref<128x128xbf16, #tpu.memory_space<vmem>>, vector<128x128xbf16>
    %cst = arith.constant dense<0.000000e+00> : vector<256x128xf32>
    %7 = tpu.matmul %5, %6, %cst {dimension_numbers = #tpu.dot_dimension_numbers<[1], [0], [0], [1], [0, 0, 1, 1], [], []>} : vector<256x128xbf16>, vector<128x128xbf16>, vector<256x128xf32> -> vector<256x128xf32>
    %8 = arith.truncf %7 : vector<256x128xf32> to vector<256x128xbf16>
    %9 = vector.shape_cast %8 : vector<256x128xbf16> to vector<16x16x128xbf16>
    %c0_6 = arith.constant 0 : index
    %c0_7 = arith.constant 0 : index
    %c0_8 = arith.constant 0 : index
    %c0_9 = arith.constant 0 : index
    %10 = vector.load %arg4[%c0_6, %c0_7, %c0_8, %c0_9] : memref<1x16x16x128xbf16, #tpu.memory_space<vmem>>, vector<1x16x16x128xbf16>
    %11 = vector.shape_cast %10 : vector<1x16x16x128xbf16> to vector<16x16x128xbf16>
    %12 = vector.shape_cast %9 : vector<16x16x128xbf16> to vector<1x16x16x128xbf16>
    tpu.vector_store %arg4[%c0_6, %c0_7, %c0_8, %c0_9], %12 {strides = array<i32>} : memref<1x16x16x128xbf16, #tpu.memory_space<vmem>>, vector<1x16x16x128xbf16>,
    %13 = arith.extf %8 : vector<256x128xbf16> to vector<256x128xf32>
    %c0_10 = arith.constant 0 : index
    %c0_11 = arith.constant 0 : index
    %c0_12 = arith.constant 0 : index
    %14 = vector.load %arg5[%c0_10, %c0_11, %c0_12] : memref<1x8x128xf32, #tpu.memory_space<vmem>>, vector<1x1x128xf32>
    %15 = vector.shape_cast %14 : vector<1x1x128xf32> to vector<1x128xf32>
    %cst_13 = arith.constant dense<0.000000e+00> : vector<128xf32>
    %16 = vector.multi_reduction <add>, %13, %cst_13 [0] : vector<256x128xf32> to vector<128xf32>
    %17 = vector.shape_cast %16 : vector<128xf32> to vector<1x128xf32>
    %18 = arith.addf %15, %17 : vector<1x128xf32>
    %c0_14 = arith.constant 0 : index
    %c0_15 = arith.constant 0 : index
    %c0_16 = arith.constant 0 : index
    %19 = vector.load %arg5[%c0_14, %c0_15, %c0_16] : memref<1x8x128xf32, #tpu.memory_space<vmem>>, vector<1x1x128xf32>
    %20 = vector.shape_cast %19 : vector<1x1x128xf32> to vector<1x128xf32>
    %21 = vector.shape_cast %18 : vector<1x128xf32> to vector<1x1x128xf32>
    tpu.vector_store %arg5[%c0_14, %c0_15, %c0_16], %21 {strides = array<i32>} : memref<1x8x128xf32, #tpu.memory_space<vmem>>, vector<1x1x128xf32>,
    %c0_17 = arith.constant 0 : index
    %c1 = arith.constant 1 : index
    %c0_18 = arith.constant 0 : index
    %22 = vector.load %arg5[%c0_17, %c1, %c0_18] : memref<1x8x128xf32, #tpu.memory_space<vmem>>, vector<1x1x128xf32>
    %23 = vector.shape_cast %22 : vector<1x1x128xf32> to vector<1x128xf32>
    %24 = arith.mulf %13, %13 : vector<256x128xf32>
    %cst_19 = arith.constant dense<0.000000e+00> : vector<128xf32>
    %25 = vector.multi_reduction <add>, %24, %cst_19 [0] : vector<256x128xf32> to vector<128xf32>
    %26 = vector.shape_cast %25 : vector<128xf32> to vector<1x128xf32>
    %27 = arith.addf %23, %26 : vector<1x128xf32>
    %c0_20 = arith.constant 0 : index
    %c1_21 = arith.constant 1 : index
    %c0_22 = arith.constant 0 : index
    %28 = vector.load %arg5[%c0_20, %c1_21, %c0_22] : memref<1x8x128xf32, #tpu.memory_space<vmem>>, vector<1x1x128xf32>
    %29 = vector.shape_cast %28 : vector<1x1x128xf32> to vector<1x128xf32>
    %30 = vector.shape_cast %27 : vector<1x128xf32> to vector<1x1x128xf32>
    tpu.vector_store %arg5[%c0_20, %c1_21, %c0_22], %30 {strides = array<i32>} : memref<1x8x128xf32, #tpu.memory_space<vmem>>, vector<1x1x128xf32>,
    return
  }
  func.func @transform_0(%arg0: i32, %arg1: i32) -> (i32, i32, i32, i32) {
    %c0_i32 = arith.constant 0 : i32
    %c0_i32_0 = arith.constant 0 : i32
    %c0_i32_1 = arith.constant 0 : i32
    return %arg0, %arg1, %c0_i32, %c0_i32_0 : i32, i32, i32, i32
  }
  func.func @transform_1(%arg0: i32, %arg1: i32) -> (i32, i32) {
    %c0_i32 = arith.constant 0 : i32
    %c0_i32_0 = arith.constant 0 : i32
    %c0_i32_1 = arith.constant 0 : i32
    return %c0_i32, %c0_i32_0 : i32, i32
  }
  func.func @transform_2(%arg0: i32, %arg1: i32) -> (i32, i32, i32, i32) {
    %c0_i32 = arith.constant 0 : i32
    %c0_i32_0 = arith.constant 0 : i32
    %c0_i32_1 = arith.constant 0 : i32
    return %arg0, %arg1, %c0_i32, %c0_i32_0 : i32, i32, i32, i32
  }
  func.func @transform_3(%arg0: i32, %arg1: i32) -> (i32, i32, i32) {
    %c0_i32 = arith.constant 0 : i32
    %c0_i32_0 = arith.constant 0 : i32
    %c0_i32_1 = arith.constant 0 : i32
    return %arg0, %c0_i32, %c0_i32_0 : i32, i32, i32
  }
}

module attributes {stable_mosaic.version = 11 : i64} {
  func.func @_conv3_plus_shortcut_kernel(%arg0: i32, %arg1: i32, %arg2: memref<1x8x8x128xbf16, #tpu.memory_space<vmem>>, %arg3: memref<1x8x8x128xbf16, #tpu.memory_space<vmem>>, %arg4: memref<2x8x128xf32, #tpu.memory_space<vmem>>, %arg5: memref<8x128xf32, #tpu.memory_space<vmem>>, %arg6: memref<128x128xbf16, #tpu.memory_space<vmem>>, %arg7: memref<128x128xbf16, #tpu.memory_space<vmem>>, %arg8: memref<1x8x8x128xbf16, #tpu.memory_space<vmem>>, %arg9: memref<1x8x8x128xbf16, #tpu.memory_space<vmem>>, %arg10: memref<1x8x128xf32, #tpu.memory_space<vmem>>, %arg11: memref<1x8x128xf32, #tpu.memory_space<vmem>>) attributes {dimension_semantics = [#tpu.dimension_semantics<parallel>, #tpu.dimension_semantics<arbitrary>], iteration_bounds = array<i64: 2, 1>, scalar_prefetch = 0 : i64, scratch_operands = 0 : i64, tpu.core_type = #tpu.core_type<tc>, window_params = [{transform_indices = @transform_0, window_bounds = array<i64: 1, 8, 8, 128>}, {transform_indices = @transform_1, window_bounds = array<i64: 1, 8, 8, 128>}, {pipeline_mode = #tpu.pipeline_mode<synchronous>, transform_indices = @transform_2, window_bounds = array<i64: 2, 8, 128>}, {pipeline_mode = #tpu.pipeline_mode<synchronous>, transform_indices = @transform_3, window_bounds = array<i64: 8, 128>}, {pipeline_mode = #tpu.pipeline_mode<synchronous>, transform_indices = @transform_4, window_bounds = array<i64: 128, 128>}, {pipeline_mode = #tpu.pipeline_mode<synchronous>, transform_indices = @transform_5, window_bounds = array<i64: 128, 128>}, {transform_indices = @transform_6, window_bounds = array<i64: 1, 8, 8, 128>}, {transform_indices = @transform_7, window_bounds = array<i64: 1, 8, 8, 128>}, {transform_indices = @transform_8, window_bounds = array<i64: 1, 8, 128>}, {transform_indices = @transform_9, window_bounds = array<i64: 1, 8, 128>}]} {
    %c0_i32 = arith.constant 0 : i32
    %0 = arith.cmpi eq, %arg1, %c0_i32 : i32
    %1 = arith.extui %0 : i1 to i32
    %c0_i32_0 = arith.constant 0 : i32
    %2 = arith.cmpi ne, %1, %c0_i32_0 : i32
    scf.if %2 {
      %cst_58 = arith.constant 0.000000e+00 : f32
      %86 = vector.broadcast %cst_58 : f32 to vector<8x128xf32>
      %c0_59 = arith.constant 0 : index
      %c0_60 = arith.constant 0 : index
      %c0_61 = arith.constant 0 : index
      %87 = vector.load %arg10[%c0_59, %c0_60, %c0_61] : memref<1x8x128xf32, #tpu.memory_space<vmem>>, vector<1x8x128xf32>
      %88 = vector.shape_cast %87 : vector<1x8x128xf32> to vector<8x128xf32>
      %89 = vector.shape_cast %86 : vector<8x128xf32> to vector<1x8x128xf32>
      tpu.vector_store %arg10[%c0_59, %c0_60, %c0_61], %89 {strides = array<i32>} : memref<1x8x128xf32, #tpu.memory_space<vmem>>, vector<1x8x128xf32>,
      %cst_62 = arith.constant 0.000000e+00 : f32
      %90 = vector.broadcast %cst_62 : f32 to vector<8x128xf32>
      %c0_63 = arith.constant 0 : index
      %c0_64 = arith.constant 0 : index
      %c0_65 = arith.constant 0 : index
      %91 = vector.load %arg11[%c0_63, %c0_64, %c0_65] : memref<1x8x128xf32, #tpu.memory_space<vmem>>, vector<1x8x128xf32>
      %92 = vector.shape_cast %91 : vector<1x8x128xf32> to vector<8x128xf32>
      %93 = vector.shape_cast %90 : vector<8x128xf32> to vector<1x8x128xf32>
      tpu.vector_store %arg11[%c0_63, %c0_64, %c0_65], %93 {strides = array<i32>} : memref<1x8x128xf32, #tpu.memory_space<vmem>>, vector<1x8x128xf32>,
    } else {
    }
    %c0 = arith.constant 0 : index
    %c0_1 = arith.constant 0 : index
    %c0_2 = arith.constant 0 : index
    %3 = vector.load %arg4[%c0, %c0_1, %c0_2] : memref<2x8x128xf32, #tpu.memory_space<vmem>>, vector<2x8x128xf32>
    %c0_3 = arith.constant 0 : index
    %c0_4 = arith.constant 0 : index
    %4 = vector.load %arg5[%c0_3, %c0_4] : memref<8x128xf32, #tpu.memory_space<vmem>>, vector<8x128xf32>
    %cst = arith.constant dense<0.000000e+00> : vector<8x128xf32>
    %5 = vector.multi_reduction <add>, %3, %cst [0] : vector<2x8x128xf32> to vector<8x128xf32>
    %6 = vector.extract_strided_slice %5 {offsets = [0, 0], sizes = [1, 128], strides = [1, 1]} : vector<8x128xf32> to vector<1x128xf32>
    %cst_5 = arith.constant 7.812500e-03 : f32
    %7 = vector.broadcast %cst_5 : f32 to vector<1x128xf32>
    %8 = arith.mulf %6, %7 : vector<1x128xf32>
    %9 = vector.extract_strided_slice %5 {offsets = [1, 0], sizes = [1, 128], strides = [1, 1]} : vector<8x128xf32> to vector<1x128xf32>
    %cst_6 = arith.constant 7.812500e-03 : f32
    %10 = vector.broadcast %cst_6 : f32 to vector<1x128xf32>
    %11 = arith.mulf %9, %10 : vector<1x128xf32>
    %12 = arith.mulf %8, %8 : vector<1x128xf32>
    %13 = arith.subf %11, %12 : vector<1x128xf32>
    %cst_7 = arith.constant 0.000000e+00 : f32
    %14 = vector.broadcast %cst_7 : f32 to vector<1x128xf32>
    %15 = arith.maximumf %13, %14 : vector<1x128xf32>
    %cst_8 = arith.constant 9.99999974E-6 : f32
    %16 = vector.broadcast %cst_8 : f32 to vector<1x128xf32>
    %17 = arith.addf %15, %16 : vector<1x128xf32>
    %18 = math.rsqrt %17 : vector<1x128xf32>
    %19 = vector.extract_strided_slice %4 {offsets = [0, 0], sizes = [1, 128], strides = [1, 1]} : vector<8x128xf32> to vector<1x128xf32>
    %20 = arith.mulf %18, %19 : vector<1x128xf32>
    %21 = vector.extract_strided_slice %4 {offsets = [1, 0], sizes = [1, 128], strides = [1, 1]} : vector<8x128xf32> to vector<1x128xf32>
    %22 = arith.mulf %8, %20 : vector<1x128xf32>
    %23 = arith.subf %21, %22 : vector<1x128xf32>
    %c0_9 = arith.constant 0 : index
    %c0_10 = arith.constant 0 : index
    %c0_11 = arith.constant 0 : index
    %c0_12 = arith.constant 0 : index
    %24 = vector.load %arg2[%c0_9, %c0_10, %c0_11, %c0_12] : memref<1x8x8x128xbf16, #tpu.memory_space<vmem>>, vector<1x8x8x128xbf16>
    %25 = vector.shape_cast %24 : vector<1x8x8x128xbf16> to vector<8x8x128xbf16>
    %26 = arith.extf %25 : vector<8x8x128xbf16> to vector<8x8x128xf32>
    %27 = vector.shape_cast %26 : vector<8x8x128xf32> to vector<64x128xf32>
    %28 = vector.broadcast %20 : vector<1x128xf32> to vector<64x128xf32>
    %29 = arith.mulf %27, %28 : vector<64x128xf32>
    %30 = vector.broadcast %23 : vector<1x128xf32> to vector<64x128xf32>
    %31 = arith.addf %29, %30 : vector<64x128xf32>
    %32 = arith.truncf %31 : vector<64x128xf32> to vector<64x128xbf16>
    %c0_13 = arith.constant 0 : index
    %c0_14 = arith.constant 0 : index
    %33 = vector.load %arg6[%c0_13, %c0_14] : memref<128x128xbf16, #tpu.memory_space<vmem>>, vector<128x128xbf16>
    %cst_15 = arith.constant dense<0.000000e+00> : vector<64x128xf32>
    %34 = tpu.matmul %32, %33, %cst_15 {dimension_numbers = #tpu.dot_dimension_numbers<[1], [0], [0], [1], [0, 0, 1, 1], [], []>} : vector<64x128xbf16>, vector<128x128xbf16>, vector<64x128xf32> -> vector<64x128xf32>
    %35 = arith.truncf %34 : vector<64x128xf32> to vector<64x128xbf16>
    %36 = vector.shape_cast %35 : vector<64x128xbf16> to vector<8x8x128xbf16>
    %c0_16 = arith.constant 0 : index
    %c0_17 = arith.constant 0 : index
    %c0_18 = arith.constant 0 : index
    %c0_19 = arith.constant 0 : index
    %37 = vector.load %arg8[%c0_16, %c0_17, %c0_18, %c0_19] : memref<1x8x8x128xbf16, #tpu.memory_space<vmem>>, vector<1x8x8x128xbf16>
    %38 = vector.shape_cast %37 : vector<1x8x8x128xbf16> to vector<8x8x128xbf16>
    %39 = vector.shape_cast %36 : vector<8x8x128xbf16> to vector<1x8x8x128xbf16>
    tpu.vector_store %arg8[%c0_16, %c0_17, %c0_18, %c0_19], %39 {strides = array<i32>} : memref<1x8x8x128xbf16, #tpu.memory_space<vmem>>, vector<1x8x8x128xbf16>,
    %40 = arith.extf %35 : vector<64x128xbf16> to vector<64x128xf32>
    %c0_20 = arith.constant 0 : index
    %c0_21 = arith.constant 0 : index
    %c0_22 = arith.constant 0 : index
    %41 = vector.load %arg10[%c0_20, %c0_21, %c0_22] : memref<1x8x128xf32, #tpu.memory_space<vmem>>, vector<1x1x128xf32>
    %42 = vector.shape_cast %41 : vector<1x1x128xf32> to vector<1x128xf32>
    %cst_23 = arith.constant dense<0.000000e+00> : vector<128xf32>
    %43 = vector.multi_reduction <add>, %40, %cst_23 [0] : vector<64x128xf32> to vector<128xf32>
    %44 = vector.shape_cast %43 : vector<128xf32> to vector<1x128xf32>
    %45 = arith.addf %42, %44 : vector<1x128xf32>
    %c0_24 = arith.constant 0 : index
    %c0_25 = arith.constant 0 : index
    %c0_26 = arith.constant 0 : index
    %46 = vector.load %arg10[%c0_24, %c0_25, %c0_26] : memref<1x8x128xf32, #tpu.memory_space<vmem>>, vector<1x1x128xf32>
    %47 = vector.shape_cast %46 : vector<1x1x128xf32> to vector<1x128xf32>
    %48 = vector.shape_cast %45 : vector<1x128xf32> to vector<1x1x128xf32>
    tpu.vector_store %arg10[%c0_24, %c0_25, %c0_26], %48 {strides = array<i32>} : memref<1x8x128xf32, #tpu.memory_space<vmem>>, vector<1x1x128xf32>,
    %c0_27 = arith.constant 0 : index
    %c1 = arith.constant 1 : index
    %c0_28 = arith.constant 0 : index
    %49 = vector.load %arg10[%c0_27, %c1, %c0_28] : memref<1x8x128xf32, #tpu.memory_space<vmem>>, vector<1x1x128xf32>
    %50 = vector.shape_cast %49 : vector<1x1x128xf32> to vector<1x128xf32>
    %51 = arith.mulf %40, %40 : vector<64x128xf32>
    %cst_29 = arith.constant dense<0.000000e+00> : vector<128xf32>
    %52 = vector.multi_reduction <add>, %51, %cst_29 [0] : vector<64x128xf32> to vector<128xf32>
    %53 = vector.shape_cast %52 : vector<128xf32> to vector<1x128xf32>
    %54 = arith.addf %50, %53 : vector<1x128xf32>
    %c0_30 = arith.constant 0 : index
    %c1_31 = arith.constant 1 : index
    %c0_32 = arith.constant 0 : index
    %55 = vector.load %arg10[%c0_30, %c1_31, %c0_32] : memref<1x8x128xf32, #tpu.memory_space<vmem>>, vector<1x1x128xf32>
    %56 = vector.shape_cast %55 : vector<1x1x128xf32> to vector<1x128xf32>
    %57 = vector.shape_cast %54 : vector<1x128xf32> to vector<1x1x128xf32>
    tpu.vector_store %arg10[%c0_30, %c1_31, %c0_32], %57 {strides = array<i32>} : memref<1x8x128xf32, #tpu.memory_space<vmem>>, vector<1x1x128xf32>,
    %c0_33 = arith.constant 0 : index
    %c0_34 = arith.constant 0 : index
    %c0_35 = arith.constant 0 : index
    %c0_36 = arith.constant 0 : index
    %58 = vector.load %arg3[%c0_33, %c0_34, %c0_35, %c0_36] : memref<1x8x8x128xbf16, #tpu.memory_space<vmem>>, vector<1x8x8x128xbf16>
    %59 = vector.shape_cast %58 : vector<1x8x8x128xbf16> to vector<8x8x128xbf16>
    %60 = vector.shape_cast %59 : vector<8x8x128xbf16> to vector<64x128xbf16>
    %c0_37 = arith.constant 0 : index
    %c0_38 = arith.constant 0 : index
    %61 = vector.load %arg7[%c0_37, %c0_38] : memref<128x128xbf16, #tpu.memory_space<vmem>>, vector<128x128xbf16>
    %cst_39 = arith.constant dense<0.000000e+00> : vector<64x128xf32>
    %62 = tpu.matmul %60, %61, %cst_39 {dimension_numbers = #tpu.dot_dimension_numbers<[1], [0], [0], [1], [0, 0, 1, 1], [], []>} : vector<64x128xbf16>, vector<128x128xbf16>, vector<64x128xf32> -> vector<64x128xf32>
    %63 = arith.truncf %62 : vector<64x128xf32> to vector<64x128xbf16>
    %64 = vector.shape_cast %63 : vector<64x128xbf16> to vector<8x8x128xbf16>
    %c0_40 = arith.constant 0 : index
    %c0_41 = arith.constant 0 : index
    %c0_42 = arith.constant 0 : index
    %c0_43 = arith.constant 0 : index
    %65 = vector.load %arg9[%c0_40, %c0_41, %c0_42, %c0_43] : memref<1x8x8x128xbf16, #tpu.memory_space<vmem>>, vector<1x8x8x128xbf16>
    %66 = vector.shape_cast %65 : vector<1x8x8x128xbf16> to vector<8x8x128xbf16>
    %67 = vector.shape_cast %64 : vector<8x8x128xbf16> to vector<1x8x8x128xbf16>
    tpu.vector_store %arg9[%c0_40, %c0_41, %c0_42, %c0_43], %67 {strides = array<i32>} : memref<1x8x8x128xbf16, #tpu.memory_space<vmem>>, vector<1x8x8x128xbf16>,
    %68 = arith.extf %63 : vector<64x128xbf16> to vector<64x128xf32>
    %c0_44 = arith.constant 0 : index
    %c0_45 = arith.constant 0 : index
    %c0_46 = arith.constant 0 : index
    %69 = vector.load %arg11[%c0_44, %c0_45, %c0_46] : memref<1x8x128xf32, #tpu.memory_space<vmem>>, vector<1x1x128xf32>
    %70 = vector.shape_cast %69 : vector<1x1x128xf32> to vector<1x128xf32>
    %cst_47 = arith.constant dense<0.000000e+00> : vector<128xf32>
    %71 = vector.multi_reduction <add>, %68, %cst_47 [0] : vector<64x128xf32> to vector<128xf32>
    %72 = vector.shape_cast %71 : vector<128xf32> to vector<1x128xf32>
    %73 = arith.addf %70, %72 : vector<1x128xf32>
    %c0_48 = arith.constant 0 : index
    %c0_49 = arith.constant 0 : index
    %c0_50 = arith.constant 0 : index
    %74 = vector.load %arg11[%c0_48, %c0_49, %c0_50] : memref<1x8x128xf32, #tpu.memory_space<vmem>>, vector<1x1x128xf32>
    %75 = vector.shape_cast %74 : vector<1x1x128xf32> to vector<1x128xf32>
    %76 = vector.shape_cast %73 : vector<1x128xf32> to vector<1x1x128xf32>
    tpu.vector_store %arg11[%c0_48, %c0_49, %c0_50], %76 {strides = array<i32>} : memref<1x8x128xf32, #tpu.memory_space<vmem>>, vector<1x1x128xf32>,
    %c0_51 = arith.constant 0 : index
    %c1_52 = arith.constant 1 : index
    %c0_53 = arith.constant 0 : index
    %77 = vector.load %arg11[%c0_51, %c1_52, %c0_53] : memref<1x8x128xf32, #tpu.memory_space<vmem>>, vector<1x1x128xf32>
    %78 = vector.shape_cast %77 : vector<1x1x128xf32> to vector<1x128xf32>
    %79 = arith.mulf %68, %68 : vector<64x128xf32>
    %cst_54 = arith.constant dense<0.000000e+00> : vector<128xf32>
    %80 = vector.multi_reduction <add>, %79, %cst_54 [0] : vector<64x128xf32> to vector<128xf32>
    %81 = vector.shape_cast %80 : vector<128xf32> to vector<1x128xf32>
    %82 = arith.addf %78, %81 : vector<1x128xf32>
    %c0_55 = arith.constant 0 : index
    %c1_56 = arith.constant 1 : index
    %c0_57 = arith.constant 0 : index
    %83 = vector.load %arg11[%c0_55, %c1_56, %c0_57] : memref<1x8x128xf32, #tpu.memory_space<vmem>>, vector<1x1x128xf32>
    %84 = vector.shape_cast %83 : vector<1x1x128xf32> to vector<1x128xf32>
    %85 = vector.shape_cast %82 : vector<1x128xf32> to vector<1x1x128xf32>
    tpu.vector_store %arg11[%c0_55, %c1_56, %c0_57], %85 {strides = array<i32>} : memref<1x8x128xf32, #tpu.memory_space<vmem>>, vector<1x1x128xf32>,
    return
  }
  func.func @transform_0(%arg0: i32, %arg1: i32) -> (i32, i32, i32, i32) {
    %c0_i32 = arith.constant 0 : i32
    %c0_i32_0 = arith.constant 0 : i32
    %c0_i32_1 = arith.constant 0 : i32
    return %arg0, %arg1, %c0_i32, %c0_i32_0 : i32, i32, i32, i32
  }
  func.func @transform_1(%arg0: i32, %arg1: i32) -> (i32, i32, i32, i32) {
    %c0_i32 = arith.constant 0 : i32
    %c0_i32_0 = arith.constant 0 : i32
    %c0_i32_1 = arith.constant 0 : i32
    return %arg0, %arg1, %c0_i32, %c0_i32_0 : i32, i32, i32, i32
  }
  func.func @transform_2(%arg0: i32, %arg1: i32) -> (i32, i32, i32) {
    %c0_i32 = arith.constant 0 : i32
    %c0_i32_0 = arith.constant 0 : i32
    %c0_i32_1 = arith.constant 0 : i32
    %c0_i32_2 = arith.constant 0 : i32
    return %c0_i32, %c0_i32_0, %c0_i32_1 : i32, i32, i32
  }
  func.func @transform_3(%arg0: i32, %arg1: i32) -> (i32, i32) {
    %c0_i32 = arith.constant 0 : i32
    %c0_i32_0 = arith.constant 0 : i32
    %c0_i32_1 = arith.constant 0 : i32
    return %c0_i32, %c0_i32_0 : i32, i32
  }
  func.func @transform_4(%arg0: i32, %arg1: i32) -> (i32, i32) {
    %c0_i32 = arith.constant 0 : i32
    %c0_i32_0 = arith.constant 0 : i32
    %c0_i32_1 = arith.constant 0 : i32
    return %c0_i32, %c0_i32_0 : i32, i32
  }
  func.func @transform_5(%arg0: i32, %arg1: i32) -> (i32, i32) {
    %c0_i32 = arith.constant 0 : i32
    %c0_i32_0 = arith.constant 0 : i32
    %c0_i32_1 = arith.constant 0 : i32
    return %c0_i32, %c0_i32_0 : i32, i32
  }
  func.func @transform_6(%arg0: i32, %arg1: i32) -> (i32, i32, i32, i32) {
    %c0_i32 = arith.constant 0 : i32
    %c0_i32_0 = arith.constant 0 : i32
    %c0_i32_1 = arith.constant 0 : i32
    return %arg0, %arg1, %c0_i32, %c0_i32_0 : i32, i32, i32, i32
  }
  func.func @transform_7(%arg0: i32, %arg1: i32) -> (i32, i32, i32, i32) {
    %c0_i32 = arith.constant 0 : i32
    %c0_i32_0 = arith.constant 0 : i32
    %c0_i32_1 = arith.constant 0 : i32
    return %arg0, %arg1, %c0_i32, %c0_i32_0 : i32, i32, i32, i32
  }
  func.func @transform_8(%arg0: i32, %arg1: i32) -> (i32, i32, i32) {
    %c0_i32 = arith.constant 0 : i32
    %c0_i32_0 = arith.constant 0 : i32
    %c0_i32_1 = arith.constant 0 : i32
    return %arg0, %c0_i32, %c0_i32_0 : i32, i32, i32
  }
  func.func @transform_9(%arg0: i32, %arg1: i32) -> (i32, i32, i32) {
    %c0_i32 = arith.constant 0 : i32
    %c0_i32_0 = arith.constant 0 : i32
    %c0_i32_1 = arith.constant 0 : i32
    return %arg0, %c0_i32, %c0_i32_0 : i32, i32, i32
  }
}

module attributes {stable_mosaic.version = 11 : i64} {
  func.func @_conv3x3_kernel(%arg0: i32, %arg1: i32, %arg2: memref<1x1x16x128xbf16, #tpu.memory_space<vmem>>, %arg3: memref<1x1x16x128xbf16, #tpu.memory_space<vmem>>, %arg4: memref<1x1x16x128xbf16, #tpu.memory_space<vmem>>, %arg5: memref<2x8x128xf32, #tpu.memory_space<vmem>>, %arg6: memref<8x128xf32, #tpu.memory_space<vmem>>, %arg7: memref<9x128x128xbf16, #tpu.memory_space<vmem>>, %arg8: memref<1x1x8x128xbf16, #tpu.memory_space<vmem>>, %arg9: memref<1x8x128xf32, #tpu.memory_space<vmem>>, %arg10: memref<24x128xf32, #tpu.memory_space<vmem>>) attributes {dimension_semantics = [#tpu.dimension_semantics<parallel>, #tpu.dimension_semantics<arbitrary>], iteration_bounds = array<i64: 2, 8>, scalar_prefetch = 0 : i64, scratch_operands = 1 : i64, tpu.core_type = #tpu.core_type<tc>, window_params = [{transform_indices = @transform_0, window_bounds = array<i64: 1, 1, 16, 128>}, {transform_indices = @transform_1, window_bounds = array<i64: 1, 1, 16, 128>}, {transform_indices = @transform_2, window_bounds = array<i64: 1, 1, 16, 128>}, {pipeline_mode = #tpu.pipeline_mode<synchronous>, transform_indices = @transform_3, window_bounds = array<i64: 2, 8, 128>}, {pipeline_mode = #tpu.pipeline_mode<synchronous>, transform_indices = @transform_4, window_bounds = array<i64: 8, 128>}, {pipeline_mode = #tpu.pipeline_mode<synchronous>, transform_indices = @transform_5, window_bounds = array<i64: 9, 128, 128>}, {transform_indices = @transform_6, window_bounds = array<i64: 1, 1, 8, 128>}, {transform_indices = @transform_7, window_bounds = array<i64: 1, 8, 128>}]} {
    %c0_i32 = arith.constant 0 : i32
    %0 = arith.cmpi eq, %arg1, %c0_i32 : i32
    %1 = arith.extui %0 : i1 to i32
    %c0_i32_0 = arith.constant 0 : i32
    %2 = arith.cmpi ne, %1, %c0_i32_0 : i32
    scf.if %2 {
      %cst_103 = arith.constant 0.000000e+00 : f32
      %154 = vector.broadcast %cst_103 : f32 to vector<8x128xf32>
      %c0_104 = arith.constant 0 : index
      %c0_105 = arith.constant 0 : index
      %c0_106 = arith.constant 0 : index
      %155 = vector.load %arg9[%c0_104, %c0_105, %c0_106] : memref<1x8x128xf32, #tpu.memory_space<vmem>>, vector<1x8x128xf32>
      %156 = vector.shape_cast %155 : vector<1x8x128xf32> to vector<8x128xf32>
      %157 = vector.shape_cast %154 : vector<8x128xf32> to vector<1x8x128xf32>
      tpu.vector_store %arg9[%c0_104, %c0_105, %c0_106], %157 {strides = array<i32>} : memref<1x8x128xf32, #tpu.memory_space<vmem>>, vector<1x8x128xf32>,
    } else {
    }
    %c0 = arith.constant 0 : index
    %c0_1 = arith.constant 0 : index
    %c0_2 = arith.constant 0 : index
    %3 = vector.load %arg5[%c0, %c0_1, %c0_2] : memref<2x8x128xf32, #tpu.memory_space<vmem>>, vector<2x8x128xf32>
    %c0_3 = arith.constant 0 : index
    %c0_4 = arith.constant 0 : index
    %4 = vector.load %arg6[%c0_3, %c0_4] : memref<8x128xf32, #tpu.memory_space<vmem>>, vector<8x128xf32>
    %cst = arith.constant dense<0.000000e+00> : vector<8x128xf32>
    %5 = vector.multi_reduction <add>, %3, %cst [0] : vector<2x8x128xf32> to vector<8x128xf32>
    %6 = vector.extract_strided_slice %5 {offsets = [0, 0], sizes = [1, 128], strides = [1, 1]} : vector<8x128xf32> to vector<1x128xf32>
    %cst_5 = arith.constant 0.001953125 : f32
    %7 = vector.broadcast %cst_5 : f32 to vector<1x128xf32>
    %8 = arith.mulf %6, %7 : vector<1x128xf32>
    %9 = vector.extract_strided_slice %5 {offsets = [1, 0], sizes = [1, 128], strides = [1, 1]} : vector<8x128xf32> to vector<1x128xf32>
    %cst_6 = arith.constant 0.001953125 : f32
    %10 = vector.broadcast %cst_6 : f32 to vector<1x128xf32>
    %11 = arith.mulf %9, %10 : vector<1x128xf32>
    %12 = arith.mulf %8, %8 : vector<1x128xf32>
    %13 = arith.subf %11, %12 : vector<1x128xf32>
    %cst_7 = arith.constant 0.000000e+00 : f32
    %14 = vector.broadcast %cst_7 : f32 to vector<1x128xf32>
    %15 = arith.maximumf %13, %14 : vector<1x128xf32>
    %cst_8 = arith.constant 9.99999974E-6 : f32
    %16 = vector.broadcast %cst_8 : f32 to vector<1x128xf32>
    %17 = arith.addf %15, %16 : vector<1x128xf32>
    %18 = math.rsqrt %17 : vector<1x128xf32>
    %19 = vector.extract_strided_slice %4 {offsets = [0, 0], sizes = [1, 128], strides = [1, 1]} : vector<8x128xf32> to vector<1x128xf32>
    %20 = arith.mulf %18, %19 : vector<1x128xf32>
    %21 = vector.extract_strided_slice %4 {offsets = [1, 0], sizes = [1, 128], strides = [1, 1]} : vector<8x128xf32> to vector<1x128xf32>
    %22 = arith.mulf %8, %20 : vector<1x128xf32>
    %23 = arith.subf %21, %22 : vector<1x128xf32>
    %cst_9 = arith.constant 0.000000e+00 : f32
    %24 = vector.broadcast %cst_9 : f32 to vector<24x128xf32>
    %c0_10 = arith.constant 0 : index
    %c0_11 = arith.constant 0 : index
    %25 = vector.load %arg10[%c0_10, %c0_11] : memref<24x128xf32, #tpu.memory_space<vmem>>, vector<24x128xf32>
    tpu.vector_store %arg10[%c0_10, %c0_11], %24 {strides = array<i32>} : memref<24x128xf32, #tpu.memory_space<vmem>>, vector<24x128xf32>,
    %cst_12 = arith.constant 0.000000e+00 : f32
    %26 = vector.broadcast %cst_12 : f32 to vector<8x128xf32>
    %c2_i32 = arith.constant 2 : i32
    %27 = arith.muli %arg1, %c2_i32 : i32
    %c-1_i32 = arith.constant -1 : i32
    %28 = arith.addi %27, %c-1_i32 : i32
    %c0_i32_13 = arith.constant 0 : i32
    %29 = arith.cmpi sge, %28, %c0_i32_13 : i32
    %c16_i32 = arith.constant 16 : i32
    %30 = arith.cmpi slt, %28, %c16_i32 : i32
    %31 = arith.andi %29, %30 : i1
    %32 = arith.extui %31 : i1 to i32
    %33 = arith.sitofp %32 : i32 to f32
    %c0_14 = arith.constant 0 : index
    %c0_15 = arith.constant 0 : index
    %c0_16 = arith.constant 0 : index
    %c0_17 = arith.constant 0 : index
    %34 = vector.load %arg2[%c0_14, %c0_15, %c0_16, %c0_17] : memref<1x1x16x128xbf16, #tpu.memory_space<vmem>>, vector<1x1x16x128xbf16>
    %35 = vector.shape_cast %34 : vector<1x1x16x128xbf16> to vector<16x128xbf16>
    %36 = arith.extf %35 : vector<16x128xbf16> to vector<16x128xf32>
    %37 = vector.broadcast %20 : vector<1x128xf32> to vector<16x128xf32>
    %38 = arith.mulf %36, %37 : vector<16x128xf32>
    %39 = vector.broadcast %23 : vector<1x128xf32> to vector<16x128xf32>
    %40 = arith.addf %38, %39 : vector<16x128xf32>
    %41 = vector.broadcast %33 : f32 to vector<16x128xf32>
    %42 = arith.mulf %40, %41 : vector<16x128xf32>
    %c1 = arith.constant 1 : index
    %c0_18 = arith.constant 0 : index
    %43 = vector.load %arg10[%c1, %c0_18] : memref<24x128xf32, #tpu.memory_space<vmem>>, vector<16x128xf32>
    tpu.vector_store %arg10[%c1, %c0_18], %42 {strides = array<i32>} : memref<24x128xf32, #tpu.memory_space<vmem>>, vector<16x128xf32>,
    %c0_19 = arith.constant 0 : index
    %c0_20 = arith.constant 0 : index
    %44 = tpu.strided_load %arg10[%c0_19, %c0_20] {strides = array<i32: 2, 1>} : memref<24x128xf32, #tpu.memory_space<vmem>>, vector<8x128xf32>
    %45 = arith.truncf %44 : vector<8x128xf32> to vector<8x128xbf16>
    %c0_21 = arith.constant 0 : index
    %c0_22 = arith.constant 0 : index
    %c0_23 = arith.constant 0 : index
    %46 = vector.load %arg7[%c0_21, %c0_22, %c0_23] : memref<9x128x128xbf16, #tpu.memory_space<vmem>>, vector<1x128x128xbf16>
    %47 = vector.shape_cast %46 : vector<1x128x128xbf16> to vector<128x128xbf16>
    %cst_24 = arith.constant dense<0.000000e+00> : vector<8x128xf32>
    %48 = tpu.matmul %45, %47, %cst_24 {dimension_numbers = #tpu.dot_dimension_numbers<[1], [0], [0], [1], [0, 0, 1, 1], [], []>} : vector<8x128xbf16>, vector<128x128xbf16>, vector<8x128xf32> -> vector<8x128xf32>
    %49 = arith.addf %26, %48 : vector<8x128xf32>
    %c1_25 = arith.constant 1 : index
    %c0_26 = arith.constant 0 : index
    %50 = tpu.strided_load %arg10[%c1_25, %c0_26] {strides = array<i32: 2, 1>} : memref<24x128xf32, #tpu.memory_space<vmem>>, vector<8x128xf32>
    %51 = arith.truncf %50 : vector<8x128xf32> to vector<8x128xbf16>
    %c1_27 = arith.constant 1 : index
    %c0_28 = arith.constant 0 : index
    %c0_29 = arith.constant 0 : index
    %52 = vector.load %arg7[%c1_27, %c0_28, %c0_29] : memref<9x128x128xbf16, #tpu.memory_space<vmem>>, vector<1x128x128xbf16>
    %53 = vector.shape_cast %52 : vector<1x128x128xbf16> to vector<128x128xbf16>
    %cst_30 = arith.constant dense<0.000000e+00> : vector<8x128xf32>
    %54 = tpu.matmul %51, %53, %cst_30 {dimension_numbers = #tpu.dot_dimension_numbers<[1], [0], [0], [1], [0, 0, 1, 1], [], []>} : vector<8x128xbf16>, vector<128x128xbf16>, vector<8x128xf32> -> vector<8x128xf32>
    %55 = arith.addf %49, %54 : vector<8x128xf32>
    %c2 = arith.constant 2 : index
    %c0_31 = arith.constant 0 : index
    %56 = tpu.strided_load %arg10[%c2, %c0_31] {strides = array<i32: 2, 1>} : memref<24x128xf32, #tpu.memory_space<vmem>>, vector<8x128xf32>
    %57 = arith.truncf %56 : vector<8x128xf32> to vector<8x128xbf16>
    %c2_32 = arith.constant 2 : index
    %c0_33 = arith.constant 0 : index
    %c0_34 = arith.constant 0 : index
    %58 = vector.load %arg7[%c2_32, %c0_33, %c0_34] : memref<9x128x128xbf16, #tpu.memory_space<vmem>>, vector<1x128x128xbf16>
    %59 = vector.shape_cast %58 : vector<1x128x128xbf16> to vector<128x128xbf16>
    %cst_35 = arith.constant dense<0.000000e+00> : vector<8x128xf32>
    %60 = tpu.matmul %57, %59, %cst_35 {dimension_numbers = #tpu.dot_dimension_numbers<[1], [0], [0], [1], [0, 0, 1, 1], [], []>} : vector<8x128xbf16>, vector<128x128xbf16>, vector<8x128xf32> -> vector<8x128xf32>
    %61 = arith.addf %55, %60 : vector<8x128xf32>
    %c2_i32_36 = arith.constant 2 : i32
    %62 = arith.muli %arg1, %c2_i32_36 : i32
    %c0_i32_37 = arith.constant 0 : i32
    %63 = arith.addi %62, %c0_i32_37 : i32
    %c0_i32_38 = arith.constant 0 : i32
    %64 = arith.cmpi sge, %63, %c0_i32_38 : i32
    %c16_i32_39 = arith.constant 16 : i32
    %65 = arith.cmpi slt, %63, %c16_i32_39 : i32
    %66 = arith.andi %64, %65 : i1
    %67 = arith.extui %66 : i1 to i32
    %68 = arith.sitofp %67 : i32 to f32
    %c0_40 = arith.constant 0 : index
    %c0_41 = arith.constant 0 : index
    %c0_42 = arith.constant 0 : index
    %c0_43 = arith.constant 0 : index
    %69 = vector.load %arg3[%c0_40, %c0_41, %c0_42, %c0_43] : memref<1x1x16x128xbf16, #tpu.memory_space<vmem>>, vector<1x1x16x128xbf16>
    %70 = vector.shape_cast %69 : vector<1x1x16x128xbf16> to vector<16x128xbf16>
    %71 = arith.extf %70 : vector<16x128xbf16> to vector<16x128xf32>
    %72 = vector.broadcast %20 : vector<1x128xf32> to vector<16x128xf32>
    %73 = arith.mulf %71, %72 : vector<16x128xf32>
    %74 = vector.broadcast %23 : vector<1x128xf32> to vector<16x128xf32>
    %75 = arith.addf %73, %74 : vector<16x128xf32>
    %76 = vector.broadcast %68 : f32 to vector<16x128xf32>
    %77 = arith.mulf %75, %76 : vector<16x128xf32>
    %c1_44 = arith.constant 1 : index
    %c0_45 = arith.constant 0 : index
    %78 = vector.load %arg10[%c1_44, %c0_45] : memref<24x128xf32, #tpu.memory_space<vmem>>, vector<16x128xf32>
    tpu.vector_store %arg10[%c1_44, %c0_45], %77 {strides = array<i32>} : memref<24x128xf32, #tpu.memory_space<vmem>>, vector<16x128xf32>,
    %c0_46 = arith.constant 0 : index
    %c0_47 = arith.constant 0 : index
    %79 = tpu.strided_load %arg10[%c0_46, %c0_47] {strides = array<i32: 2, 1>} : memref<24x128xf32, #tpu.memory_space<vmem>>, vector<8x128xf32>
    %80 = arith.truncf %79 : vector<8x128xf32> to vector<8x128xbf16>
    %c3 = arith.constant 3 : index
    %c0_48 = arith.constant 0 : index
    %c0_49 = arith.constant 0 : index
    %81 = vector.load %arg7[%c3, %c0_48, %c0_49] : memref<9x128x128xbf16, #tpu.memory_space<vmem>>, vector<1x128x128xbf16>
    %82 = vector.shape_cast %81 : vector<1x128x128xbf16> to vector<128x128xbf16>
    %cst_50 = arith.constant dense<0.000000e+00> : vector<8x128xf32>
    %83 = tpu.matmul %80, %82, %cst_50 {dimension_numbers = #tpu.dot_dimension_numbers<[1], [0], [0], [1], [0, 0, 1, 1], [], []>} : vector<8x128xbf16>, vector<128x128xbf16>, vector<8x128xf32> -> vector<8x128xf32>
    %84 = arith.addf %61, %83 : vector<8x128xf32>
    %c1_51 = arith.constant 1 : index
    %c0_52 = arith.constant 0 : index
    %85 = tpu.strided_load %arg10[%c1_51, %c0_52] {strides = array<i32: 2, 1>} : memref<24x128xf32, #tpu.memory_space<vmem>>, vector<8x128xf32>
    %86 = arith.truncf %85 : vector<8x128xf32> to vector<8x128xbf16>
    %c4 = arith.constant 4 : index
    %c0_53 = arith.constant 0 : index
    %c0_54 = arith.constant 0 : index
    %87 = vector.load %arg7[%c4, %c0_53, %c0_54] : memref<9x128x128xbf16, #tpu.memory_space<vmem>>, vector<1x128x128xbf16>
    %88 = vector.shape_cast %87 : vector<1x128x128xbf16> to vector<128x128xbf16>
    %cst_55 = arith.constant dense<0.000000e+00> : vector<8x128xf32>
    %89 = tpu.matmul %86, %88, %cst_55 {dimension_numbers = #tpu.dot_dimension_numbers<[1], [0], [0], [1], [0, 0, 1, 1], [], []>} : vector<8x128xbf16>, vector<128x128xbf16>, vector<8x128xf32> -> vector<8x128xf32>
    %90 = arith.addf %84, %89 : vector<8x128xf32>
    %c2_56 = arith.constant 2 : index
    %c0_57 = arith.constant 0 : index
    %91 = tpu.strided_load %arg10[%c2_56, %c0_57] {strides = array<i32: 2, 1>} : memref<24x128xf32, #tpu.memory_space<vmem>>, vector<8x128xf32>
    %92 = arith.truncf %91 : vector<8x128xf32> to vector<8x128xbf16>
    %c5 = arith.constant 5 : index
    %c0_58 = arith.constant 0 : index
    %c0_59 = arith.constant 0 : index
    %93 = vector.load %arg7[%c5, %c0_58, %c0_59] : memref<9x128x128xbf16, #tpu.memory_space<vmem>>, vector<1x128x128xbf16>
    %94 = vector.shape_cast %93 : vector<1x128x128xbf16> to vector<128x128xbf16>
    %cst_60 = arith.constant dense<0.000000e+00> : vector<8x128xf32>
    %95 = tpu.matmul %92, %94, %cst_60 {dimension_numbers = #tpu.dot_dimension_numbers<[1], [0], [0], [1], [0, 0, 1, 1], [], []>} : vector<8x128xbf16>, vector<128x128xbf16>, vector<8x128xf32> -> vector<8x128xf32>
    %96 = arith.addf %90, %95 : vector<8x128xf32>
    %c2_i32_61 = arith.constant 2 : i32
    %97 = arith.muli %arg1, %c2_i32_61 : i32
    %c1_i32 = arith.constant 1 : i32
    %98 = arith.addi %97, %c1_i32 : i32
    %c0_i32_62 = arith.constant 0 : i32
    %99 = arith.cmpi sge, %98, %c0_i32_62 : i32
    %c16_i32_63 = arith.constant 16 : i32
    %100 = arith.cmpi slt, %98, %c16_i32_63 : i32
    %101 = arith.andi %99, %100 : i1
    %102 = arith.extui %101 : i1 to i32
    %103 = arith.sitofp %102 : i32 to f32
    %c0_64 = arith.constant 0 : index
    %c0_65 = arith.constant 0 : index
    %c0_66 = arith.constant 0 : index
    %c0_67 = arith.constant 0 : index
    %104 = vector.load %arg4[%c0_64, %c0_65, %c0_66, %c0_67] : memref<1x1x16x128xbf16, #tpu.memory_space<vmem>>, vector<1x1x16x128xbf16>
    %105 = vector.shape_cast %104 : vector<1x1x16x128xbf16> to vector<16x128xbf16>
    %106 = arith.extf %105 : vector<16x128xbf16> to vector<16x128xf32>
    %107 = vector.broadcast %20 : vector<1x128xf32> to vector<16x128xf32>
    %108 = arith.mulf %106, %107 : vector<16x128xf32>
    %109 = vector.broadcast %23 : vector<1x128xf32> to vector<16x128xf32>
    %110 = arith.addf %108, %109 : vector<16x128xf32>
    %111 = vector.broadcast %103 : f32 to vector<16x128xf32>
    %112 = arith.mulf %110, %111 : vector<16x128xf32>
    %c1_68 = arith.constant 1 : index
    %c0_69 = arith.constant 0 : index
    %113 = vector.load %arg10[%c1_68, %c0_69] : memref<24x128xf32, #tpu.memory_space<vmem>>, vector<16x128xf32>
    tpu.vector_store %arg10[%c1_68, %c0_69], %112 {strides = array<i32>} : memref<24x128xf32, #tpu.memory_space<vmem>>, vector<16x128xf32>,
    %c0_70 = arith.constant 0 : index
    %c0_71 = arith.constant 0 : index
    %114 = tpu.strided_load %arg10[%c0_70, %c0_71] {strides = array<i32: 2, 1>} : memref<24x128xf32, #tpu.memory_space<vmem>>, vector<8x128xf32>
    %115 = arith.truncf %114 : vector<8x128xf32> to vector<8x128xbf16>
    %c6 = arith.constant 6 : index
    %c0_72 = arith.constant 0 : index
    %c0_73 = arith.constant 0 : index
    %116 = vector.load %arg7[%c6, %c0_72, %c0_73] : memref<9x128x128xbf16, #tpu.memory_space<vmem>>, vector<1x128x128xbf16>
    %117 = vector.shape_cast %116 : vector<1x128x128xbf16> to vector<128x128xbf16>
    %cst_74 = arith.constant dense<0.000000e+00> : vector<8x128xf32>
    %118 = tpu.matmul %115, %117, %cst_74 {dimension_numbers = #tpu.dot_dimension_numbers<[1], [0], [0], [1], [0, 0, 1, 1], [], []>} : vector<8x128xbf16>, vector<128x128xbf16>, vector<8x128xf32> -> vector<8x128xf32>
    %119 = arith.addf %96, %118 : vector<8x128xf32>
    %c1_75 = arith.constant 1 : index
    %c0_76 = arith.constant 0 : index
    %120 = tpu.strided_load %arg10[%c1_75, %c0_76] {strides = array<i32: 2, 1>} : memref<24x128xf32, #tpu.memory_space<vmem>>, vector<8x128xf32>
    %121 = arith.truncf %120 : vector<8x128xf32> to vector<8x128xbf16>
    %c7 = arith.constant 7 : index
    %c0_77 = arith.constant 0 : index
    %c0_78 = arith.constant 0 : index
    %122 = vector.load %arg7[%c7, %c0_77, %c0_78] : memref<9x128x128xbf16, #tpu.memory_space<vmem>>, vector<1x128x128xbf16>
    %123 = vector.shape_cast %122 : vector<1x128x128xbf16> to vector<128x128xbf16>
    %cst_79 = arith.constant dense<0.000000e+00> : vector<8x128xf32>
    %124 = tpu.matmul %121, %123, %cst_79 {dimension_numbers = #tpu.dot_dimension_numbers<[1], [0], [0], [1], [0, 0, 1, 1], [], []>} : vector<8x128xbf16>, vector<128x128xbf16>, vector<8x128xf32> -> vector<8x128xf32>
    %125 = arith.addf %119, %124 : vector<8x128xf32>
    %c2_80 = arith.constant 2 : index
    %c0_81 = arith.constant 0 : index
    %126 = tpu.strided_load %arg10[%c2_80, %c0_81] {strides = array<i32: 2, 1>} : memref<24x128xf32, #tpu.memory_space<vmem>>, vector<8x128xf32>
    %127 = arith.truncf %126 : vector<8x128xf32> to vector<8x128xbf16>
    %c8 = arith.constant 8 : index
    %c0_82 = arith.constant 0 : index
    %c0_83 = arith.constant 0 : index
    %128 = vector.load %arg7[%c8, %c0_82, %c0_83] : memref<9x128x128xbf16, #tpu.memory_space<vmem>>, vector<1x128x128xbf16>
    %129 = vector.shape_cast %128 : vector<1x128x128xbf16> to vector<128x128xbf16>
    %cst_84 = arith.constant dense<0.000000e+00> : vector<8x128xf32>
    %130 = tpu.matmul %127, %129, %cst_84 {dimension_numbers = #tpu.dot_dimension_numbers<[1], [0], [0], [1], [0, 0, 1, 1], [], []>} : vector<8x128xbf16>, vector<128x128xbf16>, vector<8x128xf32> -> vector<8x128xf32>
    %131 = arith.addf %125, %130 : vector<8x128xf32>
    %132 = arith.truncf %131 : vector<8x128xf32> to vector<8x128xbf16>
    %c0_85 = arith.constant 0 : index
    %c0_86 = arith.constant 0 : index
    %c0_87 = arith.constant 0 : index
    %c0_88 = arith.constant 0 : index
    %133 = vector.load %arg8[%c0_85, %c0_86, %c0_87, %c0_88] : memref<1x1x8x128xbf16, #tpu.memory_space<vmem>>, vector<1x1x8x128xbf16>
    %134 = vector.shape_cast %133 : vector<1x1x8x128xbf16> to vector<8x128xbf16>
    %135 = vector.shape_cast %132 : vector<8x128xbf16> to vector<1x1x8x128xbf16>
    tpu.vector_store %arg8[%c0_85, %c0_86, %c0_87, %c0_88], %135 {strides = array<i32>} : memref<1x1x8x128xbf16, #tpu.memory_space<vmem>>, vector<1x1x8x128xbf16>,
    %136 = arith.extf %132 : vector<8x128xbf16> to vector<8x128xf32>
    %c0_89 = arith.constant 0 : index
    %c0_90 = arith.constant 0 : index
    %c0_91 = arith.constant 0 : index
    %137 = vector.load %arg9[%c0_89, %c0_90, %c0_91] : memref<1x8x128xf32, #tpu.memory_space<vmem>>, vector<1x1x128xf32>
    %138 = vector.shape_cast %137 : vector<1x1x128xf32> to vector<1x128xf32>
    %cst_92 = arith.constant dense<0.000000e+00> : vector<128xf32>
    %139 = vector.multi_reduction <add>, %136, %cst_92 [0] : vector<8x128xf32> to vector<128xf32>
    %140 = vector.shape_cast %139 : vector<128xf32> to vector<1x128xf32>
    %141 = arith.addf %138, %140 : vector<1x128xf32>
    %c0_93 = arith.constant 0 : index
    %c0_94 = arith.constant 0 : index
    %c0_95 = arith.constant 0 : index
    %142 = vector.load %arg9[%c0_93, %c0_94, %c0_95] : memref<1x8x128xf32, #tpu.memory_space<vmem>>, vector<1x1x128xf32>
    %143 = vector.shape_cast %142 : vector<1x1x128xf32> to vector<1x128xf32>
    %144 = vector.shape_cast %141 : vector<1x128xf32> to vector<1x1x128xf32>
    tpu.vector_store %arg9[%c0_93, %c0_94, %c0_95], %144 {strides = array<i32>} : memref<1x8x128xf32, #tpu.memory_space<vmem>>, vector<1x1x128xf32>,
    %c0_96 = arith.constant 0 : index
    %c1_97 = arith.constant 1 : index
    %c0_98 = arith.constant 0 : index
    %145 = vector.load %arg9[%c0_96, %c1_97, %c0_98] : memref<1x8x128xf32, #tpu.memory_space<vmem>>, vector<1x1x128xf32>
    %146 = vector.shape_cast %145 : vector<1x1x128xf32> to vector<1x128xf32>
    %147 = arith.mulf %136, %136 : vector<8x128xf32>
    %cst_99 = arith.constant dense<0.000000e+00> : vector<128xf32>
    %148 = vector.multi_reduction <add>, %147, %cst_99 [0] : vector<8x128xf32> to vector<128xf32>
    %149 = vector.shape_cast %148 : vector<128xf32> to vector<1x128xf32>
    %150 = arith.addf %146, %149 : vector<1x128xf32>
    %c0_100 = arith.constant 0 : index
    %c1_101 = arith.constant 1 : index
    %c0_102 = arith.constant 0 : index
    %151 = vector.load %arg9[%c0_100, %c1_101, %c0_102] : memref<1x8x128xf32, #tpu.memory_space<vmem>>, vector<1x1x128xf32>
    %152 = vector.shape_cast %151 : vector<1x1x128xf32> to vector<1x128xf32>
    %153 = vector.shape_cast %150 : vector<1x128xf32> to vector<1x1x128xf32>
    tpu.vector_store %arg9[%c0_100, %c1_101, %c0_102], %153 {strides = array<i32>} : memref<1x8x128xf32, #tpu.memory_space<vmem>>, vector<1x1x128xf32>,
    return
  }
  func.func @transform_0(%arg0: i32, %arg1: i32) -> (i32, i32, i32, i32) {
    %c2_i32 = arith.constant 2 : i32
    %0 = arith.muli %arg1, %c2_i32 : i32
    %c-1_i32 = arith.constant -1 : i32
    %1 = arith.addi %0, %c-1_i32 : i32
    %c0_i32 = arith.constant 0 : i32
    %2 = arith.maxsi %1, %c0_i32 : i32
    %c15_i32 = arith.constant 15 : i32
    %3 = arith.minsi %2, %c15_i32 : i32
    %c0_i32_0 = arith.constant 0 : i32
    %c0_i32_1 = arith.constant 0 : i32
    %c0_i32_2 = arith.constant 0 : i32
    return %arg0, %3, %c0_i32_0, %c0_i32_1 : i32, i32, i32, i32
  }
  func.func @transform_1(%arg0: i32, %arg1: i32) -> (i32, i32, i32, i32) {
    %c2_i32 = arith.constant 2 : i32
    %0 = arith.muli %arg1, %c2_i32 : i32
    %c0_i32 = arith.constant 0 : i32
    %1 = arith.addi %0, %c0_i32 : i32
    %c0_i32_0 = arith.constant 0 : i32
    %2 = arith.maxsi %1, %c0_i32_0 : i32
    %c15_i32 = arith.constant 15 : i32
    %3 = arith.minsi %2, %c15_i32 : i32
    %c0_i32_1 = arith.constant 0 : i32
    %c0_i32_2 = arith.constant 0 : i32
    %c0_i32_3 = arith.constant 0 : i32
    return %arg0, %3, %c0_i32_1, %c0_i32_2 : i32, i32, i32, i32
  }
  func.func @transform_2(%arg0: i32, %arg1: i32) -> (i32, i32, i32, i32) {
    %c2_i32 = arith.constant 2 : i32
    %0 = arith.muli %arg1, %c2_i32 : i32
    %c1_i32 = arith.constant 1 : i32
    %1 = arith.addi %0, %c1_i32 : i32
    %c0_i32 = arith.constant 0 : i32
    %2 = arith.maxsi %1, %c0_i32 : i32
    %c15_i32 = arith.constant 15 : i32
    %3 = arith.minsi %2, %c15_i32 : i32
    %c0_i32_0 = arith.constant 0 : i32
    %c0_i32_1 = arith.constant 0 : i32
    %c0_i32_2 = arith.constant 0 : i32
    return %arg0, %3, %c0_i32_0, %c0_i32_1 : i32, i32, i32, i32
  }
  func.func @transform_3(%arg0: i32, %arg1: i32) -> (i32, i32, i32) {
    %c0_i32 = arith.constant 0 : i32
    %c0_i32_0 = arith.constant 0 : i32
    %c0_i32_1 = arith.constant 0 : i32
    %c0_i32_2 = arith.constant 0 : i32
    return %c0_i32, %c0_i32_0, %c0_i32_1 : i32, i32, i32
  }
  func.func @transform_4(%arg0: i32, %arg1: i32) -> (i32, i32) {
    %c0_i32 = arith.constant 0 : i32
    %c0_i32_0 = arith.constant 0 : i32
    %c0_i32_1 = arith.constant 0 : i32
    return %c0_i32, %c0_i32_0 : i32, i32
  }
  func.func @transform_5(%arg0: i32, %arg1: i32) -> (i32, i32, i32) {
    %c0_i32 = arith.constant 0 : i32
    %c0_i32_0 = arith.constant 0 : i32
    %c0_i32_1 = arith.constant 0 : i32
    %c0_i32_2 = arith.constant 0 : i32
    return %c0_i32, %c0_i32_0, %c0_i32_1 : i32, i32, i32
  }
  func.func @transform_6(%arg0: i32, %arg1: i32) -> (i32, i32, i32, i32) {
    %c0_i32 = arith.constant 0 : i32
    %c0_i32_0 = arith.constant 0 : i32
    %c0_i32_1 = arith.constant 0 : i32
    return %arg0, %arg1, %c0_i32, %c0_i32_0 : i32, i32, i32, i32
  }
  func.func @transform_7(%arg0: i32, %arg1: i32) -> (i32, i32, i32) {
    %c0_i32 = arith.constant 0 : i32
    %c0_i32_0 = arith.constant 0 : i32
    %c0_i32_1 = arith.constant 0 : i32
    return %arg0, %c0_i32, %c0_i32_0 : i32, i32, i32
  }
}

module attributes {stable_mosaic.version = 11 : i64} {
  func.func @_bn_relu_add_bn_kernel(%arg0: i32, %arg1: i32, %arg2: memref<1x8x8x128xbf16, #tpu.memory_space<vmem>>, %arg3: memref<1x8x8x128xbf16, #tpu.memory_space<vmem>>, %arg4: memref<2x8x128xf32, #tpu.memory_space<vmem>>, %arg5: memref<2x8x128xf32, #tpu.memory_space<vmem>>, %arg6: memref<8x128xf32, #tpu.memory_space<vmem>>, %arg7: memref<1x8x8x128xf32, #tpu.memory_space<vmem>>) attributes {dimension_semantics = [#tpu.dimension_semantics<parallel>, #tpu.dimension_semantics<parallel>], iteration_bounds = array<i64: 2, 1>, scalar_prefetch = 0 : i64, scratch_operands = 0 : i64, tpu.core_type = #tpu.core_type<tc>, window_params = [{transform_indices = @transform_0, window_bounds = array<i64: 1, 8, 8, 128>}, {transform_indices = @transform_1, window_bounds = array<i64: 1, 8, 8, 128>}, {pipeline_mode = #tpu.pipeline_mode<synchronous>, transform_indices = @transform_2, window_bounds = array<i64: 2, 8, 128>}, {pipeline_mode = #tpu.pipeline_mode<synchronous>, transform_indices = @transform_3, window_bounds = array<i64: 2, 8, 128>}, {pipeline_mode = #tpu.pipeline_mode<synchronous>, transform_indices = @transform_4, window_bounds = array<i64: 8, 128>}, {transform_indices = @transform_5, window_bounds = array<i64: 1, 8, 8, 128>}]} {
    %c0 = arith.constant 0 : index
    %c0_0 = arith.constant 0 : index
    %c0_1 = arith.constant 0 : index
    %0 = vector.load %arg4[%c0, %c0_0, %c0_1] : memref<2x8x128xf32, #tpu.memory_space<vmem>>, vector<2x8x128xf32>
    %c0_2 = arith.constant 0 : index
    %c0_3 = arith.constant 0 : index
    %1 = vector.load %arg6[%c0_2, %c0_3] : memref<8x128xf32, #tpu.memory_space<vmem>>, vector<8x128xf32>
    %cst = arith.constant dense<0.000000e+00> : vector<8x128xf32>
    %2 = vector.multi_reduction <add>, %0, %cst [0] : vector<2x8x128xf32> to vector<8x128xf32>
    %3 = vector.extract_strided_slice %2 {offsets = [0, 0], sizes = [1, 128], strides = [1, 1]} : vector<8x128xf32> to vector<1x128xf32>
    %cst_4 = arith.constant 7.812500e-03 : f32
    %4 = vector.broadcast %cst_4 : f32 to vector<1x128xf32>
    %5 = arith.mulf %3, %4 : vector<1x128xf32>
    %6 = vector.extract_strided_slice %2 {offsets = [1, 0], sizes = [1, 128], strides = [1, 1]} : vector<8x128xf32> to vector<1x128xf32>
    %cst_5 = arith.constant 7.812500e-03 : f32
    %7 = vector.broadcast %cst_5 : f32 to vector<1x128xf32>
    %8 = arith.mulf %6, %7 : vector<1x128xf32>
    %9 = arith.mulf %5, %5 : vector<1x128xf32>
    %10 = arith.subf %8, %9 : vector<1x128xf32>
    %cst_6 = arith.constant 0.000000e+00 : f32
    %11 = vector.broadcast %cst_6 : f32 to vector<1x128xf32>
    %12 = arith.maximumf %10, %11 : vector<1x128xf32>
    %cst_7 = arith.constant 9.99999974E-6 : f32
    %13 = vector.broadcast %cst_7 : f32 to vector<1x128xf32>
    %14 = arith.addf %12, %13 : vector<1x128xf32>
    %15 = math.rsqrt %14 : vector<1x128xf32>
    %16 = vector.extract_strided_slice %1 {offsets = [0, 0], sizes = [1, 128], strides = [1, 1]} : vector<8x128xf32> to vector<1x128xf32>
    %17 = arith.mulf %15, %16 : vector<1x128xf32>
    %18 = vector.extract_strided_slice %1 {offsets = [1, 0], sizes = [1, 128], strides = [1, 1]} : vector<8x128xf32> to vector<1x128xf32>
    %19 = arith.mulf %5, %17 : vector<1x128xf32>
    %20 = arith.subf %18, %19 : vector<1x128xf32>
    %c0_8 = arith.constant 0 : index
    %c0_9 = arith.constant 0 : index
    %c0_10 = arith.constant 0 : index
    %21 = vector.load %arg5[%c0_8, %c0_9, %c0_10] : memref<2x8x128xf32, #tpu.memory_space<vmem>>, vector<2x8x128xf32>
    %c0_11 = arith.constant 0 : index
    %c0_12 = arith.constant 0 : index
    %22 = vector.load %arg6[%c0_11, %c0_12] : memref<8x128xf32, #tpu.memory_space<vmem>>, vector<8x128xf32>
    %cst_13 = arith.constant dense<0.000000e+00> : vector<8x128xf32>
    %23 = vector.multi_reduction <add>, %21, %cst_13 [0] : vector<2x8x128xf32> to vector<8x128xf32>
    %24 = vector.extract_strided_slice %23 {offsets = [0, 0], sizes = [1, 128], strides = [1, 1]} : vector<8x128xf32> to vector<1x128xf32>
    %cst_14 = arith.constant 7.812500e-03 : f32
    %25 = vector.broadcast %cst_14 : f32 to vector<1x128xf32>
    %26 = arith.mulf %24, %25 : vector<1x128xf32>
    %27 = vector.extract_strided_slice %23 {offsets = [1, 0], sizes = [1, 128], strides = [1, 1]} : vector<8x128xf32> to vector<1x128xf32>
    %cst_15 = arith.constant 7.812500e-03 : f32
    %28 = vector.broadcast %cst_15 : f32 to vector<1x128xf32>
    %29 = arith.mulf %27, %28 : vector<1x128xf32>
    %30 = arith.mulf %26, %26 : vector<1x128xf32>
    %31 = arith.subf %29, %30 : vector<1x128xf32>
    %cst_16 = arith.constant 0.000000e+00 : f32
    %32 = vector.broadcast %cst_16 : f32 to vector<1x128xf32>
    %33 = arith.maximumf %31, %32 : vector<1x128xf32>
    %cst_17 = arith.constant 9.99999974E-6 : f32
    %34 = vector.broadcast %cst_17 : f32 to vector<1x128xf32>
    %35 = arith.addf %33, %34 : vector<1x128xf32>
    %36 = math.rsqrt %35 : vector<1x128xf32>
    %37 = vector.extract_strided_slice %22 {offsets = [0, 0], sizes = [1, 128], strides = [1, 1]} : vector<8x128xf32> to vector<1x128xf32>
    %38 = arith.mulf %36, %37 : vector<1x128xf32>
    %39 = vector.extract_strided_slice %22 {offsets = [1, 0], sizes = [1, 128], strides = [1, 1]} : vector<8x128xf32> to vector<1x128xf32>
    %40 = arith.mulf %26, %38 : vector<1x128xf32>
    %41 = arith.subf %39, %40 : vector<1x128xf32>
    %c0_18 = arith.constant 0 : index
    %c0_19 = arith.constant 0 : index
    %c0_20 = arith.constant 0 : index
    %c0_21 = arith.constant 0 : index
    %42 = vector.load %arg2[%c0_18, %c0_19, %c0_20, %c0_21] : memref<1x8x8x128xbf16, #tpu.memory_space<vmem>>, vector<1x8x8x128xbf16>
    %43 = vector.shape_cast %42 : vector<1x8x8x128xbf16> to vector<8x8x128xbf16>
    %44 = arith.extf %43 : vector<8x8x128xbf16> to vector<8x8x128xf32>
    %45 = vector.shape_cast %17 : vector<1x128xf32> to vector<1x1x128xf32>
    %46 = vector.broadcast %45 : vector<1x1x128xf32> to vector<8x8x128xf32>
    %47 = arith.mulf %44, %46 : vector<8x8x128xf32>
    %48 = vector.shape_cast %20 : vector<1x128xf32> to vector<1x1x128xf32>
    %49 = vector.broadcast %48 : vector<1x1x128xf32> to vector<8x8x128xf32>
    %50 = arith.addf %47, %49 : vector<8x8x128xf32>
    %cst_22 = arith.constant 0.000000e+00 : f32
    %51 = vector.broadcast %cst_22 : f32 to vector<8x8x128xf32>
    %52 = arith.maximumf %50, %51 : vector<8x8x128xf32>
    %c0_23 = arith.constant 0 : index
    %c0_24 = arith.constant 0 : index
    %c0_25 = arith.constant 0 : index
    %c0_26 = arith.constant 0 : index
    %53 = vector.load %arg3[%c0_23, %c0_24, %c0_25, %c0_26] : memref<1x8x8x128xbf16, #tpu.memory_space<vmem>>, vector<1x8x8x128xbf16>
    %54 = vector.shape_cast %53 : vector<1x8x8x128xbf16> to vector<8x8x128xbf16>
    %55 = arith.extf %54 : vector<8x8x128xbf16> to vector<8x8x128xf32>
    %56 = vector.shape_cast %38 : vector<1x128xf32> to vector<1x1x128xf32>
    %57 = vector.broadcast %56 : vector<1x1x128xf32> to vector<8x8x128xf32>
    %58 = arith.mulf %55, %57 : vector<8x8x128xf32>
    %59 = vector.shape_cast %41 : vector<1x128xf32> to vector<1x1x128xf32>
    %60 = vector.broadcast %59 : vector<1x1x128xf32> to vector<8x8x128xf32>
    %61 = arith.addf %58, %60 : vector<8x8x128xf32>
    %62 = arith.addf %52, %61 : vector<8x8x128xf32>
    %c0_27 = arith.constant 0 : index
    %c0_28 = arith.constant 0 : index
    %c0_29 = arith.constant 0 : index
    %c0_30 = arith.constant 0 : index
    %63 = vector.load %arg7[%c0_27, %c0_28, %c0_29, %c0_30] : memref<1x8x8x128xf32, #tpu.memory_space<vmem>>, vector<1x8x8x128xf32>
    %64 = vector.shape_cast %63 : vector<1x8x8x128xf32> to vector<8x8x128xf32>
    %65 = vector.shape_cast %62 : vector<8x8x128xf32> to vector<1x8x8x128xf32>
    tpu.vector_store %arg7[%c0_27, %c0_28, %c0_29, %c0_30], %65 {strides = array<i32>} : memref<1x8x8x128xf32, #tpu.memory_space<vmem>>, vector<1x8x8x128xf32>,
    return
  }
  func.func @transform_0(%arg0: i32, %arg1: i32) -> (i32, i32, i32, i32) {
    %c0_i32 = arith.constant 0 : i32
    %c0_i32_0 = arith.constant 0 : i32
    %c0_i32_1 = arith.constant 0 : i32
    return %arg0, %arg1, %c0_i32, %c0_i32_0 : i32, i32, i32, i32
  }
  func.func @transform_1(%arg0: i32, %arg1: i32) -> (i32, i32, i32, i32) {
    %c0_i32 = arith.constant 0 : i32
    %c0_i32_0 = arith.constant 0 : i32
    %c0_i32_1 = arith.constant 0 : i32
    return %arg0, %arg1, %c0_i32, %c0_i32_0 : i32, i32, i32, i32
  }
  func.func @transform_2(%arg0: i32, %arg1: i32) -> (i32, i32, i32) {
    %c0_i32 = arith.constant 0 : i32
    %c0_i32_0 = arith.constant 0 : i32
    %c0_i32_1 = arith.constant 0 : i32
    %c0_i32_2 = arith.constant 0 : i32
    return %c0_i32, %c0_i32_0, %c0_i32_1 : i32, i32, i32
  }
  func.func @transform_3(%arg0: i32, %arg1: i32) -> (i32, i32, i32) {
    %c0_i32 = arith.constant 0 : i32
    %c0_i32_0 = arith.constant 0 : i32
    %c0_i32_1 = arith.constant 0 : i32
    %c0_i32_2 = arith.constant 0 : i32
    return %c0_i32, %c0_i32_0, %c0_i32_1 : i32, i32, i32
  }
  func.func @transform_4(%arg0: i32, %arg1: i32) -> (i32, i32) {
    %c0_i32 = arith.constant 0 : i32
    %c0_i32_0 = arith.constant 0 : i32
    %c0_i32_1 = arith.constant 0 : i32
    return %c0_i32, %c0_i32_0 : i32, i32
  }
  func.func @transform_5(%arg0: i32, %arg1: i32) -> (i32, i32, i32, i32) {
    %c0_i32 = arith.constant 0 : i32
    %c0_i32_0 = arith.constant 0 : i32
    %c0_i32_1 = arith.constant 0 : i32
    return %arg0, %arg1, %c0_i32, %c0_i32_0 : i32, i32, i32, i32
  }
}

</mosaic_0001>

<llo_original>
// kernel: bottleneck_forward.7
$region0: #{bottleneck_forward.7}
  #allocation0 [shape = 'u32[]', space=smem, size = 0x4, offset = 0x4, fixed_abs, tag = 'smem constant byte address 0x4 - core index']
  #allocation1 [shape = 'u32[72,128]{1,0:T(1,128)}', space=vmem, size = 0x9000, scoped, tag = 'internal scratch']
  %s0 = inlined_call_operand.vmem [shape: bf16[2,8,8,128], index: 0, kind: input, shape index: {}]
  %s1 = inlined_call_operand.vmem [shape: bf16[2,8,8,128], index: 1, kind: input, shape index: {}]
  %s2 = inlined_call_operand.vmem [shape: f32[2,8,128], index: 2, kind: input, shape index: {}]
  %s3 = inlined_call_operand.vmem [shape: f32[2,8,128], index: 3, kind: input, shape index: {}]
  %s4 = inlined_call_operand.vmem [shape: f32[8,128], index: 4, kind: input, shape index: {}]
  %s5 = inlined_call_operand.vmem [shape: f32[2,8,8,128], index: 5, kind: output, shape index: {}]
  %s6 = sld [smem:[#allocation0]]
  $region53: #{bottleneck_forward.7} parent=0
    _
  %s8 = ssub.s32 1, %s6
  %s9 = scalar_select 0, %s8, %s6
  loop: start=0, step=1, limit=4
  $region2: #{bottleneck_forward.7} parent=0 // loop_pre_header
    _
  $region3: #{bottleneck_forward.7} parent=0 // loop_header
    %s11 = sphi 0, %s15
    %p12 = scmp.ge.s32.totalorder %s11, 4
    %s18 = sphi 0, %s30
    %s19 = sphi 0, %s26
    %s20 = sphi 0, %s18
    %s21 = sphi 0, %s19
    %s22 = sphi 0, %s20
    %s23 = sphi 0, %s21
    %s35 = sphi 0, %s37
    %s38 = sphi 0, %s35
    %s39 = sphi 0, %s38
    %s55 = sphi 0, %s39
    %s63 = sphi 0, %s65
    %s66 = sphi 0, %s63
    %s67 = sphi 0, %s66
    %s83 = sphi 0, %s67
    %s87 = sphi 0, %s87
    %s89 = sphi 0, %s87
    %s90 = sphi 0, %s89
    %s104 = sphi 0, %s90
    %s108 = sphi 0, %s108
    %s110 = sphi 0, %s108
    %s111 = sphi 0, %s110
    %s125 = sphi 0, %s111
    %s129 = sphi 0, %s129
    %s131 = sphi 0, %s129
    %s132 = sphi 0, %s131
    %s146 = sphi 0, %s132
    %s154 = sphi 0, %s156
    %s157 = sphi 0, %s154
    %s158 = sphi 0, %s157
    %s174 = sphi 0, %s158
  $region4: #{bottleneck_forward.7} parent=0 // loop_header_branch
    %14 = sbr.rel (%p12) target = $region8
  $region5: #{bottleneck_forward.7} parent=0 // loop_body
    %s16 = ssub.s32 %s11, 1
    %s17 = ssub.s32 %s11, 2
    %s24 = sadd.s32 1, %s19
    %p25 = scmp.ge.s32.totalorder %s24, 1
    %s26 = scalar_select %p25, 0, %s24
    %s27 = sadd.s32 1, %s18
    %s28 = scalar_select %p25, %s27, %s18
    %p29 = scmp.ge.s32.totalorder %s28, 2
    %s30 = scalar_select %p29, 0, %s28
    %s31 = ssub.s32 %s18, %s30
    %s32 = ssub.s32 %s19, %s26
    %s33 = sor.u32 %s31, %s32
    %p34 = scmp.eq.s32.totalorder %s33, 0
    %s36 = sadd.s32 %s35, 1
    %s37 = scalar_select %p34, %s35, %s36
    %p40 = pneg %p34
    %p41 = scmp.eq.s32.totalorder %s11, 1
    %p42 = por %p40, %p41
    %p43 = scmp.ne.s32.totalorder %s35, %s38
    %p44 = scmp.eq.s32.totalorder %s11, 0
    %p45 = por %p43, %p44
    %p46 = scmp.ne.s32.totalorder %s35, %s38
    %p47 = scmp.eq.s32.totalorder %s16, 1
    %p48 = por %p46, %p47
    %p49 = scmp.ne.s32.totalorder %s38, %s39
    %p50 = scmp.eq.s32.totalorder %s16, 0
    %p51 = por %p49, %p50
    %p52 = scmp.ne.s32.totalorder %s38, %s39
    %p53 = scmp.eq.s32.totalorder %s17, 1
    %p54 = por %p52, %p53
    %p56 = scmp.ne.s32.totalorder %s39, %s55
    %p57 = scmp.eq.s32.totalorder %s17, 0
    %p58 = por %p56, %p57
    %s59 = ssub.s32 %s18, %s30
    %s60 = ssub.s32 %s19, %s26
    %s61 = sor.u32 %s59, %s60
    %p62 = scmp.eq.s32.totalorder %s61, 0
    %s64 = sadd.s32 %s63, 1
    %s65 = scalar_select %p62, %s63, %s64
    %p68 = pneg %p62
    %p69 = scmp.eq.s32.totalorder %s11, 1
    %p70 = por %p68, %p69
    %p71 = scmp.ne.s32.totalorder %s63, %s66
    %p72 = scmp.eq.s32.totalorder %s11, 0
    %p73 = por %p71, %p72
    %p74 = scmp.ne.s32.totalorder %s63, %s66
    %p75 = scmp.eq.s32.totalorder %s16, 1
    %p76 = por %p74, %p75
    %p77 = scmp.ne.s32.totalorder %s66, %s67
    %p78 = scmp.eq.s32.totalorder %s16, 0
    %p79 = por %p77, %p78
    %p80 = scmp.ne.s32.totalorder %s66, %s67
    %p81 = scmp.eq.s32.totalorder %s17, 1
    %p82 = por %p80, %p81
    %p84 = scmp.ne.s32.totalorder %s67, %s83
    %p85 = scmp.eq.s32.totalorder %s17, 0
    %p86 = por %p84, %p85
    %s88 = sadd.s32 %s87, 1
    %p91 = scmp.eq.s32.totalorder %s11, 1
    %p92 = scmp.ne.s32.totalorder %s87, %s89
    %p93 = scmp.eq.s32.totalorder %s11, 0
    %p94 = por %p92, %p93
    %p95 = scmp.ne.s32.totalorder %s87, %s89
    %p96 = scmp.eq.s32.totalorder %s16, 1
    %p97 = por %p95, %p96
    %p98 = scmp.ne.s32.totalorder %s89, %s90
    %p99 = scmp.eq.s32.totalorder %s16, 0
    %p100 = por %p98, %p99
    %p101 = scmp.ne.s32.totalorder %s89, %s90
    %p102 = scmp.eq.s32.totalorder %s17, 1
    %p103 = por %p101, %p102
    %p105 = scmp.ne.s32.totalorder %s90, %s104
    %p106 = scmp.eq.s32.totalorder %s17, 0
    %p107 = por %p105, %p106
    %s109 = sadd.s32 %s108, 1
    %p112 = scmp.eq.s32.totalorder %s11, 1
    %p113 = scmp.ne.s32.totalorder %s108, %s110
    %p114 = scmp.eq.s32.totalorder %s11, 0
    %p115 = por %p113, %p114
    %p116 = scmp.ne.s32.totalorder %s108, %s110
    %p117 = scmp.eq.s32.totalorder %s16, 1
    %p118 = por %p116, %p117
    %p119 = scmp.ne.s32.totalorder %s110, %s111
    %p120 = scmp.eq.s32.totalorder %s16, 0
    %p121 = por %p119, %p120
    %p122 = scmp.ne.s32.totalorder %s110, %s111
    %p123 = scmp.eq.s32.totalorder %s17, 1
    %p124 = por %p122, %p123
    %p126 = scmp.ne.s32.totalorder %s111, %s125
    %p127 = scmp.eq.s32.totalorder %s17, 0
    %p128 = por %p126, %p127
    %s130 = sadd.s32 %s129, 1
    %p133 = scmp.eq.s32.totalorder %s11, 1
    %p134 = scmp.ne.s32.totalorder %s129, %s131
    %p135 = scmp.eq.s32.totalorder %s11, 0
    %p136 = por %p134, %p135
    %p137 = scmp.ne.s32.totalorder %s129, %s131
    %p138 = scmp.eq.s32.totalorder %s16, 1
    %p139 = por %p137, %p138
    %p140 = scmp.ne.s32.totalorder %s131, %s132
    %p141 = scmp.eq.s32.totalorder %s16, 0
    %p142 = por %p140, %p141
    %p143 = scmp.ne.s32.totalorder %s131, %s132
    %p144 = scmp.eq.s32.totalorder %s17, 1
    %p145 = por %p143, %p144
    %p147 = scmp.ne.s32.totalorder %s132, %s146
    %p148 = scmp.eq.s32.totalorder %s17, 0
    %p149 = por %p147, %p148
    %s150 = ssub.s32 %s18, %s30
    %s151 = ssub.s32 %s19, %s26
    %s152 = sor.u32 %s150, %s151
    %p153 = scmp.eq.s32.totalorder %s152, 0
    %s155 = sadd.s32 %s154, 1
    %s156 = scalar_select %p153, %s154, %s155
    %p159 = pneg %p153
    %p160 = scmp.eq.s32.totalorder %s11, 1
    %p161 = por %p159, %p160
    %p162 = scmp.ne.s32.totalorder %s154, %s157
    %p163 = scmp.eq.s32.totalorder %s11, 0
    %p164 = por %p162, %p163
    %p165 = scmp.ne.s32.totalorder %s154, %s157
    %p166 = scmp.eq.s32.totalorder %s16, 1
    %p167 = por %p165, %p166
    %p168 = scmp.ne.s32.totalorder %s157, %s158
    %p169 = scmp.eq.s32.totalorder %s16, 0
    %p170 = por %p168, %p169
    %p171 = scmp.ne.s32.totalorder %s157, %s158
    %p172 = scmp.eq.s32.totalorder %s17, 1
    %p173 = por %p171, %p172
    %p175 = scmp.ne.s32.totalorder %s158, %s174
    %p176 = scmp.eq.s32.totalorder %s17, 0
    %p177 = por %p175, %p176
    %p178 = scmp.le.s32.totalorder 1, %s11
    %p179 = scmp.lt.s32.totalorder %s11, 3
    %p180 = pnand %p178, %p179
    %p181 = pneg %p180
    // Predicated region
    $region9: #{bottleneck_forward.7} parent=5 // pred_check
      _
    $region10: #{bottleneck_forward.7} parent=5 // pred_check_branch
      %183 = sbr.rel (%p180) target = $region12
    $region11: #{bottleneck_forward.7} parent=5 // pred_region
      %s184 = ssub.s32 %s11, 1
      // Predicated region
      $region13: #{bottleneck_forward.7} parent=11 // pred_check
        %p185 = pneg %p100
      $region14: #{bottleneck_forward.7} parent=11 // pred_check_branch
        %187 = sbr.rel (%p185) target = $region16
      $region15: #{bottleneck_forward.7} parent=11 // pred_region
        _
      $region16: #{bottleneck_forward.7} parent=11 // pred_fallthru
        _
      // Predicated region
      $region17: #{bottleneck_forward.7} parent=11 // pred_check
        %p188 = pneg %p121
      $region18: #{bottleneck_forward.7} parent=11 // pred_check_branch
        %190 = sbr.rel (%p188) target = $region20
      $region19: #{bottleneck_forward.7} parent=11 // pred_region
        _
      $region20: #{bottleneck_forward.7} parent=11 // pred_fallthru
        _
      // Predicated region
      $region21: #{bottleneck_forward.7} parent=11 // pred_check
        %p191 = pneg %p142
      $region22: #{bottleneck_forward.7} parent=11 // pred_check_branch
        %193 = sbr.rel (%p191) target = $region24
      $region23: #{bottleneck_forward.7} parent=11 // pred_region
        _
      $region24: #{bottleneck_forward.7} parent=11 // pred_fallthru
        _
    $region12: #{bottleneck_forward.7} parent=5 // pred_fallthru
      _
    %p194 = scmp.lt.s32.totalorder %s11, 2
    // Predicated region
    $region25: #{bottleneck_forward.7} parent=5 // pred_check
      %p195 = pneg %p194
    $region26: #{bottleneck_forward.7} parent=5 // pred_check_branch
      %197 = sbr.rel (%p195) target = $region28
    $region27: #{bottleneck_forward.7} parent=5 // pred_region
      // Predicated region
      $region29: #{bottleneck_forward.7} parent=27 // pred_check
        %p198 = pneg %p45
      $region30: #{bottleneck_forward.7} parent=27 // pred_check_branch
        %200 = sbr.rel (%p198) target = $region32
      $region31: #{bottleneck_forward.7} parent=27 // pred_region
        %s201 = smul.u32 8, %s19
        %p202 = scmp.lt.s32.totalorder %s18, 1
        %s203 = scalar_select %p202, %s18, 1
        %p204 = scmp.lt.s32.totalorder %s201, 7
        %s205 = scalar_select %p204, %s201, 7
        %s206 = smul.addr %s203, 8
        %s207 = sadd.s32 %s205, %s206
        %s208 = smul.addr %s207, 4
        %s209 = scalar_lea.vmem %s0, %s208
        %s210 = smul.u32 8, %s19
      $region32: #{bottleneck_forward.7} parent=27 // pred_fallthru
        _
      // Predicated region
      $region33: #{bottleneck_forward.7} parent=27 // pred_check
        %p211 = pneg %p73
      $region34: #{bottleneck_forward.7} parent=27 // pred_check_branch
        %213 = sbr.rel (%p211) target = $region36
      $region35: #{bottleneck_forward.7} parent=27 // pred_region
        %s214 = smul.u32 8, %s19
        %p215 = scmp.lt.s32.totalorder %s18, 1
        %s216 = scalar_select %p215, %s18, 1
        %p217 = scmp.lt.s32.totalorder %s214, 7
        %s218 = scalar_select %p217, %s214, 7
        %s219 = smul.addr %s216, 8
        %s220 = sadd.s32 %s218, %s219
        %s221 = smul.addr %s220, 4
        %s222 = scalar_lea.vmem %s1, %s221
        %s223 = smul.u32 8, %s19
      $region36: #{bottleneck_forward.7} parent=27 // pred_fallthru
        _
    $region28: #{bottleneck_forward.7} parent=5 // pred_fallthru
      _
    %p224 = scmp.le.s32.totalorder 1, %s11
    %p225 = scmp.lt.s32.totalorder %s11, 3
    %p226 = pnand %p224, %p225
    %p227 = pneg %p226
    // Predicated region
    $region37: #{bottleneck_forward.7} parent=5 // pred_check
      _
    $region38: #{bottleneck_forward.7} parent=5 // pred_check_branch
      %229 = sbr.rel (%p226) target = $region40
    $region39: #{bottleneck_forward.7} parent=5 // pred_region
      %s230 = ssub.s32 %s11, 1
      %s231 = smul.u32 8, %s21
      %p232 = scmp.lt.s32.totalorder %s20, 1
      %s233 = scalar_select %p232, %s20, 1
      %p234 = scmp.lt.s32.totalorder %s231, 7
      %s235 = scalar_select %p234, %s231, 7
      %s236 = smul.addr %s233, 8
      %s237 = sadd.s32 %s235, %s236
      %s238 = smul.addr %s237, 4
      %s239 = scalar_lea.vmem %s0, %s238
      %p240 = pneg %p51
      %p241 = pneg %p48
      %s242 = smul.u32 8, %s21
      %p243 = scmp.lt.s32.totalorder %s20, 1
      %s244 = scalar_select %p243, %s20, 1
      %p245 = scmp.lt.s32.totalorder %s242, 7
      %s246 = scalar_select %p245, %s242, 7
      %s247 = smul.addr %s244, 8
      %s248 = sadd.s32 %s246, %s247
      %s249 = smul.addr %s248, 4
      %s250 = scalar_lea.vmem %s1, %s249
      %p251 = pneg %p79
      %p252 = pneg %p76
      %p253 = pneg %p100
      %p254 = pneg %p97
      %p255 = pneg %p121
      %p256 = pneg %p118
      %p257 = pneg %p142
      %p258 = pneg %p139
      %p259 = pneg %p170
      %p260 = pneg %p167
      %s261 = smul.u32 8, %s21
      %p262 = scmp.lt.s32.totalorder %s20, 1
      %s263 = scalar_select %p262, %s20, 1
      %p264 = scmp.lt.s32.totalorder %s261, 7
      %s265 = scalar_select %p264, %s261, 7
      %s266 = smul.addr %s263, 8
      %s267 = sadd.s32 %s265, %s266
      %s268 = smul.addr %s267, 8
      %s269 = scalar_lea.vmem %s5, %s268
      %s270 = smul.u32 8, %s21
      %p271 = scmp.lt.s32.totalorder %s20, 1
      %s272 = scalar_select %p271, %s20, 1
      %p273 = scmp.lt.s32.totalorder %s270, 7
      %s274 = scalar_select %p273, %s270, 7
      %s275 = smul.addr %s272, 8
      %s276 = sadd.s32 %s274, %s275
      %s277 = smul.addr %s276, 4
      %s278 = scalar_lea.vmem %s0, %s277
      %s279 = smul.u32 8, %s21
      %s280 = smul.u32 8, %s21
      %p281 = scmp.lt.s32.totalorder %s20, 1
      %s282 = scalar_select %p281, %s20, 1
      %p283 = scmp.lt.s32.totalorder %s280, 7
      %s284 = scalar_select %p283, %s280, 7
      %s285 = smul.addr %s282, 8
      %s286 = sadd.s32 %s284, %s285
      %s287 = smul.addr %s286, 4
      %s288 = scalar_lea.vmem %s1, %s287
      %s289 = smul.u32 8, %s21
      %s290 = smul.u32 8, %s21
      %p291 = scmp.lt.s32.totalorder %s20, 1
      %s292 = scalar_select %p291, %s20, 1
      %p293 = scmp.lt.s32.totalorder %s290, 7
      %s294 = scalar_select %p293, %s290, 7
      %s295 = smul.addr %s292, 8
      %s296 = sadd.s32 %s294, %s295
      %s297 = smul.addr %s296, 8
      %s298 = scalar_lea.vmem %s5, %s297
      %s299 = smul.u32 8, %s21
      %v300 = vld [vmem:[%s2] sm:$0xff]
      %v301 = vld [vmem:[%s2 + $0x8] sm:$0xff]
      %v302 = vld [vmem:[%s4] sm:$0xff]
      %v303 = vadd.f32 %v300, %v301
      %v304 = vmul.f32 %v303, 0.0078125
      %v305 = vmul.f32 %v304, %v304
      %v307 = vrot.slane %v305, 7
      %v309 = vsub.f32 %v304, %v307
      %v310 = vmax.f32 %v309, 0.0
      %v311 = vadd.f32 %v310, 1e-05
      %v312 = vrsqrt.pop %v311
      %v313 = vmul.f32 %v312, %v311
      %v314 = vmul.f32 %v313, %v312
      %v315 = vmul.f32 0.5, %v314
      %v316 = vsub.f32 1.5, %v315
      %v317 = vmul.f32 %v312, %v316
      %vm318 = vweird.f32 %v311
      %vm319 = vweird.f32 %v312
      %vm320 = vmor %vm318, %vm319
      %v321 = vsel %vm320, %v312, %v317
      %v323 = vrot.slane %v302, 7
      %v325 = vmul.f32 %v321, %v323
      %v327 = vrot.slane %v325, 1
      %v329 = vmul.f32 %v304, %v327
      %v331 = vrot.slane %v329, 7
      %v333 = vsub.f32 %v302, %v331
      %v334 = vld [vmem:[%s3] sm:$0xff]
      %v335 = vld [vmem:[%s3 + $0x8] sm:$0xff]
      %v336 = vadd.f32 %v334, %v335
      %v337 = vmul.f32 %v336, 0.0078125
      %v338 = vmul.f32 %v337, %v337
      %v340 = vrot.slane %v338, 7
      %v342 = vsub.f32 %v337, %v340
      %v343 = vmax.f32 %v342, 0.0
      %v344 = vadd.f32 %v343, 1e-05
      %v345 = vrsqrt.pop %v344
      %v346 = vmul.f32 %v345, %v344
      %v347 = vmul.f32 %v346, %v345
      %v348 = vmul.f32 0.5, %v347
      %v349 = vsub.f32 1.5, %v348
      %v350 = vmul.f32 %v345, %v349
      %vm351 = vweird.f32 %v344
      %vm352 = vweird.f32 %v345
      %vm353 = vmor %vm351, %vm352
      %v354 = vsel %vm353, %v345, %v350
      %v355 = vmul.f32 %v354, %v323
      %v357 = vrot.slane %v355, 1
      %v359 = vmul.f32 %v337, %v357
      %v361 = vrot.slane %v359, 7
      %v363 = vsub.f32 %v302, %v361
      %v364 = vld [vmem:[%s278] sm:$0xf]
      %v365 = vld [vmem:[%s278 + $0x4] sm:$0xf]
      %v366 = vld [vmem:[%s278 + $0x8] sm:$0xf]
      %v367 = vld [vmem:[%s278 + $0xc] sm:$0xf]
      %v368 = vld [vmem:[%s278 + $0x10] sm:$0xf]
      %v369 = vld [vmem:[%s278 + $0x14] sm:$0xf]
      %v370 = vld [vmem:[%s278 + $0x18] sm:$0xf]
      %v371 = vld [vmem:[%s278 + $0x1c] sm:$0xf]
      %v372 = vunpack.c.l.bf16 %v364
      %v373 = vunpack.c.l.bf16 %v365
      %v374 = vunpack.c.l.bf16 %v366
      %v375 = vunpack.c.l.bf16 %v367
      %v376 = vunpack.c.l.bf16 %v368
      %v377 = vunpack.c.l.bf16 %v369
      %v378 = vunpack.c.l.bf16 %v370
      %v379 = vunpack.c.l.bf16 %v371
      %v380 = vperm.slane %v325, 1
      %v381 = vmul.f32 %v372, %v380
      %v382 = vmul.f32 %v373, %v380
      %v383 = vmul.f32 %v374, %v380
      %v384 = vmul.f32 %v375, %v380
      %v385 = vmul.f32 %v376, %v380
      %v386 = vmul.f32 %v377, %v380
      %v387 = vmul.f32 %v378, %v380
      %v388 = vmul.f32 %v379, %v380
      %v389 = vperm.slane %v333, 1
      %v390 = vadd.f32 %v381, %v389
      %v391 = vadd.f32 %v382, %v389
      %v392 = vadd.f32 %v383, %v389
      %v393 = vadd.f32 %v384, %v389
      %v394 = vadd.f32 %v385, %v389
      %v395 = vadd.f32 %v386, %v389
      %v396 = vadd.f32 %v387, %v389
      %v397 = vadd.f32 %v388, %v389
      %v398 = vmax.f32 %v390, 0.0
      %v399 = vmax.f32 %v391, 0.0
      %v400 = vmax.f32 %v392, 0.0
      %v401 = vmax.f32 %v393, 0.0
      %v402 = vmax.f32 %v394, 0.0
      %v403 = vmax.f32 %v395, 0.0
      %v404 = vmax.f32 %v396, 0.0
      %v405 = vmax.f32 %v397, 0.0
      %v406 = vld [vmem:[%s288] sm:$0xf]
      %v407 = vld [vmem:[%s288 + $0x4] sm:$0xf]
      %v408 = vld [vmem:[%s288 + $0x8] sm:$0xf]
      %v409 = vld [vmem:[%s288 + $0xc] sm:$0xf]
      %v410 = vld [vmem:[%s288 + $0x10] sm:$0xf]
      %v411 = vld [vmem:[%s288 + $0x14] sm:$0xf]
      %v412 = vld [vmem:[%s288 + $0x18] sm:$0xf]
      %v413 = vld [vmem:[%s288 + $0x1c] sm:$0xf]
      %v414 = vunpack.c.l.bf16 %v406
      %v415 = vunpack.c.l.bf16 %v407
      %v416 = vunpack.c.l.bf16 %v408
      %v417 = vunpack.c.l.bf16 %v409
      %v418 = vunpack.c.l.bf16 %v410
      %v419 = vunpack.c.l.bf16 %v411
      %v420 = vunpack.c.l.bf16 %v412
      %v421 = vunpack.c.l.bf16 %v413
      %v422 = vperm.slane %v355, 1
      %v423 = vmul.f32 %v414, %v422
      %v424 = vmul.f32 %v415, %v422
      %v425 = vmul.f32 %v416, %v422
      %v426 = vmul.f32 %v417, %v422
      %v427 = vmul.f32 %v418, %v422
      %v428 = vmul.f32 %v419, %v422
      %v429 = vmul.f32 %v420, %v422
      %v430 = vmul.f32 %v421, %v422
      %v431 = vperm.slane %v363, 1
      %v432 = vadd.f32 %v423, %v431
      %v433 = vadd.f32 %v424, %v431
      %v434 = vadd.f32 %v425, %v431
      %v435 = vadd.f32 %v426, %v431
      %v436 = vadd.f32 %v427, %v431
      %v437 = vadd.f32 %v428, %v431
      %v438 = vadd.f32 %v429, %v431
      %v439 = vadd.f32 %v430, %v431
      %v440 = vadd.f32 %v398, %v432
      %v441 = vadd.f32 %v399, %v433
      %v442 = vadd.f32 %v400, %v434
      %v443 = vadd.f32 %v401, %v435
      %v444 = vadd.f32 %v402, %v436
      %v445 = vadd.f32 %v403, %v437
      %v446 = vadd.f32 %v404, %v438
      %v447 = vadd.f32 %v405, %v439
      %448 = vst [vmem:[%s298] sm:$0xff] %v440
      %449 = vst [vmem:[%s298 + $0x8] sm:$0xff] %v441
      %450 = vst [vmem:[%s298 + $0x10] sm:$0xff] %v442
      %451 = vst [vmem:[%s298 + $0x18] sm:$0xff] %v443
      %452 = vst [vmem:[%s298 + $0x20] sm:$0xff] %v444
      %453 = vst [vmem:[%s298 + $0x28] sm:$0xff] %v445
      %454 = vst [vmem:[%s298 + $0x30] sm:$0xff] %v446
      %455 = vst [vmem:[%s298 + $0x38] sm:$0xff] %v447
      %s456 = smul.u32 8, %s21
      %p457 = scmp.lt.s32.totalorder %s20, 1
      %s458 = scalar_select %p457, %s20, 1
      %p459 = scmp.lt.s32.totalorder %s456, 7
      %s460 = scalar_select %p459, %s456, 7
      %s461 = smul.addr %s458, 8
      %s462 = sadd.s32 %s460, %s461
      %s463 = smul.addr %s462, 8
      %s464 = scalar_lea.vmem %s5, %s463
      // Predicated region
      $region41: #{bottleneck_forward.7} parent=39 // pred_check
        %p465 = pneg %p167
      $region42: #{bottleneck_forward.7} parent=39 // pred_check_branch
        %467 = sbr.rel (%p465) target = $region44
      $region43: #{bottleneck_forward.7} parent=39 // pred_region
        %s468 = smul.u32 8, %s21
      $region44: #{bottleneck_forward.7} parent=39 // pred_fallthru
        _
    $region40: #{bottleneck_forward.7} parent=5 // pred_fallthru
      _
    %p469 = scmp.le.s32.totalorder 2, %s11
    // Predicated region
    $region45: #{bottleneck_forward.7} parent=5 // pred_check
      %p470 = pneg %p469
    $region46: #{bottleneck_forward.7} parent=5 // pred_check_branch
      %472 = sbr.rel (%p470) target = $region48
    $region47: #{bottleneck_forward.7} parent=5 // pred_region
      %s473 = ssub.s32 %s11, 2
      // Predicated region
      $region49: #{bottleneck_forward.7} parent=47 // pred_check
        %p474 = pneg %p173
      $region50: #{bottleneck_forward.7} parent=47 // pred_check_branch
        %476 = sbr.rel (%p474) target = $region52
      $region51: #{bottleneck_forward.7} parent=47 // pred_region
        %s477 = smul.u32 8, %s23
        %p478 = scmp.lt.s32.totalorder %s22, 1
        %s479 = scalar_select %p478, %s22, 1
        %p480 = scmp.lt.s32.totalorder %s477, 7
        %s481 = scalar_select %p480, %s477, 7
        %s482 = smul.addr %s479, 8
        %s483 = sadd.s32 %s481, %s482
        %s484 = smul.addr %s483, 8
        %s485 = scalar_lea.vmem %s5, %s484
      $region52: #{bottleneck_forward.7} parent=47 // pred_fallthru
        _
    $region48: #{bottleneck_forward.7} parent=5 // pred_fallthru
      _
  $region6: #{bottleneck_forward.7} parent=0 // loop_footer
    %s15 = sadd.s32 1, %s11
  $region7: #{bottleneck_forward.7} parent=0 // loop_footer_branch
    %10 = sbr.rel target = $region3
  $region8: #{bottleneck_forward.7} parent=0 // loop_exit
    _

// kernel: bottleneck_forward.4
$region0: #{bottleneck_forward.4}
  #allocation0 [shape = 'u32[]', space=smem, size = 0x4, offset = 0x4, fixed_abs, tag = 'smem constant byte address 0x4 - core index']
  #allocation1 [shape = 'u32[72,128]{1,0:T(1,128)}', space=vmem, size = 0x9000, scoped, tag = 'internal scratch']
  %s0 = inlined_call_operand.vmem [shape: bf16[2,16,16,128], index: 0, kind: input, shape index: {}]
  %s1 = inlined_call_operand.vmem [shape: bf16[128,128], index: 1, kind: input, shape index: {}]
  %s2 = inlined_call_operand.vmem [shape: bf16[2,16,16,128], index: 2, kind: output, shape index: {0}]
  %s3 = inlined_call_operand.vmem [shape: f32[2,8,128], index: 3, kind: output, shape index: {1}]
  %4 = xla_tuple %s2, %s3
  %s5 = sld [smem:[#allocation0]]
  $region53: #{bottleneck_forward.4} parent=0
    _
  %s7 = ssub.s32 1, %s5
  %s8 = scalar_select 0, %s7, %s5
  loop: start=0, step=1, limit=4
  $region2: #{bottleneck_forward.4} parent=0 // loop_pre_header
    _
  $region3: #{bottleneck_forward.4} parent=0 // loop_header
    %s10 = sphi 0, %s14
    %p11 = scmp.ge.s32.totalorder %s10, 4
    %s17 = sphi 0, %s29
    %s18 = sphi 0, %s25
    %s19 = sphi 0, %s17
    %s20 = sphi 0, %s18
    %s21 = sphi 0, %s19
    %s22 = sphi 0, %s20
    %s34 = sphi 0, %s36
    %s37 = sphi 0, %s34
    %s38 = sphi 0, %s37
    %s54 = sphi 0, %s38
    %s58 = sphi 0, %s58
    %s60 = sphi 0, %s58
    %s61 = sphi 0, %s60
    %s75 = sphi 0, %s61
    %s83 = sphi 0, %s85
    %s86 = sphi 0, %s83
    %s87 = sphi 0, %s86
    %s103 = sphi 0, %s87
    %s109 = sphi 0, %s111
    %s112 = sphi 0, %s109
    %s113 = sphi 0, %s112
    %s129 = sphi 0, %s113
  $region4: #{bottleneck_forward.4} parent=0 // loop_header_branch
    %13 = sbr.rel (%p11) target = $region8
  $region5: #{bottleneck_forward.4} parent=0 // loop_body
    %s15 = ssub.s32 %s10, 1
    %s16 = ssub.s32 %s10, 2
    %s23 = sadd.s32 1, %s18
    %p24 = scmp.ge.s32.totalorder %s23, 1
    %s25 = scalar_select %p24, 0, %s23
    %s26 = sadd.s32 1, %s17
    %s27 = scalar_select %p24, %s26, %s17
    %p28 = scmp.ge.s32.totalorder %s27, 2
    %s29 = scalar_select %p28, 0, %s27
    %s30 = ssub.s32 %s17, %s29
    %s31 = ssub.s32 %s18, %s25
    %s32 = sor.u32 %s30, %s31
    %p33 = scmp.eq.s32.totalorder %s32, 0
    %s35 = sadd.s32 %s34, 1
    %s36 = scalar_select %p33, %s34, %s35
    %p39 = pneg %p33
    %p40 = scmp.eq.s32.totalorder %s10, 1
    %p41 = por %p39, %p40
    %p42 = scmp.ne.s32.totalorder %s34, %s37
    %p43 = scmp.eq.s32.totalorder %s10, 0
    %p44 = por %p42, %p43
    %p45 = scmp.ne.s32.totalorder %s34, %s37
    %p46 = scmp.eq.s32.totalorder %s15, 1
    %p47 = por %p45, %p46
    %p48 = scmp.ne.s32.totalorder %s37, %s38
    %p49 = scmp.eq.s32.totalorder %s15, 0
    %p50 = por %p48, %p49
    %p51 = scmp.ne.s32.totalorder %s37, %s38
    %p52 = scmp.eq.s32.totalorder %s16, 1
    %p53 = por %p51, %p52
    %p55 = scmp.ne.s32.totalorder %s38, %s54
    %p56 = scmp.eq.s32.totalorder %s16, 0
    %p57 = por %p55, %p56
    %s59 = sadd.s32 %s58, 1
    %p62 = scmp.eq.s32.totalorder %s10, 1
    %p63 = scmp.ne.s32.totalorder %s58, %s60
    %p64 = scmp.eq.s32.totalorder %s10, 0
    %p65 = por %p63, %p64
    %p66 = scmp.ne.s32.totalorder %s58, %s60
    %p67 = scmp.eq.s32.totalorder %s15, 1
    %p68 = por %p66, %p67
    %p69 = scmp.ne.s32.totalorder %s60, %s61
    %p70 = scmp.eq.s32.totalorder %s15, 0
    %p71 = por %p69, %p70
    %p72 = scmp.ne.s32.totalorder %s60, %s61
    %p73 = scmp.eq.s32.totalorder %s16, 1
    %p74 = por %p72, %p73
    %p76 = scmp.ne.s32.totalorder %s61, %s75
    %p77 = scmp.eq.s32.totalorder %s16, 0
    %p78 = por %p76, %p77
    %s79 = ssub.s32 %s17, %s29
    %s80 = ssub.s32 %s18, %s25
    %s81 = sor.u32 %s79, %s80
    %p82 = scmp.eq.s32.totalorder %s81, 0
    %s84 = sadd.s32 %s83, 1
    %s85 = scalar_select %p82, %s83, %s84
    %p88 = pneg %p82
    %p89 = scmp.eq.s32.totalorder %s10, 1
    %p90 = por %p88, %p89
    %p91 = scmp.ne.s32.totalorder %s83, %s86
    %p92 = scmp.eq.s32.totalorder %s10, 0
    %p93 = por %p91, %p92
    %p94 = scmp.ne.s32.totalorder %s83, %s86
    %p95 = scmp.eq.s32.totalorder %s15, 1
    %p96 = por %p94, %p95
    %p97 = scmp.ne.s32.totalorder %s86, %s87
    %p98 = scmp.eq.s32.totalorder %s15, 0
    %p99 = por %p97, %p98
    %p100 = scmp.ne.s32.totalorder %s86, %s87
    %p101 = scmp.eq.s32.totalorder %s16, 1
    %p102 = por %p100, %p101
    %p104 = scmp.ne.s32.totalorder %s87, %s103
    %p105 = scmp.eq.s32.totalorder %s16, 0
    %p106 = por %p104, %p105
    %s107 = ssub.s32 %s17, %s29
    %p108 = scmp.eq.s32.totalorder %s107, 0
    %s110 = sadd.s32 %s109, 1
    %s111 = scalar_select %p108, %s109, %s110
    %p114 = pneg %p108
    %p115 = scmp.eq.s32.totalorder %s10, 1
    %p116 = por %p114, %p115
    %p117 = scmp.ne.s32.totalorder %s109, %s112
    %p118 = scmp.eq.s32.totalorder %s10, 0
    %p119 = por %p117, %p118
    %p120 = scmp.ne.s32.totalorder %s109, %s112
    %p121 = scmp.eq.s32.totalorder %s15, 1
    %p122 = por %p120, %p121
    %p123 = scmp.ne.s32.totalorder %s112, %s113
    %p124 = scmp.eq.s32.totalorder %s15, 0
    %p125 = por %p123, %p124
    %p126 = scmp.ne.s32.totalorder %s112, %s113
    %p127 = scmp.eq.s32.totalorder %s16, 1
    %p128 = por %p126, %p127
    %p130 = scmp.ne.s32.totalorder %s113, %s129
    %p131 = scmp.eq.s32.totalorder %s16, 0
    %p132 = por %p130, %p131
    %p133 = scmp.le.s32.totalorder 1, %s10
    %p134 = scmp.lt.s32.totalorder %s10, 3
    %p135 = pnand %p133, %p134
    %p136 = pneg %p135
    // Predicated region
    $region9: #{bottleneck_forward.4} parent=5 // pred_check
      _
    $region10: #{bottleneck_forward.4} parent=5 // pred_check_branch
      %138 = sbr.rel (%p135) target = $region12
    $region11: #{bottleneck_forward.4} parent=5 // pred_region
      %s139 = ssub.s32 %s10, 1
      // Predicated region
      $region13: #{bottleneck_forward.4} parent=11 // pred_check
        %p140 = pneg %p71
      $region14: #{bottleneck_forward.4} parent=11 // pred_check_branch
        %142 = sbr.rel (%p140) target = $region16
      $region15: #{bottleneck_forward.4} parent=11 // pred_region
        _
      $region16: #{bottleneck_forward.4} parent=11 // pred_fallthru
        _
    $region12: #{bottleneck_forward.4} parent=5 // pred_fallthru
      _
    %p143 = scmp.lt.s32.totalorder %s10, 2
    // Predicated region
    $region17: #{bottleneck_forward.4} parent=5 // pred_check
      %p144 = pneg %p143
    $region18: #{bottleneck_forward.4} parent=5 // pred_check_branch
      %146 = sbr.rel (%p144) target = $region20
    $region19: #{bottleneck_forward.4} parent=5 // pred_region
      // Predicated region
      $region21: #{bottleneck_forward.4} parent=19 // pred_check
        %p147 = pneg %p44
      $region22: #{bottleneck_forward.4} parent=19 // pred_check_branch
        %149 = sbr.rel (%p147) target = $region24
      $region23: #{bottleneck_forward.4} parent=19 // pred_region
        %s150 = smul.u32 16, %s18
        %p151 = scmp.lt.s32.totalorder %s17, 1
        %s152 = scalar_select %p151, %s17, 1
        %p153 = scmp.lt.s32.totalorder %s150, 15
        %s154 = scalar_select %p153, %s150, 15
        %s155 = smul.addr %s154, 2
        %s156 = smul.addr %s152, 32
        %s157 = sadd.s32 %s155, %s156
        %s158 = smul.addr %s157, 4
        %s159 = scalar_lea.vmem %s0, %s158
        %s160 = smul.u32 16, %s18
      $region24: #{bottleneck_forward.4} parent=19 // pred_fallthru
        _
    $region20: #{bottleneck_forward.4} parent=5 // pred_fallthru
      _
    %p161 = scmp.le.s32.totalorder 1, %s10
    %p162 = scmp.lt.s32.totalorder %s10, 3
    %p163 = pnand %p161, %p162
    %p164 = pneg %p163
    // Predicated region
    $region25: #{bottleneck_forward.4} parent=5 // pred_check
      _
    $region26: #{bottleneck_forward.4} parent=5 // pred_check_branch
      %166 = sbr.rel (%p163) target = $region28
    $region27: #{bottleneck_forward.4} parent=5 // pred_region
      %s167 = ssub.s32 %s10, 1
      %s168 = smul.u32 16, %s20
      %p169 = scmp.lt.s32.totalorder %s19, 1
      %s170 = scalar_select %p169, %s19, 1
      %p171 = scmp.lt.s32.totalorder %s168, 15
      %s172 = scalar_select %p171, %s168, 15
      %s173 = smul.addr %s172, 2
      %s174 = smul.addr %s170, 32
      %s175 = sadd.s32 %s173, %s174
      %s176 = smul.addr %s175, 4
      %s177 = scalar_lea.vmem %s0, %s176
      %p178 = pneg %p50
      %p179 = pneg %p47
      %p180 = pneg %p71
      %p181 = pneg %p68
      %p182 = pneg %p99
      %p183 = pneg %p96
      %s184 = smul.u32 16, %s20
      %p185 = scmp.lt.s32.totalorder %s19, 1
      %s186 = scalar_select %p185, %s19, 1
      %p187 = scmp.lt.s32.totalorder %s184, 15
      %s188 = scalar_select %p187, %s184, 15
      %s189 = smul.addr %s188, 2
      %s190 = smul.addr %s186, 32
      %s191 = sadd.s32 %s189, %s190
      %s192 = smul.addr %s191, 4
      %s193 = scalar_lea.vmem %s2, %s192
      %p194 = pneg %p125
      %p195 = pneg %p122
      %p196 = scmp.lt.s32.totalorder %s19, 1
      %s197 = scalar_select %p196, %s19, 1
      %s198 = smul.addr %s197, 8
      %s199 = scalar_lea.vmem %s3, %s198
      %s200 = smul.u32 16, %s20
      %p201 = scmp.lt.s32.totalorder %s19, 1
      %s202 = scalar_select %p201, %s19, 1
      %p203 = scmp.lt.s32.totalorder %s200, 15
      %s204 = scalar_select %p203, %s200, 15
      %s205 = smul.addr %s204, 2
      %s206 = smul.addr %s202, 32
      %s207 = sadd.s32 %s205, %s206
      %s208 = smul.addr %s207, 4
      %s209 = scalar_lea.vmem %s0, %s208
      %s210 = smul.u32 16, %s20
      %s211 = smul.u32 16, %s20
      %p212 = scmp.lt.s32.totalorder %s19, 1
      %s213 = scalar_select %p212, %s19, 1
      %p214 = scmp.lt.s32.totalorder %s211, 15
      %s215 = scalar_select %p214, %s211, 15
      %s216 = smul.addr %s215, 2
      %s217 = smul.addr %s213, 32
      %s218 = sadd.s32 %s216, %s217
      %s219 = smul.addr %s218, 4
      %s220 = scalar_lea.vmem %s2, %s219
      %s221 = smul.u32 16, %s20
      %p222 = scmp.lt.s32.totalorder %s19, 1
      %s223 = scalar_select %p222, %s19, 1
      %s224 = smul.addr %s223, 8
      %s225 = scalar_lea.vmem %s3, %s224
      %p226 = scmp.eq.s32.totalorder %s20, 0
      // Predicated region
      $region29: #{bottleneck_forward.4} parent=27 // pred_check
        %p227 = pneg %p226
      $region30: #{bottleneck_forward.4} parent=27 // pred_check_branch
        %229 = sbr.rel (%p227) target = $region32
      $region31: #{bottleneck_forward.4} parent=27 // pred_region
        %230 = vst [vmem:[%s225] sm:$0xff] 0.0
      $region32: #{bottleneck_forward.4} parent=27 // pred_fallthru
        _
      %v231 = vld [vmem:[%s209] sm:$0xf]
      %v232 = vld [vmem:[%s209 + $0x4] sm:$0xf]
      %v233 = vld [vmem:[%s209 + $0x8] sm:$0xf]
      %v234 = vld [vmem:[%s209 + $0xc] sm:$0xf]
      %v235 = vld [vmem:[%s209 + $0x10] sm:$0xf]
      %v236 = vld [vmem:[%s209 + $0x14] sm:$0xf]
      %v237 = vld [vmem:[%s209 + $0x18] sm:$0xf]
      %v238 = vld [vmem:[%s209 + $0x1c] sm:$0xf]
      %v239 = vld [vmem:[%s209 + $0x20] sm:$0xf]
      %v240 = vld [vmem:[%s209 + $0x24] sm:$0xf]
      %v241 = vld [vmem:[%s209 + $0x28] sm:$0xf]
      %v242 = vld [vmem:[%s209 + $0x2c] sm:$0xf]
      %v243 = vld [vmem:[%s209 + $0x30] sm:$0xf]
      %v244 = vld [vmem:[%s209 + $0x34] sm:$0xf]
      %v245 = vld [vmem:[%s209 + $0x38] sm:$0xf]
      %v246 = vld [vmem:[%s209 + $0x3c] sm:$0xf]
      %v247 = vld [vmem:[%s209 + $0x40] sm:$0xf]
      %v248 = vld [vmem:[%s209 + $0x44] sm:$0xf]
      %v249 = vld [vmem:[%s209 + $0x48] sm:$0xf]
      %v250 = vld [vmem:[%s209 + $0x4c] sm:$0xf]
      %v251 = vld [vmem:[%s209 + $0x50] sm:$0xf]
      %v252 = vld [vmem:[%s209 + $0x54] sm:$0xf]
      %v253 = vld [vmem:[%s209 + $0x58] sm:$0xf]
      %v254 = vld [vmem:[%s209 + $0x5c] sm:$0xf]
      %v255 = vld [vmem:[%s209 + $0x60] sm:$0xf]
      %v256 = vld [vmem:[%s209 + $0x64] sm:$0xf]
      %v257 = vld [vmem:[%s209 + $0x68] sm:$0xf]
      %v258 = vld [vmem:[%s209 + $0x6c] sm:$0xf]
      %v259 = vld [vmem:[%s209 + $0x70] sm:$0xf]
      %v260 = vld [vmem:[%s209 + $0x74] sm:$0xf]
      %v261 = vld [vmem:[%s209 + $0x78] sm:$0xf]
      %v262 = vld [vmem:[%s209 + $0x7c] sm:$0xf]
      %v263 = vld [vmem:[%s1] sm:$0xf]
      %v264 = vld [vmem:[%s1 + $0x4] sm:$0xf]
      %v265 = vld [vmem:[%s1 + $0x8] sm:$0xf]
      %v266 = vld [vmem:[%s1 + $0xc] sm:$0xf]
      %v267 = vld [vmem:[%s1 + $0x10] sm:$0xf]
      %v268 = vld [vmem:[%s1 + $0x14] sm:$0xf]
      %v269 = vld [vmem:[%s1 + $0x18] sm:$0xf]
      %v270 = vld [vmem:[%s1 + $0x1c] sm:$0xf]
      %v271 = vld [vmem:[%s1 + $0x20] sm:$0xf]
      %v272 = vld [vmem:[%s1 + $0x24] sm:$0xf]
      %v273 = vld [vmem:[%s1 + $0x28] sm:$0xf]
      %v274 = vld [vmem:[%s1 + $0x2c] sm:$0xf]
      %v275 = vld [vmem:[%s1 + $0x30] sm:$0xf]
      %v276 = vld [vmem:[%s1 + $0x34] sm:$0xf]
      %v277 = vld [vmem:[%s1 + $0x38] sm:$0xf]
      %v278 = vld [vmem:[%s1 + $0x3c] sm:$0xf]
      %v311 = vunpack.c.l.b16 %v231
      %v312 = vunpack.c.l.b16 %v232
      %v313 = vunpack.c.l.b16 %v233
      %v314 = vunpack.c.l.b16 %v234
      %v315 = vunpack.c.l.b16 %v235
      %v316 = vunpack.c.l.b16 %v236
      %v317 = vunpack.c.l.b16 %v237
      %v318 = vunpack.c.l.b16 %v238
      %v319 = vunpack.c.l.b16 %v239
      %v320 = vunpack.c.l.b16 %v240
      %v321 = vunpack.c.l.b16 %v241
      %v322 = vunpack.c.l.b16 %v242
      %v323 = vunpack.c.l.b16 %v243
      %v324 = vunpack.c.l.b16 %v244
      %v325 = vunpack.c.l.b16 %v245
      %v326 = vunpack.c.l.b16 %v246
      %v327 = vunpack.c.l.b16 %v247
      %v328 = vunpack.c.l.b16 %v248
      %v329 = vunpack.c.l.b16 %v249
      %v330 = vunpack.c.l.b16 %v250
      %v331 = vunpack.c.l.b16 %v251
      %v332 = vunpack.c.l.b16 %v252
      %v333 = vunpack.c.l.b16 %v253
      %v334 = vunpack.c.l.b16 %v254
      %v335 = vunpack.c.l.b16 %v255
      %v336 = vunpack.c.l.b16 %v256
      %v337 = vunpack.c.l.b16 %v257
      %v338 = vunpack.c.l.b16 %v258
      %v339 = vunpack.c.l.b16 %v259
      %v340 = vunpack.c.l.b16 %v260
      %v341 = vunpack.c.l.b16 %v261
      %v342 = vunpack.c.l.b16 %v262
      %v343 = vpack.c.b16 %v312, %v311
      %v344 = vpack.c.b16 %v314, %v313
      %v345 = vpack.c.b16 %v316, %v315
      %v346 = vpack.c.b16 %v318, %v317
      %v347 = vpack.c.b16 %v320, %v319
      %v348 = vpack.c.b16 %v322, %v321
      %v349 = vpack.c.b16 %v324, %v323
      %v350 = vpack.c.b16 %v326, %v325
      %v351 = vpack.c.b16 %v328, %v327
      %v352 = vpack.c.b16 %v330, %v329
      %v353 = vpack.c.b16 %v332, %v331
      %v354 = vpack.c.b16 %v334, %v333
      %v355 = vpack.c.b16 %v336, %v335
      %v356 = vpack.c.b16 %v338, %v337
      %v357 = vpack.c.b16 %v340, %v339
      %v358 = vpack.c.b16 %v342, %v341
      %v391 = vunpack.c.l.b16 %v263
      %v392 = vunpack.c.l.b16 %v264
      %v393 = vunpack.c.l.b16 %v265
      %v394 = vunpack.c.l.b16 %v266
      %v395 = vunpack.c.l.b16 %v267
      %v396 = vunpack.c.l.b16 %v268
      %v397 = vunpack.c.l.b16 %v269
      %v398 = vunpack.c.l.b16 %v270
      %v399 = vunpack.c.l.b16 %v271
      %v400 = vunpack.c.l.b16 %v272
      %v401 = vunpack.c.l.b16 %v273
      %v402 = vunpack.c.l.b16 %v274
      %v403 = vunpack.c.l.b16 %v275
      %v404 = vunpack.c.l.b16 %v276
      %v405 = vunpack.c.l.b16 %v277
      %v406 = vunpack.c.l.b16 %v278
      %v407 = vpack.c.b16 %v392, %v391
      %v408 = vpack.c.b16 %v394, %v393
      %v409 = vpack.c.b16 %v396, %v395
      %v410 = vpack.c.b16 %v398, %v397
      %v411 = vpack.c.b16 %v400, %v399
      %v412 = vpack.c.b16 %v402, %v401
      %v413 = vpack.c.b16 %v404, %v403
      %v414 = vpack.c.b16 %v406, %v405
      %423 = vmatpush.bf16.msra.mxu0 %v414
      %424 = vmatpush.bf16.msra.mxu0 %v413
      %425 = vmatpush.bf16.msra.mxu0 %v412
      %426 = vmatpush.bf16.msra.mxu0 %v411
      %427 = vmatpush.bf16.msra.mxu0 %v410
      %428 = vmatpush.bf16.msra.mxu0 %v409
      %429 = vmatpush.bf16.msra.mxu0 %v408
      %430 = vmatpush.bf16.msra.mxu0 %v407
      %431 = vmatmul.bf16.gmra.mxu0 %v343
      %v432 = vpop.f32.mrf.mxu0
      %v433 = vadd.f32 0.0, %v432
      %v434 = vpop.f32.mrf.mxu0
      %v435 = vadd.f32 0.0, %v434
      %436 = vmatmul.bf16.gmra.mxu0 %v344
      %v437 = vpop.f32.mrf.mxu0
      %v438 = vadd.f32 0.0, %v437
      %v439 = vpop.f32.mrf.mxu0
      %v440 = vadd.f32 0.0, %v439
      %441 = vmatmul.bf16.gmra.mxu0 %v345
      %v442 = vpop.f32.mrf.mxu0
      %v443 = vadd.f32 0.0, %v442
      %v444 = vpop.f32.mrf.mxu0
      %v445 = vadd.f32 0.0, %v444
      %446 = vmatmul.bf16.gmra.mxu0 %v346
      %v447 = vpop.f32.mrf.mxu0
      %v448 = vadd.f32 0.0, %v447
      %v449 = vpop.f32.mrf.mxu0
      %v450 = vadd.f32 0.0, %v449
      %451 = vmatmul.bf16.gmra.mxu0 %v347
      %v452 = vpop.f32.mrf.mxu0
      %v453 = vadd.f32 0.0, %v452
      %v454 = vpop.f32.mrf.mxu0
      %v455 = vadd.f32 0.0, %v454
      %456 = vmatmul.bf16.gmra.mxu0 %v348
      %v457 = vpop.f32.mrf.mxu0
      %v458 = vadd.f32 0.0, %v457
      %v459 = vpop.f32.mrf.mxu0
      %v460 = vadd.f32 0.0, %v459
      %461 = vmatmul.bf16.gmra.mxu0 %v349
      %v462 = vpop.f32.mrf.mxu0
      %v463 = vadd.f32 0.0, %v462
      %v464 = vpop.f32.mrf.mxu0
      %v465 = vadd.f32 0.0, %v464
      %466 = vmatmul.bf16.gmra.mxu0 %v350
      %v467 = vpop.f32.mrf.mxu0
      %v468 = vadd.f32 0.0, %v467
      %v469 = vpop.f32.mrf.mxu0
      %v470 = vadd.f32 0.0, %v469
      %471 = vmatmul.bf16.gmra.mxu0 %v351
      %v472 = vpop.f32.mrf.mxu0
      %v473 = vadd.f32 0.0, %v472
      %v474 = vpop.f32.mrf.mxu0
      %v475 = vadd.f32 0.0, %v474
      %476 = vmatmul.bf16.gmra.mxu0 %v352
      %v477 = vpop.f32.mrf.mxu0
      %v478 = vadd.f32 0.0, %v477
      %v479 = vpop.f32.mrf.mxu0
      %v480 = vadd.f32 0.0, %v479
      %481 = vmatmul.bf16.gmra.mxu0 %v353
      %v482 = vpop.f32.mrf.mxu0
      %v483 = vadd.f32 0.0, %v482
      %v484 = vpop.f32.mrf.mxu0
      %v485 = vadd.f32 0.0, %v484
      %486 = vmatmul.bf16.gmra.mxu0 %v354
      %v487 = vpop.f32.mrf.mxu0
      %v488 = vadd.f32 0.0, %v487
      %v489 = vpop.f32.mrf.mxu0
      %v490 = vadd.f32 0.0, %v489
      %491 = vmatmul.bf16.gmra.mxu0 %v355
      %v492 = vpop.f32.mrf.mxu0
      %v493 = vadd.f32 0.0, %v492
      %v494 = vpop.f32.mrf.mxu0
      %v495 = vadd.f32 0.0, %v494
      %496 = vmatmul.bf16.gmra.mxu0 %v356
      %v497 = vpop.f32.mrf.mxu0
      %v498 = vadd.f32 0.0, %v497
      %v499 = vpop.f32.mrf.mxu0
      %v500 = vadd.f32 0.0, %v499
      %501 = vmatmul.bf16.gmra.mxu0 %v357
      %v502 = vpop.f32.mrf.mxu0
      %v503 = vadd.f32 0.0, %v502
      %v504 = vpop.f32.mrf.mxu0
      %v505 = vadd.f32 0.0, %v504
      %506 = vmatmul.bf16.gmra.mxu0 %v358
      %v507 = vpop.f32.mrf.mxu0
      %v508 = vadd.f32 0.0, %v507
      %v509 = vpop.f32.mrf.mxu0
      %v510 = vadd.f32 0.0, %v509
      %511 = vdwg.mxu0
      %v512 = vpack.c.bf16 %v433, %v433
      %v513 = vpack.c.bf16 %v435, %v435
      %v514 = vpack.c.bf16 %v438, %v438
      %v515 = vpack.c.bf16 %v440, %v440
      %v516 = vpack.c.bf16 %v443, %v443
      %v517 = vpack.c.bf16 %v445, %v445
      %v518 = vpack.c.bf16 %v448, %v448
      %v519 = vpack.c.bf16 %v450, %v450
      %v520 = vpack.c.bf16 %v453, %v453
      %v521 = vpack.c.bf16 %v455, %v455
      %v522 = vpack.c.bf16 %v458, %v458
      %v523 = vpack.c.bf16 %v460, %v460
      %v524 = vpack.c.bf16 %v463, %v463
      %v525 = vpack.c.bf16 %v465, %v465
      %v526 = vpack.c.bf16 %v468, %v468
      %v527 = vpack.c.bf16 %v470, %v470
      %v528 = vpack.c.bf16 %v473, %v473
      %v529 = vpack.c.bf16 %v475, %v475
      %v530 = vpack.c.bf16 %v478, %v478
      %v531 = vpack.c.bf16 %v480, %v480
      %v532 = vpack.c.bf16 %v483, %v483
      %v533 = vpack.c.bf16 %v485, %v485
      %v534 = vpack.c.bf16 %v488, %v488
      %v535 = vpack.c.bf16 %v490, %v490
      %v536 = vpack.c.bf16 %v493, %v493
      %v537 = vpack.c.bf16 %v495, %v495
      %v538 = vpack.c.bf16 %v498, %v498
      %v539 = vpack.c.bf16 %v500, %v500
      %v540 = vpack.c.bf16 %v503, %v503
      %v541 = vpack.c.bf16 %v505, %v505
      %v542 = vpack.c.bf16 %v508, %v508
      %v543 = vpack.c.bf16 %v510, %v510
      %544 = vst [vmem:[%s220] sm:$0xf] %v512
      %545 = vst [vmem:[%s220 + $0x4] sm:$0xf] %v513
      %546 = vst [vmem:[%s220 + $0x8] sm:$0xf] %v514
      %547 = vst [vmem:[%s220 + $0xc] sm:$0xf] %v515
      %548 = vst [vmem:[%s220 + $0x10] sm:$0xf] %v516
      %549 = vst [vmem:[%s220 + $0x14] sm:$0xf] %v517
      %550 = vst [vmem:[%s220 + $0x18] sm:$0xf] %v518
      %551 = vst [vmem:[%s220 + $0x1c] sm:$0xf] %v519
      %552 = vst [vmem:[%s220 + $0x20] sm:$0xf] %v520
      %553 = vst [vmem:[%s220 + $0x24] sm:$0xf] %v521
      %554 = vst [vmem:[%s220 + $0x28] sm:$0xf] %v522
      %555 = vst [vmem:[%s220 + $0x2c] sm:$0xf] %v523
      %556 = vst [vmem:[%s220 + $0x30] sm:$0xf] %v524
      %557 = vst [vmem:[%s220 + $0x34] sm:$0xf] %v525
      %558 = vst [vmem:[%s220 + $0x38] sm:$0xf] %v526
      %559 = vst [vmem:[%s220 + $0x3c] sm:$0xf] %v527
      %560 = vst [vmem:[%s220 + $0x40] sm:$0xf] %v528
      %561 = vst [vmem:[%s220 + $0x44] sm:$0xf] %v529
      %562 = vst [vmem:[%s220 + $0x48] sm:$0xf] %v530
      %563 = vst [vmem:[%s220 + $0x4c] sm:$0xf] %v531
      %564 = vst [vmem:[%s220 + $0x50] sm:$0xf] %v532
      %565 = vst [vmem:[%s220 + $0x54] sm:$0xf] %v533
      %566 = vst [vmem:[%s220 + $0x58] sm:$0xf] %v534
      %567 = vst [vmem:[%s220 + $0x5c] sm:$0xf] %v535
      %568 = vst [vmem:[%s220 + $0x60] sm:$0xf] %v536
      %569 = vst [vmem:[%s220 + $0x64] sm:$0xf] %v537
      %570 = vst [vmem:[%s220 + $0x68] sm:$0xf] %v538
      %571 = vst [vmem:[%s220 + $0x6c] sm:$0xf] %v539
      %572 = vst [vmem:[%s220 + $0x70] sm:$0xf] %v540
      %573 = vst [vmem:[%s220 + $0x74] sm:$0xf] %v541
      %574 = vst [vmem:[%s220 + $0x78] sm:$0xf] %v542
      %575 = vst [vmem:[%s220 + $0x7c] sm:$0xf] %v543
      %v576 = vunpack.c.l.bf16 %v512
      %v577 = vunpack.c.l.bf16 %v513
      %v578 = vunpack.c.l.bf16 %v514
      %v579 = vunpack.c.l.bf16 %v515
      %v580 = vunpack.c.l.bf16 %v516
      %v581 = vunpack.c.l.bf16 %v517
      %v582 = vunpack.c.l.bf16 %v518
      %v583 = vunpack.c.l.bf16 %v519
      %v584 = vunpack.c.l.bf16 %v520
      %v585 = vunpack.c.l.bf16 %v521
      %v586 = vunpack.c.l.bf16 %v522
      %v587 = vunpack.c.l.bf16 %v523
      %v588 = vunpack.c.l.bf16 %v524
      %v589 = vunpack.c.l.bf16 %v525
      %v590 = vunpack.c.l.bf16 %v526
      %v591 = vunpack.c.l.bf16 %v527
      %v592 = vunpack.c.l.bf16 %v528
      %v593 = vunpack.c.l.bf16 %v529
      %v594 = vunpack.c.l.bf16 %v530
      %v595 = vunpack.c.l.bf16 %v531
      %v596 = vunpack.c.l.bf16 %v532
      %v597 = vunpack.c.l.bf16 %v533
      %v598 = vunpack.c.l.bf16 %v534
      %v599 = vunpack.c.l.bf16 %v535
      %v600 = vunpack.c.l.bf16 %v536
      %v601 = vunpack.c.l.bf16 %v537
      %v602 = vunpack.c.l.bf16 %v538
      %v603 = vunpack.c.l.bf16 %v539
      %v604 = vunpack.c.l.bf16 %v540
      %v605 = vunpack.c.l.bf16 %v541
      %v606 = vunpack.c.l.bf16 %v542
      %v607 = vunpack.c.l.bf16 %v543
      %v608 = vld [vmem:[%s225] sm:$0x1]
      %v609 = vadd.f32 %v576, %v577
      %v610 = vadd.f32 %v609, %v578
      %v611 = vadd.f32 %v610, %v579
      %v612 = vadd.f32 %v611, %v580
      %v613 = vadd.f32 %v612, %v581
      %v614 = vadd.f32 %v613, %v582
      %v615 = vadd.f32 %v614, %v583
      %v616 = vadd.f32 %v615, %v584
      %v617 = vadd.f32 %v616, %v585
      %v618 = vadd.f32 %v617, %v586
      %v619 = vadd.f32 %v618, %v587
      %v620 = vadd.f32 %v619, %v588
      %v621 = vadd.f32 %v620, %v589
      %v622 = vadd.f32 %v621, %v590
      %v623 = vadd.f32 %v622, %v591
      %v624 = vadd.f32 %v623, %v592
      %v625 = vadd.f32 %v624, %v593
      %v626 = vadd.f32 %v625, %v594
      %v627 = vadd.f32 %v626, %v595
      %v628 = vadd.f32 %v627, %v596
      %v629 = vadd.f32 %v628, %v597
      %v630 = vadd.f32 %v629, %v598
      %v631 = vadd.f32 %v630, %v599
      %v632 = vadd.f32 %v631, %v600
      %v633 = vadd.f32 %v632, %v601
      %v634 = vadd.f32 %v633, %v602
      %v635 = vadd.f32 %v634, %v603
      %v636 = vadd.f32 %v635, %v604
      %v637 = vadd.f32 %v636, %v605
      %v638 = vadd.f32 %v637, %v606
      %v639 = vadd.f32 %v638, %v607
      %v640 = vrot.slane %v639, 4
      %v641 = vadd.f32 %v639, %v640
      %v642 = vrot.slane %v641, 2
      %v643 = vadd.f32 %v641, %v642
      %v644 = vrot.slane %v643, 1
      %v645 = vadd.f32 %v643, %v644
      %v646 = vadd.f32 %v608, %v645
      %647 = vst [vmem:[%s225] sm:$0x1] %v646
      %v648 = vld [vmem:[%s225 + $0x1] sm:$0x1]
      %v649 = vmul.f32 %v576, %v576
      %v650 = vmul.f32 %v577, %v577
      %v651 = vmul.f32 %v578, %v578
      %v652 = vmul.f32 %v579, %v579
      %v653 = vmul.f32 %v580, %v580
      %v654 = vmul.f32 %v581, %v581
      %v655 = vmul.f32 %v582, %v582
      %v656 = vmul.f32 %v583, %v583
      %v657 = vmul.f32 %v584, %v584
      %v658 = vmul.f32 %v585, %v585
      %v659 = vmul.f32 %v586, %v586
      %v660 = vmul.f32 %v587, %v587
      %v661 = vmul.f32 %v588, %v588
      %v662 = vmul.f32 %v589, %v589
      %v663 = vmul.f32 %v590, %v590
      %v664 = vmul.f32 %v591, %v591
      %v665 = vmul.f32 %v592, %v592
      %v666 = vmul.f32 %v593, %v593
      %v667 = vmul.f32 %v594, %v594
      %v668 = vmul.f32 %v595, %v595
      %v669 = vmul.f32 %v596, %v596
      %v670 = vmul.f32 %v597, %v597
      %v671 = vmul.f32 %v598, %v598
      %v672 = vmul.f32 %v599, %v599
      %v673 = vmul.f32 %v600, %v600
      %v674 = vmul.f32 %v601, %v601
      %v675 = vmul.f32 %v602, %v602
      %v676 = vmul.f32 %v603, %v603
      %v677 = vmul.f32 %v604, %v604
      %v678 = vmul.f32 %v605, %v605
      %v679 = vmul.f32 %v606, %v606
      %v680 = vmul.f32 %v607, %v607
      %v681 = vadd.f32 %v649, %v650
      %v682 = vadd.f32 %v681, %v651
      %v683 = vadd.f32 %v682, %v652
      %v684 = vadd.f32 %v683, %v653
      %v685 = vadd.f32 %v684, %v654
      %v686 = vadd.f32 %v685, %v655
      %v687 = vadd.f32 %v686, %v656
      %v688 = vadd.f32 %v687, %v657
      %v689 = vadd.f32 %v688, %v658
      %v690 = vadd.f32 %v689, %v659
      %v691 = vadd.f32 %v690, %v660
      %v692 = vadd.f32 %v691, %v661
      %v693 = vadd.f32 %v692, %v662
      %v694 = vadd.f32 %v693, %v663
      %v695 = vadd.f32 %v694, %v664
      %v696 = vadd.f32 %v695, %v665
      %v697 = vadd.f32 %v696, %v666
      %v698 = vadd.f32 %v697, %v667
      %v699 = vadd.f32 %v698, %v668
      %v700 = vadd.f32 %v699, %v669
      %v701 = vadd.f32 %v700, %v670
      %v702 = vadd.f32 %v701, %v671
      %v703 = vadd.f32 %v702, %v672
      %v704 = vadd.f32 %v703, %v673
      %v705 = vadd.f32 %v704, %v674
      %v706 = vadd.f32 %v705, %v675
      %v707 = vadd.f32 %v706, %v676
      %v708 = vadd.f32 %v707, %v677
      %v709 = vadd.f32 %v708, %v678
      %v710 = vadd.f32 %v709, %v679
      %v711 = vadd.f32 %v710, %v680
      %v712 = vrot.slane %v711, 4
      %v713 = vadd.f32 %v711, %v712
      %v714 = vrot.slane %v713, 2
      %v715 = vadd.f32 %v713, %v714
      %v716 = vrot.slane %v715, 1
      %v717 = vadd.f32 %v715, %v716
      %v718 = vadd.f32 %v648, %v717
      %719 = vst [vmem:[%s225 + $0x1] sm:$0x1] %v718
      %s720 = smul.u32 16, %s20
      %p721 = scmp.lt.s32.totalorder %s19, 1
      %s722 = scalar_select %p721, %s19, 1
      %p723 = scmp.lt.s32.totalorder %s720, 15
      %s724 = scalar_select %p723, %s720, 15
      %s725 = smul.addr %s724, 2
      %s726 = smul.addr %s722, 32
      %s727 = sadd.s32 %s725, %s726
      %s728 = smul.addr %s727, 4
      %s729 = scalar_lea.vmem %s2, %s728
      %p730 = scmp.lt.s32.totalorder %s19, 1
      %s731 = scalar_select %p730, %s19, 1
      %s732 = smul.addr %s731, 8
      %s733 = scalar_lea.vmem %s3, %s732
      // Predicated region
      $region33: #{bottleneck_forward.4} parent=27 // pred_check
        %p734 = pneg %p96
      $region34: #{bottleneck_forward.4} parent=27 // pred_check_branch
        %736 = sbr.rel (%p734) target = $region36
      $region35: #{bottleneck_forward.4} parent=27 // pred_region
        %s737 = smul.u32 16, %s20
      $region36: #{bottleneck_forward.4} parent=27 // pred_fallthru
        _
      // Predicated region
      $region37: #{bottleneck_forward.4} parent=27 // pred_check
        %p738 = pneg %p122
      $region38: #{bottleneck_forward.4} parent=27 // pred_check_branch
        %740 = sbr.rel (%p738) target = $region40
      $region39: #{bottleneck_forward.4} parent=27 // pred_region
        _
      $region40: #{bottleneck_forward.4} parent=27 // pred_fallthru
        _
    $region28: #{bottleneck_forward.4} parent=5 // pred_fallthru
      _
    %p741 = scmp.le.s32.totalorder 2, %s10
    // Predicated region
    $region41: #{bottleneck_forward.4} parent=5 // pred_check
      %p742 = pneg %p741
    $region42: #{bottleneck_forward.4} parent=5 // pred_check_branch
      %744 = sbr.rel (%p742) target = $region44
    $region43: #{bottleneck_forward.4} parent=5 // pred_region
      %s745 = ssub.s32 %s10, 2
      // Predicated region
      $region45: #{bottleneck_forward.4} parent=43 // pred_check
        %p746 = pneg %p102
      $region46: #{bottleneck_forward.4} parent=43 // pred_check_branch
        %748 = sbr.rel (%p746) target = $region48
      $region47: #{bottleneck_forward.4} parent=43 // pred_region
        %s749 = smul.u32 16, %s22
        %p750 = scmp.lt.s32.totalorder %s21, 1
        %s751 = scalar_select %p750, %s21, 1
        %p752 = scmp.lt.s32.totalorder %s749, 15
        %s753 = scalar_select %p752, %s749, 15
        %s754 = smul.addr %s753, 2
        %s755 = smul.addr %s751, 32
        %s756 = sadd.s32 %s754, %s755
        %s757 = smul.addr %s756, 4
        %s758 = scalar_lea.vmem %s2, %s757
      $region48: #{bottleneck_forward.4} parent=43 // pred_fallthru
        _
      // Predicated region
      $region49: #{bottleneck_forward.4} parent=43 // pred_check
        %p759 = pneg %p128
      $region50: #{bottleneck_forward.4} parent=43 // pred_check_branch
        %761 = sbr.rel (%p759) target = $region52
      $region51: #{bottleneck_forward.4} parent=43 // pred_region
        %p762 = scmp.lt.s32.totalorder %s21, 1
        %s763 = scalar_select %p762, %s21, 1
        %s764 = smul.addr %s763, 8
        %s765 = scalar_lea.vmem %s3, %s764
      $region52: #{bottleneck_forward.4} parent=43 // pred_fallthru
        _
    $region44: #{bottleneck_forward.4} parent=5 // pred_fallthru
      _
  $region6: #{bottleneck_forward.4} parent=0 // loop_footer
    %s14 = sadd.s32 1, %s10
  $region7: #{bottleneck_forward.4} parent=0 // loop_footer_branch
    %9 = sbr.rel target = $region3
  $region8: #{bottleneck_forward.4} parent=0 // loop_exit
    _

// kernel: bottleneck_forward.6
$region0: #{bottleneck_forward.6}
  #allocation0 [shape = 'u32[]', space=smem, size = 0x4, offset = 0x4, fixed_abs, tag = 'smem constant byte address 0x4 - core index']
  #allocation1 [shape = 'u32[72,128]{1,0:T(1,128)}', space=vmem, size = 0x9000, scoped, tag = 'internal scratch']
  %s0 = inlined_call_operand.vmem [shape: bf16[2,8,8,128], index: 0, kind: input, shape index: {}]
  %s1 = inlined_call_operand.vmem [shape: bf16[2,8,8,128], index: 1, kind: input, shape index: {}]
  %s2 = inlined_call_operand.vmem [shape: f32[2,8,128], index: 2, kind: input, shape index: {}]
  %s3 = inlined_call_operand.vmem [shape: f32[8,128], index: 3, kind: input, shape index: {}]
  %s4 = inlined_call_operand.vmem [shape: bf16[128,128], index: 4, kind: input, shape index: {}]
  %s5 = inlined_call_operand.vmem [shape: bf16[128,128], index: 5, kind: input, shape index: {}]
  %s6 = inlined_call_operand.vmem [shape: bf16[2,8,8,128], index: 6, kind: output, shape index: {0}]
  %s7 = inlined_call_operand.vmem [shape: bf16[2,8,8,128], index: 7, kind: output, shape index: {1}]
  %s8 = inlined_call_operand.vmem [shape: f32[2,8,128], index: 8, kind: output, shape index: {2}]
  %s9 = inlined_call_operand.vmem [shape: f32[2,8,128], index: 9, kind: output, shape index: {3}]
  %10 = xla_tuple %s6, %s7, %s8, %s9
  %s11 = sld [smem:[#allocation0]]
  $region85: #{bottleneck_forward.6} parent=0
    _
  %s13 = ssub.s32 1, %s11
  %s14 = scalar_select 0, %s13, %s11
  loop: start=0, step=1, limit=4
  $region2: #{bottleneck_forward.6} parent=0 // loop_pre_header
    _
  $region3: #{bottleneck_forward.6} parent=0 // loop_header
    %s16 = sphi 0, %s20
    %p17 = scmp.ge.s32.totalorder %s16, 4
    %s23 = sphi 0, %s35
    %s24 = sphi 0, %s31
    %s25 = sphi 0, %s23
    %s26 = sphi 0, %s24
    %s27 = sphi 0, %s25
    %s28 = sphi 0, %s26
    %s40 = sphi 0, %s42
    %s43 = sphi 0, %s40
    %s44 = sphi 0, %s43
    %s60 = sphi 0, %s44
    %s68 = sphi 0, %s70
    %s71 = sphi 0, %s68
    %s72 = sphi 0, %s71
    %s88 = sphi 0, %s72
    %s92 = sphi 0, %s92
    %s94 = sphi 0, %s92
    %s95 = sphi 0, %s94
    %s109 = sphi 0, %s95
    %s113 = sphi 0, %s113
    %s115 = sphi 0, %s113
    %s116 = sphi 0, %s115
    %s130 = sphi 0, %s116
    %s134 = sphi 0, %s134
    %s136 = sphi 0, %s134
    %s137 = sphi 0, %s136
    %s151 = sphi 0, %s137
    %s155 = sphi 0, %s155
    %s157 = sphi 0, %s155
    %s158 = sphi 0, %s157
    %s172 = sphi 0, %s158
    %s180 = sphi 0, %s182
    %s183 = sphi 0, %s180
    %s184 = sphi 0, %s183
    %s200 = sphi 0, %s184
    %s208 = sphi 0, %s210
    %s211 = sphi 0, %s208
    %s212 = sphi 0, %s211
    %s228 = sphi 0, %s212
    %s234 = sphi 0, %s236
    %s237 = sphi 0, %s234
    %s238 = sphi 0, %s237
    %s254 = sphi 0, %s238
    %s260 = sphi 0, %s262
    %s263 = sphi 0, %s260
    %s264 = sphi 0, %s263
    %s280 = sphi 0, %s264
  $region4: #{bottleneck_forward.6} parent=0 // loop_header_branch
    %19 = sbr.rel (%p17) target = $region8
  $region5: #{bottleneck_forward.6} parent=0 // loop_body
    %s21 = ssub.s32 %s16, 1
    %s22 = ssub.s32 %s16, 2
    %s29 = sadd.s32 1, %s24
    %p30 = scmp.ge.s32.totalorder %s29, 1
    %s31 = scalar_select %p30, 0, %s29
    %s32 = sadd.s32 1, %s23
    %s33 = scalar_select %p30, %s32, %s23
    %p34 = scmp.ge.s32.totalorder %s33, 2
    %s35 = scalar_select %p34, 0, %s33
    %s36 = ssub.s32 %s23, %s35
    %s37 = ssub.s32 %s24, %s31
    %s38 = sor.u32 %s36, %s37
    %p39 = scmp.eq.s32.totalorder %s38, 0
    %s41 = sadd.s32 %s40, 1
    %s42 = scalar_select %p39, %s40, %s41
    %p45 = pneg %p39
    %p46 = scmp.eq.s32.totalorder %s16, 1
    %p47 = por %p45, %p46
    %p48 = scmp.ne.s32.totalorder %s40, %s43
    %p49 = scmp.eq.s32.totalorder %s16, 0
    %p50 = por %p48, %p49
    %p51 = scmp.ne.s32.totalorder %s40, %s43
    %p52 = scmp.eq.s32.totalorder %s21, 1
    %p53 = por %p51, %p52
    %p54 = scmp.ne.s32.totalorder %s43, %s44
    %p55 = scmp.eq.s32.totalorder %s21, 0
    %p56 = por %p54, %p55
    %p57 = scmp.ne.s32.totalorder %s43, %s44
    %p58 = scmp.eq.s32.totalorder %s22, 1
    %p59 = por %p57, %p58
    %p61 = scmp.ne.s32.totalorder %s44, %s60
    %p62 = scmp.eq.s32.totalorder %s22, 0
    %p63 = por %p61, %p62
    %s64 = ssub.s32 %s23, %s35
    %s65 = ssub.s32 %s24, %s31
    %s66 = sor.u32 %s64, %s65
    %p67 = scmp.eq.s32.totalorder %s66, 0
    %s69 = sadd.s32 %s68, 1
    %s70 = scalar_select %p67, %s68, %s69
    %p73 = pneg %p67
    %p74 = scmp.eq.s32.totalorder %s16, 1
    %p75 = por %p73, %p74
    %p76 = scmp.ne.s32.totalorder %s68, %s71
    %p77 = scmp.eq.s32.totalorder %s16, 0
    %p78 = por %p76, %p77
    %p79 = scmp.ne.s32.totalorder %s68, %s71
    %p80 = scmp.eq.s32.totalorder %s21, 1
    %p81 = por %p79, %p80
    %p82 = scmp.ne.s32.totalorder %s71, %s72
    %p83 = scmp.eq.s32.totalorder %s21, 0
    %p84 = por %p82, %p83
    %p85 = scmp.ne.s32.totalorder %s71, %s72
    %p86 = scmp.eq.s32.totalorder %s22, 1
    %p87 = por %p85, %p86
    %p89 = scmp.ne.s32.totalorder %s72, %s88
    %p90 = scmp.eq.s32.totalorder %s22, 0
    %p91 = por %p89, %p90
    %s93 = sadd.s32 %s92, 1
    %p96 = scmp.eq.s32.totalorder %s16, 1
    %p97 = scmp.ne.s32.totalorder %s92, %s94
    %p98 = scmp.eq.s32.totalorder %s16, 0
    %p99 = por %p97, %p98
    %p100 = scmp.ne.s32.totalorder %s92, %s94
    %p101 = scmp.eq.s32.totalorder %s21, 1
    %p102 = por %p100, %p101
    %p103 = scmp.ne.s32.totalorder %s94, %s95
    %p104 = scmp.eq.s32.totalorder %s21, 0
    %p105 = por %p103, %p104
    %p106 = scmp.ne.s32.totalorder %s94, %s95
    %p107 = scmp.eq.s32.totalorder %s22, 1
    %p108 = por %p106, %p107
    %p110 = scmp.ne.s32.totalorder %s95, %s109
    %p111 = scmp.eq.s32.totalorder %s22, 0
    %p112 = por %p110, %p111
    %s114 = sadd.s32 %s113, 1
    %p117 = scmp.eq.s32.totalorder %s16, 1
    %p118 = scmp.ne.s32.totalorder %s113, %s115
    %p119 = scmp.eq.s32.totalorder %s16, 0
    %p120 = por %p118, %p119
    %p121 = scmp.ne.s32.totalorder %s113, %s115
    %p122 = scmp.eq.s32.totalorder %s21, 1
    %p123 = por %p121, %p122
    %p124 = scmp.ne.s32.totalorder %s115, %s116
    %p125 = scmp.eq.s32.totalorder %s21, 0
    %p126 = por %p124, %p125
    %p127 = scmp.ne.s32.totalorder %s115, %s116
    %p128 = scmp.eq.s32.totalorder %s22, 1
    %p129 = por %p127, %p128
    %p131 = scmp.ne.s32.totalorder %s116, %s130
    %p132 = scmp.eq.s32.totalorder %s22, 0
    %p133 = por %p131, %p132
    %s135 = sadd.s32 %s134, 1
    %p138 = scmp.eq.s32.totalorder %s16, 1
    %p139 = scmp.ne.s32.totalorder %s134, %s136
    %p140 = scmp.eq.s32.totalorder %s16, 0
    %p141 = por %p139, %p140
    %p142 = scmp.ne.s32.totalorder %s134, %s136
    %p143 = scmp.eq.s32.totalorder %s21, 1
    %p144 = por %p142, %p143
    %p145 = scmp.ne.s32.totalorder %s136, %s137
    %p146 = scmp.eq.s32.totalorder %s21, 0
    %p147 = por %p145, %p146
    %p148 = scmp.ne.s32.totalorder %s136, %s137
    %p149 = scmp.eq.s32.totalorder %s22, 1
    %p150 = por %p148, %p149
    %p152 = scmp.ne.s32.totalorder %s137, %s151
    %p153 = scmp.eq.s32.totalorder %s22, 0
    %p154 = por %p152, %p153
    %s156 = sadd.s32 %s155, 1
    %p159 = scmp.eq.s32.totalorder %s16, 1
    %p160 = scmp.ne.s32.totalorder %s155, %s157
    %p161 = scmp.eq.s32.totalorder %s16, 0
    %p162 = por %p160, %p161
    %p163 = scmp.ne.s32.totalorder %s155, %s157
    %p164 = scmp.eq.s32.totalorder %s21, 1
    %p165 = por %p163, %p164
    %p166 = scmp.ne.s32.totalorder %s157, %s158
    %p167 = scmp.eq.s32.totalorder %s21, 0
    %p168 = por %p166, %p167
    %p169 = scmp.ne.s32.totalorder %s157, %s158
    %p170 = scmp.eq.s32.totalorder %s22, 1
    %p171 = por %p169, %p170
    %p173 = scmp.ne.s32.totalorder %s158, %s172
    %p174 = scmp.eq.s32.totalorder %s22, 0
    %p175 = por %p173, %p174
    %s176 = ssub.s32 %s23, %s35
    %s177 = ssub.s32 %s24, %s31
    %s178 = sor.u32 %s176, %s177
    %p179 = scmp.eq.s32.totalorder %s178, 0
    %s181 = sadd.s32 %s180, 1
    %s182 = scalar_select %p179, %s180, %s181
    %p185 = pneg %p179
    %p186 = scmp.eq.s32.totalorder %s16, 1
    %p187 = por %p185, %p186
    %p188 = scmp.ne.s32.totalorder %s180, %s183
    %p189 = scmp.eq.s32.totalorder %s16, 0
    %p190 = por %p188, %p189
    %p191 = scmp.ne.s32.totalorder %s180, %s183
    %p192 = scmp.eq.s32.totalorder %s21, 1
    %p193 = por %p191, %p192
    %p194 = scmp.ne.s32.totalorder %s183, %s184
    %p195 = scmp.eq.s32.totalorder %s21, 0
    %p196 = por %p194, %p195
    %p197 = scmp.ne.s32.totalorder %s183, %s184
    %p198 = scmp.eq.s32.totalorder %s22, 1
    %p199 = por %p197, %p198
    %p201 = scmp.ne.s32.totalorder %s184, %s200
    %p202 = scmp.eq.s32.totalorder %s22, 0
    %p203 = por %p201, %p202
    %s204 = ssub.s32 %s23, %s35
    %s205 = ssub.s32 %s24, %s31
    %s206 = sor.u32 %s204, %s205
    %p207 = scmp.eq.s32.totalorder %s206, 0
    %s209 = sadd.s32 %s208, 1
    %s210 = scalar_select %p207, %s208, %s209
    %p213 = pneg %p207
    %p214 = scmp.eq.s32.totalorder %s16, 1
    %p215 = por %p213, %p214
    %p216 = scmp.ne.s32.totalorder %s208, %s211
    %p217 = scmp.eq.s32.totalorder %s16, 0
    %p218 = por %p216, %p217
    %p219 = scmp.ne.s32.totalorder %s208, %s211
    %p220 = scmp.eq.s32.totalorder %s21, 1
    %p221 = por %p219, %p220
    %p222 = scmp.ne.s32.totalorder %s211, %s212
    %p223 = scmp.eq.s32.totalorder %s21, 0
    %p224 = por %p222, %p223
    %p225 = scmp.ne.s32.totalorder %s211, %s212
    %p226 = scmp.eq.s32.totalorder %s22, 1
    %p227 = por %p225, %p226
    %p229 = scmp.ne.s32.totalorder %s212, %s228
    %p230 = scmp.eq.s32.totalorder %s22, 0
    %p231 = por %p229, %p230
    %s232 = ssub.s32 %s23, %s35
    %p233 = scmp.eq.s32.totalorder %s232, 0
    %s235 = sadd.s32 %s234, 1
    %s236 = scalar_select %p233, %s234, %s235
    %p239 = pneg %p233
    %p240 = scmp.eq.s32.totalorder %s16, 1
    %p241 = por %p239, %p240
    %p242 = scmp.ne.s32.totalorder %s234, %s237
    %p243 = scmp.eq.s32.totalorder %s16, 0
    %p244 = por %p242, %p243
    %p245 = scmp.ne.s32.totalorder %s234, %s237
    %p246 = scmp.eq.s32.totalorder %s21, 1
    %p247 = por %p245, %p246
    %p248 = scmp.ne.s32.totalorder %s237, %s238
    %p249 = scmp.eq.s32.totalorder %s21, 0
    %p250 = por %p248, %p249
    %p251 = scmp.ne.s32.totalorder %s237, %s238
    %p252 = scmp.eq.s32.totalorder %s22, 1
    %p253 = por %p251, %p252
    %p255 = scmp.ne.s32.totalorder %s238, %s254
    %p256 = scmp.eq.s32.totalorder %s22, 0
    %p257 = por %p255, %p256
    %s258 = ssub.s32 %s23, %s35
    %p259 = scmp.eq.s32.totalorder %s258, 0
    %s261 = sadd.s32 %s260, 1
    %s262 = scalar_select %p259, %s260, %s261
    %p265 = pneg %p259
    %p266 = scmp.eq.s32.totalorder %s16, 1
    %p267 = por %p265, %p266
    %p268 = scmp.ne.s32.totalorder %s260, %s263
    %p269 = scmp.eq.s32.totalorder %s16, 0
    %p270 = por %p268, %p269
    %p271 = scmp.ne.s32.totalorder %s260, %s263
    %p272 = scmp.eq.s32.totalorder %s21, 1
    %p273 = por %p271, %p272
    %p274 = scmp.ne.s32.totalorder %s263, %s264
    %p275 = scmp.eq.s32.totalorder %s21, 0
    %p276 = por %p274, %p275
    %p277 = scmp.ne.s32.totalorder %s263, %s264
    %p278 = scmp.eq.s32.totalorder %s22, 1
    %p279 = por %p277, %p278
    %p281 = scmp.ne.s32.totalorder %s264, %s280
    %p282 = scmp.eq.s32.totalorder %s22, 0
    %p283 = por %p281, %p282
    %p284 = scmp.le.s32.totalorder 1, %s16
    %p285 = scmp.lt.s32.totalorder %s16, 3
    %p286 = pnand %p284, %p285
    %p287 = pneg %p286
    // Predicated region
    $region9: #{bottleneck_forward.6} parent=5 // pred_check
      _
    $region10: #{bottleneck_forward.6} parent=5 // pred_check_branch
      %289 = sbr.rel (%p286) target = $region12
    $region11: #{bottleneck_forward.6} parent=5 // pred_region
      %s290 = ssub.s32 %s16, 1
      // Predicated region
      $region13: #{bottleneck_forward.6} parent=11 // pred_check
        %p291 = pneg %p105
      $region14: #{bottleneck_forward.6} parent=11 // pred_check_branch
        %293 = sbr.rel (%p291) target = $region16
      $region15: #{bottleneck_forward.6} parent=11 // pred_region
        _
      $region16: #{bottleneck_forward.6} parent=11 // pred_fallthru
        _
      // Predicated region
      $region17: #{bottleneck_forward.6} parent=11 // pred_check
        %p294 = pneg %p126
      $region18: #{bottleneck_forward.6} parent=11 // pred_check_branch
        %296 = sbr.rel (%p294) target = $region20
      $region19: #{bottleneck_forward.6} parent=11 // pred_region
        _
      $region20: #{bottleneck_forward.6} parent=11 // pred_fallthru
        _
      // Predicated region
      $region21: #{bottleneck_forward.6} parent=11 // pred_check
        %p297 = pneg %p147
      $region22: #{bottleneck_forward.6} parent=11 // pred_check_branch
        %299 = sbr.rel (%p297) target = $region24
      $region23: #{bottleneck_forward.6} parent=11 // pred_region
        _
      $region24: #{bottleneck_forward.6} parent=11 // pred_fallthru
        _
      // Predicated region
      $region25: #{bottleneck_forward.6} parent=11 // pred_check
        %p300 = pneg %p168
      $region26: #{bottleneck_forward.6} parent=11 // pred_check_branch
        %302 = sbr.rel (%p300) target = $region28
      $region27: #{bottleneck_forward.6} parent=11 // pred_region
        _
      $region28: #{bottleneck_forward.6} parent=11 // pred_fallthru
        _
    $region12: #{bottleneck_forward.6} parent=5 // pred_fallthru
      _
    %p303 = scmp.lt.s32.totalorder %s16, 2
    // Predicated region
    $region29: #{bottleneck_forward.6} parent=5 // pred_check
      %p304 = pneg %p303
    $region30: #{bottleneck_forward.6} parent=5 // pred_check_branch
      %306 = sbr.rel (%p304) target = $region32
    $region31: #{bottleneck_forward.6} parent=5 // pred_region
      // Predicated region
      $region33: #{bottleneck_forward.6} parent=31 // pred_check
        %p307 = pneg %p50
      $region34: #{bottleneck_forward.6} parent=31 // pred_check_branch
        %309 = sbr.rel (%p307) target = $region36
      $region35: #{bottleneck_forward.6} parent=31 // pred_region
        %s310 = smul.u32 8, %s24
        %p311 = scmp.lt.s32.totalorder %s23, 1
        %s312 = scalar_select %p311, %s23, 1
        %p313 = scmp.lt.s32.totalorder %s310, 7
        %s314 = scalar_select %p313, %s310, 7
        %s315 = smul.addr %s312, 8
        %s316 = sadd.s32 %s314, %s315
        %s317 = smul.addr %s316, 4
        %s318 = scalar_lea.vmem %s0, %s317
        %s319 = smul.u32 8, %s24
      $region36: #{bottleneck_forward.6} parent=31 // pred_fallthru
        _
      // Predicated region
      $region37: #{bottleneck_forward.6} parent=31 // pred_check
        %p320 = pneg %p78
      $region38: #{bottleneck_forward.6} parent=31 // pred_check_branch
        %322 = sbr.rel (%p320) target = $region40
      $region39: #{bottleneck_forward.6} parent=31 // pred_region
        %s323 = smul.u32 8, %s24
        %p324 = scmp.lt.s32.totalorder %s23, 1
        %s325 = scalar_select %p324, %s23, 1
        %p326 = scmp.lt.s32.totalorder %s323, 7
        %s327 = scalar_select %p326, %s323, 7
        %s328 = smul.addr %s325, 8
        %s329 = sadd.s32 %s327, %s328
        %s330 = smul.addr %s329, 4
        %s331 = scalar_lea.vmem %s1, %s330
        %s332 = smul.u32 8, %s24
      $region40: #{bottleneck_forward.6} parent=31 // pred_fallthru
        _
    $region32: #{bottleneck_forward.6} parent=5 // pred_fallthru
      _
    %p333 = scmp.le.s32.totalorder 1, %s16
    %p334 = scmp.lt.s32.totalorder %s16, 3
    %p335 = pnand %p333, %p334
    %p336 = pneg %p335
    // Predicated region
    $region41: #{bottleneck_forward.6} parent=5 // pred_check
      _
    $region42: #{bottleneck_forward.6} parent=5 // pred_check_branch
      %338 = sbr.rel (%p335) target = $region44
    $region43: #{bottleneck_forward.6} parent=5 // pred_region
      %s339 = ssub.s32 %s16, 1
      %s340 = smul.u32 8, %s26
      %p341 = scmp.lt.s32.totalorder %s25, 1
      %s342 = scalar_select %p341, %s25, 1
      %p343 = scmp.lt.s32.totalorder %s340, 7
      %s344 = scalar_select %p343, %s340, 7
      %s345 = smul.addr %s342, 8
      %s346 = sadd.s32 %s344, %s345
      %s347 = smul.addr %s346, 4
      %s348 = scalar_lea.vmem %s0, %s347
      %p349 = pneg %p56
      %p350 = pneg %p53
      %s351 = smul.u32 8, %s26
      %p352 = scmp.lt.s32.totalorder %s25, 1
      %s353 = scalar_select %p352, %s25, 1
      %p354 = scmp.lt.s32.totalorder %s351, 7
      %s355 = scalar_select %p354, %s351, 7
      %s356 = smul.addr %s353, 8
      %s357 = sadd.s32 %s355, %s356
      %s358 = smul.addr %s357, 4
      %s359 = scalar_lea.vmem %s1, %s358
      %p360 = pneg %p84
      %p361 = pneg %p81
      %p362 = pneg %p105
      %p363 = pneg %p102
      %p364 = pneg %p126
      %p365 = pneg %p123
      %p366 = pneg %p147
      %p367 = pneg %p144
      %p368 = pneg %p168
      %p369 = pneg %p165
      %p370 = pneg %p196
      %p371 = pneg %p193
      %s372 = smul.u32 8, %s26
      %p373 = scmp.lt.s32.totalorder %s25, 1
      %s374 = scalar_select %p373, %s25, 1
      %p375 = scmp.lt.s32.totalorder %s372, 7
      %s376 = scalar_select %p375, %s372, 7
      %s377 = smul.addr %s374, 8
      %s378 = sadd.s32 %s376, %s377
      %s379 = smul.addr %s378, 4
      %s380 = scalar_lea.vmem %s6, %s379
      %p381 = pneg %p224
      %p382 = pneg %p221
      %s383 = smul.u32 8, %s26
      %p384 = scmp.lt.s32.totalorder %s25, 1
      %s385 = scalar_select %p384, %s25, 1
      %p386 = scmp.lt.s32.totalorder %s383, 7
      %s387 = scalar_select %p386, %s383, 7
      %s388 = smul.addr %s385, 8
      %s389 = sadd.s32 %s387, %s388
      %s390 = smul.addr %s389, 4
      %s391 = scalar_lea.vmem %s7, %s390
      %p392 = pneg %p250
      %p393 = pneg %p247
      %p394 = scmp.lt.s32.totalorder %s25, 1
      %s395 = scalar_select %p394, %s25, 1
      %s396 = smul.addr %s395, 8
      %s397 = scalar_lea.vmem %s8, %s396
      %p398 = pneg %p276
      %p399 = pneg %p273
      %p400 = scmp.lt.s32.totalorder %s25, 1
      %s401 = scalar_select %p400, %s25, 1
      %s402 = smul.addr %s401, 8
      %s403 = scalar_lea.vmem %s9, %s402
      %s404 = smul.u32 8, %s26
      %p405 = scmp.lt.s32.totalorder %s25, 1
      %s406 = scalar_select %p405, %s25, 1
      %p407 = scmp.lt.s32.totalorder %s404, 7
      %s408 = scalar_select %p407, %s404, 7
      %s409 = smul.addr %s406, 8
      %s410 = sadd.s32 %s408, %s409
      %s411 = smul.addr %s410, 4
      %s412 = scalar_lea.vmem %s0, %s411
      %s413 = smul.u32 8, %s26
      %s414 = smul.u32 8, %s26
      %p415 = scmp.lt.s32.totalorder %s25, 1
      %s416 = scalar_select %p415, %s25, 1
      %p417 = scmp.lt.s32.totalorder %s414, 7
      %s418 = scalar_select %p417, %s414, 7
      %s419 = smul.addr %s416, 8
      %s420 = sadd.s32 %s418, %s419
      %s421 = smul.addr %s420, 4
      %s422 = scalar_lea.vmem %s1, %s421
      %s423 = smul.u32 8, %s26
      %s424 = smul.u32 8, %s26
      %p425 = scmp.lt.s32.totalorder %s25, 1
      %s426 = scalar_select %p425, %s25, 1
      %p427 = scmp.lt.s32.totalorder %s424, 7
      %s428 = scalar_select %p427, %s424, 7
      %s429 = smul.addr %s426, 8
      %s430 = sadd.s32 %s428, %s429
      %s431 = smul.addr %s430, 4
      %s432 = scalar_lea.vmem %s6, %s431
      %s433 = smul.u32 8, %s26
      %s434 = smul.u32 8, %s26
      %p435 = scmp.lt.s32.totalorder %s25, 1
      %s436 = scalar_select %p435, %s25, 1
      %p437 = scmp.lt.s32.totalorder %s434, 7
      %s438 = scalar_select %p437, %s434, 7
      %s439 = smul.addr %s436, 8
      %s440 = sadd.s32 %s438, %s439
      %s441 = smul.addr %s440, 4
      %s442 = scalar_lea.vmem %s7, %s441
      %s443 = smul.u32 8, %s26
      %p444 = scmp.lt.s32.totalorder %s25, 1
      %s445 = scalar_select %p444, %s25, 1
      %s446 = smul.addr %s445, 8
      %s447 = scalar_lea.vmem %s8, %s446
      %p448 = scmp.lt.s32.totalorder %s25, 1
      %s449 = scalar_select %p448, %s25, 1
      %s450 = smul.addr %s449, 8
      %s451 = scalar_lea.vmem %s9, %s450
      %p452 = scmp.eq.s32.totalorder %s26, 0
      // Predicated region
      $region45: #{bottleneck_forward.6} parent=43 // pred_check
        %p453 = pneg %p452
      $region46: #{bottleneck_forward.6} parent=43 // pred_check_branch
        %455 = sbr.rel (%p453) target = $region48
      $region47: #{bottleneck_forward.6} parent=43 // pred_region
        %456 = vst [vmem:[%s447] sm:$0xff] 0.0
        %457 = vst [vmem:[%s451] sm:$0xff] 0.0
      $region48: #{bottleneck_forward.6} parent=43 // pred_fallthru
        _
      %v458 = vld [vmem:[%s2] sm:$0xff]
      %v459 = vld [vmem:[%s2 + $0x8] sm:$0xff]
      %v460 = vld [vmem:[%s3] sm:$0xff]
      %v461 = vadd.f32 %v458, %v459
      %v462 = vmul.f32 %v461, 0.0078125
      %v463 = vmul.f32 %v462, %v462
      %v465 = vrot.slane %v463, 7
      %v467 = vsub.f32 %v462, %v465
      %v468 = vmax.f32 %v467, 0.0
      %v469 = vadd.f32 %v468, 1e-05
      %v470 = vrsqrt.pop %v469
      %v471 = vmul.f32 %v470, %v469
      %v472 = vmul.f32 %v471, %v470
      %v473 = vmul.f32 0.5, %v472
      %v474 = vsub.f32 1.5, %v473
      %v475 = vmul.f32 %v470, %v474
      %vm476 = vweird.f32 %v469
      %vm477 = vweird.f32 %v470
      %vm478 = vmor %vm476, %vm477
      %v479 = vsel %vm478, %v470, %v475
      %v481 = vrot.slane %v460, 7
      %v483 = vmul.f32 %v479, %v481
      %v485 = vrot.slane %v483, 1
      %v487 = vmul.f32 %v462, %v485
      %v489 = vrot.slane %v487, 7
      %v491 = vsub.f32 %v460, %v489
      %v492 = vld [vmem:[%s412] sm:$0xf]
      %v493 = vld [vmem:[%s412 + $0x4] sm:$0xf]
      %v494 = vld [vmem:[%s412 + $0x8] sm:$0xf]
      %v495 = vld [vmem:[%s412 + $0xc] sm:$0xf]
      %v496 = vld [vmem:[%s412 + $0x10] sm:$0xf]
      %v497 = vld [vmem:[%s412 + $0x14] sm:$0xf]
      %v498 = vld [vmem:[%s412 + $0x18] sm:$0xf]
      %v499 = vld [vmem:[%s412 + $0x1c] sm:$0xf]
      %v500 = vunpack.c.l.bf16 %v492
      %v501 = vunpack.c.l.bf16 %v493
      %v502 = vunpack.c.l.bf16 %v494
      %v503 = vunpack.c.l.bf16 %v495
      %v504 = vunpack.c.l.bf16 %v496
      %v505 = vunpack.c.l.bf16 %v497
      %v506 = vunpack.c.l.bf16 %v498
      %v507 = vunpack.c.l.bf16 %v499
      %v508 = vperm.slane %v483, 1
      %v509 = vmul.f32 %v500, %v508
      %v510 = vmul.f32 %v501, %v508
      %v511 = vmul.f32 %v502, %v508
      %v512 = vmul.f32 %v503, %v508
      %v513 = vmul.f32 %v504, %v508
      %v514 = vmul.f32 %v505, %v508
      %v515 = vmul.f32 %v506, %v508
      %v516 = vmul.f32 %v507, %v508
      %v517 = vperm.slane %v491, 1
      %v518 = vadd.f32 %v509, %v517
      %v519 = vadd.f32 %v510, %v517
      %v520 = vadd.f32 %v511, %v517
      %v521 = vadd.f32 %v512, %v517
      %v522 = vadd.f32 %v513, %v517
      %v523 = vadd.f32 %v514, %v517
      %v524 = vadd.f32 %v515, %v517
      %v525 = vadd.f32 %v516, %v517
      %v526 = vpack.c.bf16 %v519, %v518
      %v527 = vpack.c.bf16 %v521, %v520
      %v528 = vpack.c.bf16 %v523, %v522
      %v529 = vpack.c.bf16 %v525, %v524
      %v530 = vld [vmem:[%s4] sm:$0xf]
      %v531 = vld [vmem:[%s4 + $0x4] sm:$0xf]
      %v532 = vld [vmem:[%s4 + $0x8] sm:$0xf]
      %v533 = vld [vmem:[%s4 + $0xc] sm:$0xf]
      %v534 = vld [vmem:[%s4 + $0x10] sm:$0xf]
      %v535 = vld [vmem:[%s4 + $0x14] sm:$0xf]
      %v536 = vld [vmem:[%s4 + $0x18] sm:$0xf]
      %v537 = vld [vmem:[%s4 + $0x1c] sm:$0xf]
      %v538 = vld [vmem:[%s4 + $0x20] sm:$0xf]
      %v539 = vld [vmem:[%s4 + $0x24] sm:$0xf]
      %v540 = vld [vmem:[%s4 + $0x28] sm:$0xf]
      %v541 = vld [vmem:[%s4 + $0x2c] sm:$0xf]
      %v542 = vld [vmem:[%s4 + $0x30] sm:$0xf]
      %v543 = vld [vmem:[%s4 + $0x34] sm:$0xf]
      %v544 = vld [vmem:[%s4 + $0x38] sm:$0xf]
      %v545 = vld [vmem:[%s4 + $0x3c] sm:$0xf]
      %v562 = vunpack.c.l.b16 %v530
      %v563 = vunpack.c.l.b16 %v531
      %v564 = vunpack.c.l.b16 %v532
      %v565 = vunpack.c.l.b16 %v533
      %v566 = vunpack.c.l.b16 %v534
      %v567 = vunpack.c.l.b16 %v535
      %v568 = vunpack.c.l.b16 %v536
      %v569 = vunpack.c.l.b16 %v537
      %v570 = vunpack.c.l.b16 %v538
      %v571 = vunpack.c.l.b16 %v539
      %v572 = vunpack.c.l.b16 %v540
      %v573 = vunpack.c.l.b16 %v541
      %v574 = vunpack.c.l.b16 %v542
      %v575 = vunpack.c.l.b16 %v543
      %v576 = vunpack.c.l.b16 %v544
      %v577 = vunpack.c.l.b16 %v545
      %v578 = vpack.c.b16 %v563, %v562
      %v579 = vpack.c.b16 %v565, %v564
      %v580 = vpack.c.b16 %v567, %v566
      %v581 = vpack.c.b16 %v569, %v568
      %v582 = vpack.c.b16 %v571, %v570
      %v583 = vpack.c.b16 %v573, %v572
      %v584 = vpack.c.b16 %v575, %v574
      %v585 = vpack.c.b16 %v577, %v576
      %594 = vmatpush.bf16.msra.mxu0 %v585
      %595 = vmatpush.bf16.msra.mxu0 %v584
      %596 = vmatpush.bf16.msra.mxu0 %v583
      %597 = vmatpush.bf16.msra.mxu0 %v582
      %598 = vmatpush.bf16.msra.mxu0 %v581
      %599 = vmatpush.bf16.msra.mxu0 %v580
      %600 = vmatpush.bf16.msra.mxu0 %v579
      %601 = vmatpush.bf16.msra.mxu0 %v578
      %602 = vmatmul.bf16.gmra.mxu0 %v526
      %v603 = vpop.f32.mrf.mxu0
      %v604 = vadd.f32 0.0, %v603
      %v605 = vpop.f32.mrf.mxu0
      %v606 = vadd.f32 0.0, %v605
      %607 = vmatmul.bf16.gmra.mxu0 %v527
      %v608 = vpop.f32.mrf.mxu0
      %v609 = vadd.f32 0.0, %v608
      %v610 = vpop.f32.mrf.mxu0
      %v611 = vadd.f32 0.0, %v610
      %612 = vmatmul.bf16.gmra.mxu0 %v528
      %v613 = vpop.f32.mrf.mxu0
      %v614 = vadd.f32 0.0, %v613
      %v615 = vpop.f32.mrf.mxu0
      %v616 = vadd.f32 0.0, %v615
      %617 = vmatmul.bf16.gmra.mxu0 %v529
      %v618 = vpop.f32.mrf.mxu0
      %v619 = vadd.f32 0.0, %v618
      %v620 = vpop.f32.mrf.mxu0
      %v621 = vadd.f32 0.0, %v620
      %622 = vdwg.mxu0
      %v623 = vpack.c.bf16 %v604, %v604
      %v624 = vpack.c.bf16 %v606, %v606
      %v625 = vpack.c.bf16 %v609, %v609
      %v626 = vpack.c.bf16 %v611, %v611
      %v627 = vpack.c.bf16 %v614, %v614
      %v628 = vpack.c.bf16 %v616, %v616
      %v629 = vpack.c.bf16 %v619, %v619
      %v630 = vpack.c.bf16 %v621, %v621
      %631 = vst [vmem:[%s432] sm:$0xf] %v623
      %632 = vst [vmem:[%s432 + $0x4] sm:$0xf] %v624
      %633 = vst [vmem:[%s432 + $0x8] sm:$0xf] %v625
      %634 = vst [vmem:[%s432 + $0xc] sm:$0xf] %v626
      %635 = vst [vmem:[%s432 + $0x10] sm:$0xf] %v627
      %636 = vst [vmem:[%s432 + $0x14] sm:$0xf] %v628
      %637 = vst [vmem:[%s432 + $0x18] sm:$0xf] %v629
      %638 = vst [vmem:[%s432 + $0x1c] sm:$0xf] %v630
      %v639 = vunpack.c.l.bf16 %v623
      %v640 = vunpack.c.l.bf16 %v624
      %v641 = vunpack.c.l.bf16 %v625
      %v642 = vunpack.c.l.bf16 %v626
      %v643 = vunpack.c.l.bf16 %v627
      %v644 = vunpack.c.l.bf16 %v628
      %v645 = vunpack.c.l.bf16 %v629
      %v646 = vunpack.c.l.bf16 %v630
      %v647 = vld [vmem:[%s447] sm:$0x1]
      %v648 = vadd.f32 %v639, %v640
      %v649 = vadd.f32 %v648, %v641
      %v650 = vadd.f32 %v649, %v642
      %v651 = vadd.f32 %v650, %v643
      %v652 = vadd.f32 %v651, %v644
      %v653 = vadd.f32 %v652, %v645
      %v654 = vadd.f32 %v653, %v646
      %v655 = vrot.slane %v654, 4
      %v656 = vadd.f32 %v654, %v655
      %v657 = vrot.slane %v656, 2
      %v658 = vadd.f32 %v656, %v657
      %v659 = vrot.slane %v658, 1
      %v660 = vadd.f32 %v658, %v659
      %v661 = vadd.f32 %v647, %v660
      %662 = vst [vmem:[%s447] sm:$0x1] %v661
      %v663 = vld [vmem:[%s447 + $0x1] sm:$0x1]
      %v664 = vmul.f32 %v639, %v639
      %v665 = vmul.f32 %v640, %v640
      %v666 = vmul.f32 %v641, %v641
      %v667 = vmul.f32 %v642, %v642
      %v668 = vmul.f32 %v643, %v643
      %v669 = vmul.f32 %v644, %v644
      %v670 = vmul.f32 %v645, %v645
      %v671 = vmul.f32 %v646, %v646
      %v672 = vadd.f32 %v664, %v665
      %v673 = vadd.f32 %v672, %v666
      %v674 = vadd.f32 %v673, %v667
      %v675 = vadd.f32 %v674, %v668
      %v676 = vadd.f32 %v675, %v669
      %v677 = vadd.f32 %v676, %v670
      %v678 = vadd.f32 %v677, %v671
      %v679 = vrot.slane %v678, 4
      %v680 = vadd.f32 %v678, %v679
      %v681 = vrot.slane %v680, 2
      %v682 = vadd.f32 %v680, %v681
      %v683 = vrot.slane %v682, 1
      %v684 = vadd.f32 %v682, %v683
      %v685 = vadd.f32 %v663, %v684
      %686 = vst [vmem:[%s447 + $0x1] sm:$0x1] %v685
      %v687 = vld [vmem:[%s422] sm:$0xf]
      %v688 = vld [vmem:[%s422 + $0x4] sm:$0xf]
      %v689 = vld [vmem:[%s422 + $0x8] sm:$0xf]
      %v690 = vld [vmem:[%s422 + $0xc] sm:$0xf]
      %v691 = vld [vmem:[%s422 + $0x10] sm:$0xf]
      %v692 = vld [vmem:[%s422 + $0x14] sm:$0xf]
      %v693 = vld [vmem:[%s422 + $0x18] sm:$0xf]
      %v694 = vld [vmem:[%s422 + $0x1c] sm:$0xf]
      %v695 = vld [vmem:[%s5] sm:$0xf]
      %v696 = vld [vmem:[%s5 + $0x4] sm:$0xf]
      %v697 = vld [vmem:[%s5 + $0x8] sm:$0xf]
      %v698 = vld [vmem:[%s5 + $0xc] sm:$0xf]
      %v699 = vld [vmem:[%s5 + $0x10] sm:$0xf]
      %v700 = vld [vmem:[%s5 + $0x14] sm:$0xf]
      %v701 = vld [vmem:[%s5 + $0x18] sm:$0xf]
      %v702 = vld [vmem:[%s5 + $0x1c] sm:$0xf]
      %v703 = vld [vmem:[%s5 + $0x20] sm:$0xf]
      %v704 = vld [vmem:[%s5 + $0x24] sm:$0xf]
      %v705 = vld [vmem:[%s5 + $0x28] sm:$0xf]
      %v706 = vld [vmem:[%s5 + $0x2c] sm:$0xf]
      %v707 = vld [vmem:[%s5 + $0x30] sm:$0xf]
      %v708 = vld [vmem:[%s5 + $0x34] sm:$0xf]
      %v709 = vld [vmem:[%s5 + $0x38] sm:$0xf]
      %v710 = vld [vmem:[%s5 + $0x3c] sm:$0xf]
      %v719 = vunpack.c.l.b16 %v687
      %v720 = vunpack.c.l.b16 %v688
      %v721 = vunpack.c.l.b16 %v689
      %v722 = vunpack.c.l.b16 %v690
      %v723 = vunpack.c.l.b16 %v691
      %v724 = vunpack.c.l.b16 %v692
      %v725 = vunpack.c.l.b16 %v693
      %v726 = vunpack.c.l.b16 %v694
      %v727 = vpack.c.b16 %v720, %v719
      %v728 = vpack.c.b16 %v722, %v721
      %v729 = vpack.c.b16 %v724, %v723
      %v730 = vpack.c.b16 %v726, %v725
      %v751 = vunpack.c.l.b16 %v695
      %v752 = vunpack.c.l.b16 %v696
      %v753 = vunpack.c.l.b16 %v697
      %v754 = vunpack.c.l.b16 %v698
      %v755 = vunpack.c.l.b16 %v699
      %v756 = vunpack.c.l.b16 %v700
      %v757 = vunpack.c.l.b16 %v701
      %v758 = vunpack.c.l.b16 %v702
      %v759 = vunpack.c.l.b16 %v703
      %v760 = vunpack.c.l.b16 %v704
      %v761 = vunpack.c.l.b16 %v705
      %v762 = vunpack.c.l.b16 %v706
      %v763 = vunpack.c.l.b16 %v707
      %v764 = vunpack.c.l.b16 %v708
      %v765 = vunpack.c.l.b16 %v709
      %v766 = vunpack.c.l.b16 %v710
      %v767 = vpack.c.b16 %v752, %v751
      %v768 = vpack.c.b16 %v754, %v753
      %v769 = vpack.c.b16 %v756, %v755
      %v770 = vpack.c.b16 %v758, %v757
      %v771 = vpack.c.b16 %v760, %v759
      %v772 = vpack.c.b16 %v762, %v761
      %v773 = vpack.c.b16 %v764, %v763
      %v774 = vpack.c.b16 %v766, %v765
      %783 = vmatpush.bf16.msra.mxu0 %v774
      %784 = vmatpush.bf16.msra.mxu0 %v773
      %785 = vmatpush.bf16.msra.mxu0 %v772
      %786 = vmatpush.bf16.msra.mxu0 %v771
      %787 = vmatpush.bf16.msra.mxu0 %v770
      %788 = vmatpush.bf16.msra.mxu0 %v769
      %789 = vmatpush.bf16.msra.mxu0 %v768
      %790 = vmatpush.bf16.msra.mxu0 %v767
      %791 = vmatmul.bf16.gmra.mxu0 %v727
      %v792 = vpop.f32.mrf.mxu0
      %v793 = vadd.f32 0.0, %v792
      %v794 = vpop.f32.mrf.mxu0
      %v795 = vadd.f32 0.0, %v794
      %796 = vmatmul.bf16.gmra.mxu0 %v728
      %v797 = vpop.f32.mrf.mxu0
      %v798 = vadd.f32 0.0, %v797
      %v799 = vpop.f32.mrf.mxu0
      %v800 = vadd.f32 0.0, %v799
      %801 = vmatmul.bf16.gmra.mxu0 %v729
      %v802 = vpop.f32.mrf.mxu0
      %v803 = vadd.f32 0.0, %v802
      %v804 = vpop.f32.mrf.mxu0
      %v805 = vadd.f32 0.0, %v804
      %806 = vmatmul.bf16.gmra.mxu0 %v730
      %v807 = vpop.f32.mrf.mxu0
      %v808 = vadd.f32 0.0, %v807
      %v809 = vpop.f32.mrf.mxu0
      %v810 = vadd.f32 0.0, %v809
      %811 = vdwg.mxu0
      %v812 = vpack.c.bf16 %v793, %v793
      %v813 = vpack.c.bf16 %v795, %v795
      %v814 = vpack.c.bf16 %v798, %v798
      %v815 = vpack.c.bf16 %v800, %v800
      %v816 = vpack.c.bf16 %v803, %v803
      %v817 = vpack.c.bf16 %v805, %v805
      %v818 = vpack.c.bf16 %v808, %v808
      %v819 = vpack.c.bf16 %v810, %v810
      %820 = vst [vmem:[%s442] sm:$0xf] %v812
      %821 = vst [vmem:[%s442 + $0x4] sm:$0xf] %v813
      %822 = vst [vmem:[%s442 + $0x8] sm:$0xf] %v814
      %823 = vst [vmem:[%s442 + $0xc] sm:$0xf] %v815
      %824 = vst [vmem:[%s442 + $0x10] sm:$0xf] %v816
      %825 = vst [vmem:[%s442 + $0x14] sm:$0xf] %v817
      %826 = vst [vmem:[%s442 + $0x18] sm:$0xf] %v818
      %827 = vst [vmem:[%s442 + $0x1c] sm:$0xf] %v819
      %v828 = vunpack.c.l.bf16 %v812
      %v829 = vunpack.c.l.bf16 %v813
      %v830 = vunpack.c.l.bf16 %v814
      %v831 = vunpack.c.l.bf16 %v815
      %v832 = vunpack.c.l.bf16 %v816
      %v833 = vunpack.c.l.bf16 %v817
      %v834 = vunpack.c.l.bf16 %v818
      %v835 = vunpack.c.l.bf16 %v819
      %v836 = vld [vmem:[%s451] sm:$0x1]
      %v837 = vadd.f32 %v828, %v829
      %v838 = vadd.f32 %v837, %v830
      %v839 = vadd.f32 %v838, %v831
      %v840 = vadd.f32 %v839, %v832
      %v841 = vadd.f32 %v840, %v833
      %v842 = vadd.f32 %v841, %v834
      %v843 = vadd.f32 %v842, %v835
      %v844 = vrot.slane %v843, 4
      %v845 = vadd.f32 %v843, %v844
      %v846 = vrot.slane %v845, 2
      %v847 = vadd.f32 %v845, %v846
      %v848 = vrot.slane %v847, 1
      %v849 = vadd.f32 %v847, %v848
      %v850 = vadd.f32 %v836, %v849
      %851 = vst [vmem:[%s451] sm:$0x1] %v850
      %v852 = vld [vmem:[%s451 + $0x1] sm:$0x1]
      %v853 = vmul.f32 %v828, %v828
      %v854 = vmul.f32 %v829, %v829
      %v855 = vmul.f32 %v830, %v830
      %v856 = vmul.f32 %v831, %v831
      %v857 = vmul.f32 %v832, %v832
      %v858 = vmul.f32 %v833, %v833
      %v859 = vmul.f32 %v834, %v834
      %v860 = vmul.f32 %v835, %v835
      %v861 = vadd.f32 %v853, %v854
      %v862 = vadd.f32 %v861, %v855
      %v863 = vadd.f32 %v862, %v856
      %v864 = vadd.f32 %v863, %v857
      %v865 = vadd.f32 %v864, %v858
      %v866 = vadd.f32 %v865, %v859
      %v867 = vadd.f32 %v866, %v860
      %v868 = vrot.slane %v867, 4
      %v869 = vadd.f32 %v867, %v868
      %v870 = vrot.slane %v869, 2
      %v871 = vadd.f32 %v869, %v870
      %v872 = vrot.slane %v871, 1
      %v873 = vadd.f32 %v871, %v872
      %v874 = vadd.f32 %v852, %v873
      %875 = vst [vmem:[%s451 + $0x1] sm:$0x1] %v874
      %s876 = smul.u32 8, %s26
      %p877 = scmp.lt.s32.totalorder %s25, 1
      %s878 = scalar_select %p877, %s25, 1
      %p879 = scmp.lt.s32.totalorder %s876, 7
      %s880 = scalar_select %p879, %s876, 7
      %s881 = smul.addr %s878, 8
      %s882 = sadd.s32 %s880, %s881
      %s883 = smul.addr %s882, 4
      %s884 = scalar_lea.vmem %s6, %s883
      %s885 = smul.u32 8, %s26
      %p886 = scmp.lt.s32.totalorder %s25, 1
      %s887 = scalar_select %p886, %s25, 1
      %p888 = scmp.lt.s32.totalorder %s885, 7
      %s889 = scalar_select %p888, %s885, 7
      %s890 = smul.addr %s887, 8
      %s891 = sadd.s32 %s889, %s890
      %s892 = smul.addr %s891, 4
      %s893 = scalar_lea.vmem %s7, %s892
      %p894 = scmp.lt.s32.totalorder %s25, 1
      %s895 = scalar_select %p894, %s25, 1
      %s896 = smul.addr %s895, 8
      %s897 = scalar_lea.vmem %s8, %s896
      %p898 = scmp.lt.s32.totalorder %s25, 1
      %s899 = scalar_select %p898, %s25, 1
      %s900 = smul.addr %s899, 8
      %s901 = scalar_lea.vmem %s9, %s900
      // Predicated region
      $region49: #{bottleneck_forward.6} parent=43 // pred_check
        %p902 = pneg %p193
      $region50: #{bottleneck_forward.6} parent=43 // pred_check_branch
        %904 = sbr.rel (%p902) target = $region52
      $region51: #{bottleneck_forward.6} parent=43 // pred_region
        %s905 = smul.u32 8, %s26
      $region52: #{bottleneck_forward.6} parent=43 // pred_fallthru
        _
      // Predicated region
      $region53: #{bottleneck_forward.6} parent=43 // pred_check
        %p906 = pneg %p221
      $region54: #{bottleneck_forward.6} parent=43 // pred_check_branch
        %908 = sbr.rel (%p906) target = $region56
      $region55: #{bottleneck_forward.6} parent=43 // pred_region
        %s909 = smul.u32 8, %s26
      $region56: #{bottleneck_forward.6} parent=43 // pred_fallthru
        _
      // Predicated region
      $region57: #{bottleneck_forward.6} parent=43 // pred_check
        %p910 = pneg %p247
      $region58: #{bottleneck_forward.6} parent=43 // pred_check_branch
        %912 = sbr.rel (%p910) target = $region60
      $region59: #{bottleneck_forward.6} parent=43 // pred_region
        _
      $region60: #{bottleneck_forward.6} parent=43 // pred_fallthru
        _
      // Predicated region
      $region61: #{bottleneck_forward.6} parent=43 // pred_check
        %p913 = pneg %p273
      $region62: #{bottleneck_forward.6} parent=43 // pred_check_branch
        %915 = sbr.rel (%p913) target = $region64
      $region63: #{bottleneck_forward.6} parent=43 // pred_region
        _
      $region64: #{bottleneck_forward.6} parent=43 // pred_fallthru
        _
    $region44: #{bottleneck_forward.6} parent=5 // pred_fallthru
      _
    %p916 = scmp.le.s32.totalorder 2, %s16
    // Predicated region
    $region65: #{bottleneck_forward.6} parent=5 // pred_check
      %p917 = pneg %p916
    $region66: #{bottleneck_forward.6} parent=5 // pred_check_branch
      %919 = sbr.rel (%p917) target = $region68
    $region67: #{bottleneck_forward.6} parent=5 // pred_region
      %s920 = ssub.s32 %s16, 2
      // Predicated region
      $region69: #{bottleneck_forward.6} parent=67 // pred_check
        %p921 = pneg %p199
      $region70: #{bottleneck_forward.6} parent=67 // pred_check_branch
        %923 = sbr.rel (%p921) target = $region72
      $region71: #{bottleneck_forward.6} parent=67 // pred_region
        %s924 = smul.u32 8, %s28
        %p925 = scmp.lt.s32.totalorder %s27, 1
        %s926 = scalar_select %p925, %s27, 1
        %p927 = scmp.lt.s32.totalorder %s924, 7
        %s928 = scalar_select %p927, %s924, 7
        %s929 = smul.addr %s926, 8
        %s930 = sadd.s32 %s928, %s929
        %s931 = smul.addr %s930, 4
        %s932 = scalar_lea.vmem %s6, %s931
      $region72: #{bottleneck_forward.6} parent=67 // pred_fallthru
        _
      // Predicated region
      $region73: #{bottleneck_forward.6} parent=67 // pred_check
        %p933 = pneg %p227
      $region74: #{bottleneck_forward.6} parent=67 // pred_check_branch
        %935 = sbr.rel (%p933) target = $region76
      $region75: #{bottleneck_forward.6} parent=67 // pred_region
        %s936 = smul.u32 8, %s28
        %p937 = scmp.lt.s32.totalorder %s27, 1
        %s938 = scalar_select %p937, %s27, 1
        %p939 = scmp.lt.s32.totalorder %s936, 7
        %s940 = scalar_select %p939, %s936, 7
        %s941 = smul.addr %s938, 8
        %s942 = sadd.s32 %s940, %s941
        %s943 = smul.addr %s942, 4
        %s944 = scalar_lea.vmem %s7, %s943
      $region76: #{bottleneck_forward.6} parent=67 // pred_fallthru
        _
      // Predicated region
      $region77: #{bottleneck_forward.6} parent=67 // pred_check
        %p945 = pneg %p253
      $region78: #{bottleneck_forward.6} parent=67 // pred_check_branch
        %947 = sbr.rel (%p945) target = $region80
      $region79: #{bottleneck_forward.6} parent=67 // pred_region
        %p948 = scmp.lt.s32.totalorder %s27, 1
        %s949 = scalar_select %p948, %s27, 1
        %s950 = smul.addr %s949, 8
        %s951 = scalar_lea.vmem %s8, %s950
      $region80: #{bottleneck_forward.6} parent=67 // pred_fallthru
        _
      // Predicated region
      $region81: #{bottleneck_forward.6} parent=67 // pred_check
        %p952 = pneg %p279
      $region82: #{bottleneck_forward.6} parent=67 // pred_check_branch
        %954 = sbr.rel (%p952) target = $region84
      $region83: #{bottleneck_forward.6} parent=67 // pred_region
        %p955 = scmp.lt.s32.totalorder %s27, 1
        %s956 = scalar_select %p955, %s27, 1
        %s957 = smul.addr %s956, 8
        %s958 = scalar_lea.vmem %s9, %s957
      $region84: #{bottleneck_forward.6} parent=67 // pred_fallthru
        _
    $region68: #{bottleneck_forward.6} parent=5 // pred_fallthru
      _
  $region6: #{bottleneck_forward.6} parent=0 // loop_footer
    %s20 = sadd.s32 1, %s16
  $region7: #{bottleneck_forward.6} parent=0 // loop_footer_branch
    %15 = sbr.rel target = $region3
  $region8: #{bottleneck_forward.6} parent=0 // loop_exit
    _

// kernel: bottleneck_forward.5
$region0: #{bottleneck_forward.5}
  #allocation0 [shape = 'u32[]', space=smem, size = 0x4, offset = 0x4, fixed_abs, tag = 'smem constant byte address 0x4 - core index']
  #allocation1 [shape = 'u32[72,128]{1,0:T(1,128)}', space=vmem, size = 0x9000, scoped, tag = 'internal scratch']
  #allocation2 [shape = 'f32[24,128]{1,0:T(8,128)}', space=vmem, size = 0x3000, scoped, tag = 'scratch operand']
  %s0 = inlined_call_operand.vmem [shape: bf16[2,16,16,128], index: 0, kind: input, shape index: {}, may-alias: {0,1,2}]
  %s1 = inlined_call_operand.vmem [shape: bf16[2,16,16,128], index: 1, kind: input, shape index: {}, may-alias: {0,1,2}]
  %s2 = inlined_call_operand.vmem [shape: bf16[2,16,16,128], index: 2, kind: input, shape index: {}, may-alias: {0,1,2}]
  %s3 = inlined_call_operand.vmem [shape: f32[2,8,128], index: 3, kind: input, shape index: {}]
  %s4 = inlined_call_operand.vmem [shape: f32[8,128], index: 4, kind: input, shape index: {}]
  %s5 = inlined_call_operand.vmem [shape: bf16[9,128,128], index: 5, kind: input, shape index: {}]
  %s6 = inlined_call_operand.vmem [shape: bf16[2,8,8,128], index: 6, kind: output, shape index: {0}]
  %s7 = inlined_call_operand.vmem [shape: f32[2,8,128], index: 7, kind: output, shape index: {1}]
  %8 = xla_tuple %s6, %s7
  %s9 = sld [smem:[#allocation0]]
  $region69: #{bottleneck_forward.5} parent=0
    _
  %s11 = ssub.s32 1, %s9
  %s12 = scalar_select 0, %s11, %s9
  loop: start=0, step=1, limit=18
  $region2: #{bottleneck_forward.5} parent=0 // loop_pre_header
    _
  $region3: #{bottleneck_forward.5} parent=0 // loop_header
    %s14 = sphi 0, %s18
    %p15 = scmp.ge.s32.totalorder %s14, 18
    %s21 = sphi 0, %s33
    %s22 = sphi 0, %s29
    %s23 = sphi 0, %s21
    %s24 = sphi 0, %s22
    %s25 = sphi 0, %s23
    %s26 = sphi 0, %s24
    %s50 = sphi 0, %s52
    %s53 = sphi 0, %s50
    %s54 = sphi 0, %s53
    %s70 = sphi 0, %s54
    %s88 = sphi 0, %s90
    %s91 = sphi 0, %s88
    %s92 = sphi 0, %s91
    %s108 = sphi 0, %s92
    %s128 = sphi 0, %s130
    %s131 = sphi 0, %s128
    %s132 = sphi 0, %s131
    %s148 = sphi 0, %s132
    %s152 = sphi 0, %s152
    %s154 = sphi 0, %s152
    %s155 = sphi 0, %s154
    %s169 = sphi 0, %s155
    %s173 = sphi 0, %s173
    %s175 = sphi 0, %s173
    %s176 = sphi 0, %s175
    %s190 = sphi 0, %s176
    %s194 = sphi 0, %s194
    %s196 = sphi 0, %s194
    %s197 = sphi 0, %s196
    %s211 = sphi 0, %s197
    %s219 = sphi 0, %s221
    %s222 = sphi 0, %s219
    %s223 = sphi 0, %s222
    %s239 = sphi 0, %s223
    %s245 = sphi 0, %s247
    %s248 = sphi 0, %s245
    %s249 = sphi 0, %s248
    %s265 = sphi 0, %s249
  $region4: #{bottleneck_forward.5} parent=0 // loop_header_branch
    %17 = sbr.rel (%p15) target = $region8
  $region5: #{bottleneck_forward.5} parent=0 // loop_body
    %s19 = ssub.s32 %s14, 1
    %s20 = ssub.s32 %s14, 2
    %s27 = sadd.s32 1, %s22
    %p28 = scmp.ge.s32.totalorder %s27, 8
    %s29 = scalar_select %p28, 0, %s27
    %s30 = sadd.s32 1, %s21
    %s31 = scalar_select %p28, %s30, %s21
    %p32 = scmp.ge.s32.totalorder %s31, 2
    %s33 = scalar_select %p32, 0, %s31
    %s34 = smul.u32 %s22, 2
    %s35 = sadd.s32 %s34, 4294967295
    %p36 = scmp.gt.s32.totalorder %s35, 0
    %s37 = scalar_select %p36, %s35, 0
    %p38 = scmp.lt.s32.totalorder %s37, 15
    %s39 = scalar_select %p38, %s37, 15
    %s40 = smul.u32 %s29, 2
    %s41 = sadd.s32 %s40, 4294967295
    %p42 = scmp.gt.s32.totalorder %s41, 0
    %s43 = scalar_select %p42, %s41, 0
    %p44 = scmp.lt.s32.totalorder %s43, 15
    %s45 = scalar_select %p44, %s43, 15
    %s46 = ssub.s32 %s21, %s33
    %s47 = ssub.s32 %s39, %s45
    %s48 = sor.u32 %s46, %s47
    %p49 = scmp.eq.s32.totalorder %s48, 0
    %s51 = sadd.s32 %s50, 1
    %s52 = scalar_select %p49, %s50, %s51
    %p55 = pneg %p49
    %p56 = scmp.eq.s32.totalorder %s14, 15
    %p57 = por %p55, %p56
    %p58 = scmp.ne.s32.totalorder %s50, %s53
    %p59 = scmp.eq.s32.totalorder %s14, 0
    %p60 = por %p58, %p59
    %p61 = scmp.ne.s32.totalorder %s50, %s53
    %p62 = scmp.eq.s32.totalorder %s19, 15
    %p63 = por %p61, %p62
    %p64 = scmp.ne.s32.totalorder %s53, %s54
    %p65 = scmp.eq.s32.totalorder %s19, 0
    %p66 = por %p64, %p65
    %p67 = scmp.ne.s32.totalorder %s53, %s54
    %p68 = scmp.eq.s32.totalorder %s20, 15
    %p69 = por %p67, %p68
    %p71 = scmp.ne.s32.totalorder %s54, %s70
    %p72 = scmp.eq.s32.totalorder %s20, 0
    %p73 = por %p71, %p72
    %s74 = smul.u32 %s22, 2
    %p75 = scmp.gt.s32.totalorder %s74, 0
    %s76 = scalar_select %p75, %s74, 0
    %p77 = scmp.lt.s32.totalorder %s76, 15
    %s78 = scalar_select %p77, %s76, 15
    %s79 = smul.u32 %s29, 2
    %p80 = scmp.gt.s32.totalorder %s79, 0
    %s81 = scalar_select %p80, %s79, 0
    %p82 = scmp.lt.s32.totalorder %s81, 15
    %s83 = scalar_select %p82, %s81, 15
    %s84 = ssub.s32 %s21, %s33
    %s85 = ssub.s32 %s78, %s83
    %s86 = sor.u32 %s84, %s85
    %p87 = scmp.eq.s32.totalorder %s86, 0
    %s89 = sadd.s32 %s88, 1
    %s90 = scalar_select %p87, %s88, %s89
    %p93 = pneg %p87
    %p94 = scmp.eq.s32.totalorder %s14, 15
    %p95 = por %p93, %p94
    %p96 = scmp.ne.s32.totalorder %s88, %s91
    %p97 = scmp.eq.s32.totalorder %s14, 0
    %p98 = por %p96, %p97
    %p99 = scmp.ne.s32.totalorder %s88, %s91
    %p100 = scmp.eq.s32.totalorder %s19, 15
    %p101 = por %p99, %p100
    %p102 = scmp.ne.s32.totalorder %s91, %s92
    %p103 = scmp.eq.s32.totalorder %s19, 0
    %p104 = por %p102, %p103
    %p105 = scmp.ne.s32.totalorder %s91, %s92
    %p106 = scmp.eq.s32.totalorder %s20, 15
    %p107 = por %p105, %p106
    %p109 = scmp.ne.s32.totalorder %s92, %s108
    %p110 = scmp.eq.s32.totalorder %s20, 0
    %p111 = por %p109, %p110
    %s112 = smul.u32 %s22, 2
    %s113 = sadd.s32 %s112, 1
    %p114 = scmp.gt.s32.totalorder %s113, 0
    %s115 = scalar_select %p114, %s113, 0
    %p116 = scmp.lt.s32.totalorder %s115, 15
    %s117 = scalar_select %p116, %s115, 15
    %s118 = smul.u32 %s29, 2
    %s119 = sadd.s32 %s118, 1
    %p120 = scmp.gt.s32.totalorder %s119, 0
    %s121 = scalar_select %p120, %s119, 0
    %p122 = scmp.lt.s32.totalorder %s121, 15
    %s123 = scalar_select %p122, %s121, 15
    %s124 = ssub.s32 %s21, %s33
    %s125 = ssub.s32 %s117, %s123
    %s126 = sor.u32 %s124, %s125
    %p127 = scmp.eq.s32.totalorder %s126, 0
    %s129 = sadd.s32 %s128, 1
    %s130 = scalar_select %p127, %s128, %s129
    %p133 = pneg %p127
    %p134 = scmp.eq.s32.totalorder %s14, 15
    %p135 = por %p133, %p134
    %p136 = scmp.ne.s32.totalorder %s128, %s131
    %p137 = scmp.eq.s32.totalorder %s14, 0
    %p138 = por %p136, %p137
    %p139 = scmp.ne.s32.totalorder %s128, %s131
    %p140 = scmp.eq.s32.totalorder %s19, 15
    %p141 = por %p139, %p140
    %p142 = scmp.ne.s32.totalorder %s131, %s132
    %p143 = scmp.eq.s32.totalorder %s19, 0
    %p144 = por %p142, %p143
    %p145 = scmp.ne.s32.totalorder %s131, %s132
    %p146 = scmp.eq.s32.totalorder %s20, 15
    %p147 = por %p145, %p146
    %p149 = scmp.ne.s32.totalorder %s132, %s148
    %p150 = scmp.eq.s32.totalorder %s20, 0
    %p151 = por %p149, %p150
    %s153 = sadd.s32 %s152, 1
    %p156 = scmp.eq.s32.totalorder %s14, 15
    %p157 = scmp.ne.s32.totalorder %s152, %s154
    %p158 = scmp.eq.s32.totalorder %s14, 0
    %p159 = por %p157, %p158
    %p160 = scmp.ne.s32.totalorder %s152, %s154
    %p161 = scmp.eq.s32.totalorder %s19, 15
    %p162 = por %p160, %p161
    %p163 = scmp.ne.s32.totalorder %s154, %s155
    %p164 = scmp.eq.s32.totalorder %s19, 0
    %p165 = por %p163, %p164
    %p166 = scmp.ne.s32.totalorder %s154, %s155
    %p167 = scmp.eq.s32.totalorder %s20, 15
    %p168 = por %p166, %p167
    %p170 = scmp.ne.s32.totalorder %s155, %s169
    %p171 = scmp.eq.s32.totalorder %s20, 0
    %p172 = por %p170, %p171
    %s174 = sadd.s32 %s173, 1
    %p177 = scmp.eq.s32.totalorder %s14, 15
    %p178 = scmp.ne.s32.totalorder %s173, %s175
    %p179 = scmp.eq.s32.totalorder %s14, 0
    %p180 = por %p178, %p179
    %p181 = scmp.ne.s32.totalorder %s173, %s175
    %p182 = scmp.eq.s32.totalorder %s19, 15
    %p183 = por %p181, %p182
    %p184 = scmp.ne.s32.totalorder %s175, %s176
    %p185 = scmp.eq.s32.totalorder %s19, 0
    %p186 = por %p184, %p185
    %p187 = scmp.ne.s32.totalorder %s175, %s176
    %p188 = scmp.eq.s32.totalorder %s20, 15
    %p189 = por %p187, %p188
    %p191 = scmp.ne.s32.totalorder %s176, %s190
    %p192 = scmp.eq.s32.totalorder %s20, 0
    %p193 = por %p191, %p192
    %s195 = sadd.s32 %s194, 1
    %p198 = scmp.eq.s32.totalorder %s14, 15
    %p199 = scmp.ne.s32.totalorder %s194, %s196
    %p200 = scmp.eq.s32.totalorder %s14, 0
    %p201 = por %p199, %p200
    %p202 = scmp.ne.s32.totalorder %s194, %s196
    %p203 = scmp.eq.s32.totalorder %s19, 15
    %p204 = por %p202, %p203
    %p205 = scmp.ne.s32.totalorder %s196, %s197
    %p206 = scmp.eq.s32.totalorder %s19, 0
    %p207 = por %p205, %p206
    %p208 = scmp.ne.s32.totalorder %s196, %s197
    %p209 = scmp.eq.s32.totalorder %s20, 15
    %p210 = por %p208, %p209
    %p212 = scmp.ne.s32.totalorder %s197, %s211
    %p213 = scmp.eq.s32.totalorder %s20, 0
    %p214 = por %p212, %p213
    %s215 = ssub.s32 %s21, %s33
    %s216 = ssub.s32 %s22, %s29
    %s217 = sor.u32 %s215, %s216
    %p218 = scmp.eq.s32.totalorder %s217, 0
    %s220 = sadd.s32 %s219, 1
    %s221 = scalar_select %p218, %s219, %s220
    %p224 = pneg %p218
    %p225 = scmp.eq.s32.totalorder %s14, 15
    %p226 = por %p224, %p225
    %p227 = scmp.ne.s32.totalorder %s219, %s222
    %p228 = scmp.eq.s32.totalorder %s14, 0
    %p229 = por %p227, %p228
    %p230 = scmp.ne.s32.totalorder %s219, %s222
    %p231 = scmp.eq.s32.totalorder %s19, 15
    %p232 = por %p230, %p231
    %p233 = scmp.ne.s32.totalorder %s222, %s223
    %p234 = scmp.eq.s32.totalorder %s19, 0
    %p235 = por %p233, %p234
    %p236 = scmp.ne.s32.totalorder %s222, %s223
    %p237 = scmp.eq.s32.totalorder %s20, 15
    %p238 = por %p236, %p237
    %p240 = scmp.ne.s32.totalorder %s223, %s239
    %p241 = scmp.eq.s32.totalorder %s20, 0
    %p242 = por %p240, %p241
    %s243 = ssub.s32 %s21, %s33
    %p244 = scmp.eq.s32.totalorder %s243, 0
    %s246 = sadd.s32 %s245, 1
    %s247 = scalar_select %p244, %s245, %s246
    %p250 = pneg %p244
    %p251 = scmp.eq.s32.totalorder %s14, 15
    %p252 = por %p250, %p251
    %p253 = scmp.ne.s32.totalorder %s245, %s248
    %p254 = scmp.eq.s32.totalorder %s14, 0
    %p255 = por %p253, %p254
    %p256 = scmp.ne.s32.totalorder %s245, %s248
    %p257 = scmp.eq.s32.totalorder %s19, 15
    %p258 = por %p256, %p257
    %p259 = scmp.ne.s32.totalorder %s248, %s249
    %p260 = scmp.eq.s32.totalorder %s19, 0
    %p261 = por %p259, %p260
    %p262 = scmp.ne.s32.totalorder %s248, %s249
    %p263 = scmp.eq.s32.totalorder %s20, 15
    %p264 = por %p262, %p263
    %p266 = scmp.ne.s32.totalorder %s249, %s265
    %p267 = scmp.eq.s32.totalorder %s20, 0
    %p268 = por %p266, %p267
    %p269 = scmp.le.s32.totalorder 1, %s14
    %p270 = scmp.lt.s32.totalorder %s14, 17
    %p271 = pnand %p269, %p270
    %p272 = pneg %p271
    // Predicated region
    $region9: #{bottleneck_forward.5} parent=5 // pred_check
      _
    $region10: #{bottleneck_forward.5} parent=5 // pred_check_branch
      %274 = sbr.rel (%p271) target = $region12
    $region11: #{bottleneck_forward.5} parent=5 // pred_region
      %s275 = ssub.s32 %s14, 1
      // Predicated region
      $region13: #{bottleneck_forward.5} parent=11 // pred_check
        %p276 = pneg %p165
      $region14: #{bottleneck_forward.5} parent=11 // pred_check_branch
        %278 = sbr.rel (%p276) target = $region16
      $region15: #{bottleneck_forward.5} parent=11 // pred_region
        _
      $region16: #{bottleneck_forward.5} parent=11 // pred_fallthru
        _
      // Predicated region
      $region17: #{bottleneck_forward.5} parent=11 // pred_check
        %p279 = pneg %p186
      $region18: #{bottleneck_forward.5} parent=11 // pred_check_branch
        %281 = sbr.rel (%p279) target = $region20
      $region19: #{bottleneck_forward.5} parent=11 // pred_region
        _
      $region20: #{bottleneck_forward.5} parent=11 // pred_fallthru
        _
      // Predicated region
      $region21: #{bottleneck_forward.5} parent=11 // pred_check
        %p282 = pneg %p207
      $region22: #{bottleneck_forward.5} parent=11 // pred_check_branch
        %284 = sbr.rel (%p282) target = $region24
      $region23: #{bottleneck_forward.5} parent=11 // pred_region
        _
      $region24: #{bottleneck_forward.5} parent=11 // pred_fallthru
        _
    $region12: #{bottleneck_forward.5} parent=5 // pred_fallthru
      _
    %p285 = scmp.lt.s32.totalorder %s14, 16
    // Predicated region
    $region25: #{bottleneck_forward.5} parent=5 // pred_check
      %p286 = pneg %p285
    $region26: #{bottleneck_forward.5} parent=5 // pred_check_branch
      %288 = sbr.rel (%p286) target = $region28
    $region27: #{bottleneck_forward.5} parent=5 // pred_region
      // Predicated region
      $region29: #{bottleneck_forward.5} parent=27 // pred_check
        %p289 = pneg %p60
      $region30: #{bottleneck_forward.5} parent=27 // pred_check_branch
        %291 = sbr.rel (%p289) target = $region32
      $region31: #{bottleneck_forward.5} parent=27 // pred_region
        %s292 = smul.u32 %s22, 2
        %s293 = sadd.s32 %s292, 4294967295
        %p294 = scmp.gt.s32.totalorder %s293, 0
        %s295 = scalar_select %p294, %s293, 0
        %p296 = scmp.lt.s32.totalorder %s295, 15
        %s297 = scalar_select %p296, %s295, 15
        %p298 = scmp.lt.s32.totalorder %s21, 1
        %s299 = scalar_select %p298, %s21, 1
        %p300 = scmp.lt.s32.totalorder %s297, 15
        %s301 = scalar_select %p300, %s297, 15
        %s302 = smul.addr %s301, 2
        %s303 = smul.addr %s299, 32
        %s304 = sadd.s32 %s302, %s303
        %s305 = smul.addr %s304, 4
        %s306 = scalar_lea.vmem %s0, %s305
        %s307 = smul.u32 %s22, 2
        %s308 = sadd.s32 %s307, 4294967295
        %p309 = scmp.gt.s32.totalorder %s308, 0
        %s310 = scalar_select %p309, %s308, 0
        %p311 = scmp.lt.s32.totalorder %s310, 15
        %s312 = scalar_select %p311, %s310, 15
      $region32: #{bottleneck_forward.5} parent=27 // pred_fallthru
        _
      // Predicated region
      $region33: #{bottleneck_forward.5} parent=27 // pred_check
        %p313 = pneg %p98
      $region34: #{bottleneck_forward.5} parent=27 // pred_check_branch
        %315 = sbr.rel (%p313) target = $region36
      $region35: #{bottleneck_forward.5} parent=27 // pred_region
        %s316 = smul.u32 %s22, 2
        %p317 = scmp.gt.s32.totalorder %s316, 0
        %s318 = scalar_select %p317, %s316, 0
        %p319 = scmp.lt.s32.totalorder %s318, 15
        %s320 = scalar_select %p319, %s318, 15
        %p321 = scmp.lt.s32.totalorder %s21, 1
        %s322 = scalar_select %p321, %s21, 1
        %p323 = scmp.lt.s32.totalorder %s320, 15
        %s324 = scalar_select %p323, %s320, 15
        %s325 = smul.addr %s324, 2
        %s326 = smul.addr %s322, 32
        %s327 = sadd.s32 %s325, %s326
        %s328 = smul.addr %s327, 4
        %s329 = scalar_lea.vmem %s1, %s328
        %s330 = smul.u32 %s22, 2
        %p331 = scmp.gt.s32.totalorder %s330, 0
        %s332 = scalar_select %p331, %s330, 0
        %p333 = scmp.lt.s32.totalorder %s332, 15
        %s334 = scalar_select %p333, %s332, 15
      $region36: #{bottleneck_forward.5} parent=27 // pred_fallthru
        _
      // Predicated region
      $region37: #{bottleneck_forward.5} parent=27 // pred_check
        %p335 = pneg %p138
      $region38: #{bottleneck_forward.5} parent=27 // pred_check_branch
        %337 = sbr.rel (%p335) target = $region40
      $region39: #{bottleneck_forward.5} parent=27 // pred_region
        %s338 = smul.u32 %s22, 2
        %s339 = sadd.s32 %s338, 1
        %p340 = scmp.gt.s32.totalorder %s339, 0
        %s341 = scalar_select %p340, %s339, 0
        %p342 = scmp.lt.s32.totalorder %s341, 15
        %s343 = scalar_select %p342, %s341, 15
        %p344 = scmp.lt.s32.totalorder %s21, 1
        %s345 = scalar_select %p344, %s21, 1
        %p346 = scmp.lt.s32.totalorder %s343, 15
        %s347 = scalar_select %p346, %s343, 15
        %s348 = smul.addr %s347, 2
        %s349 = smul.addr %s345, 32
        %s350 = sadd.s32 %s348, %s349
        %s351 = smul.addr %s350, 4
        %s352 = scalar_lea.vmem %s2, %s351
        %s353 = smul.u32 %s22, 2
        %s354 = sadd.s32 %s353, 1
        %p355 = scmp.gt.s32.totalorder %s354, 0
        %s356 = scalar_select %p355, %s354, 0
        %p357 = scmp.lt.s32.totalorder %s356, 15
        %s358 = scalar_select %p357, %s356, 15
      $region40: #{bottleneck_forward.5} parent=27 // pred_fallthru
        _
    $region28: #{bottleneck_forward.5} parent=5 // pred_fallthru
      _
    %p359 = scmp.le.s32.totalorder 1, %s14
    %p360 = scmp.lt.s32.totalorder %s14, 17
    %p361 = pnand %p359, %p360
    %p362 = pneg %p361
    // Predicated region
    $region41: #{bottleneck_forward.5} parent=5 // pred_check
      _
    $region42: #{bottleneck_forward.5} parent=5 // pred_check_branch
      %364 = sbr.rel (%p361) target = $region44
    $region43: #{bottleneck_forward.5} parent=5 // pred_region
      %s365 = ssub.s32 %s14, 1
      %s366 = smul.u32 %s24, 2
      %s367 = sadd.s32 %s366, 4294967295
      %p368 = scmp.gt.s32.totalorder %s367, 0
      %s369 = scalar_select %p368, %s367, 0
      %p370 = scmp.lt.s32.totalorder %s369, 15
      %s371 = scalar_select %p370, %s369, 15
      %p372 = scmp.lt.s32.totalorder %s23, 1
      %s373 = scalar_select %p372, %s23, 1
      %p374 = scmp.lt.s32.totalorder %s371, 15
      %s375 = scalar_select %p374, %s371, 15
      %s376 = smul.addr %s375, 2
      %s377 = smul.addr %s373, 32
      %s378 = sadd.s32 %s376, %s377
      %s379 = smul.addr %s378, 4
      %s380 = scalar_lea.vmem %s0, %s379
      %p381 = pneg %p66
      %p382 = pneg %p63
      %s383 = smul.u32 %s24, 2
      %p384 = scmp.gt.s32.totalorder %s383, 0
      %s385 = scalar_select %p384, %s383, 0
      %p386 = scmp.lt.s32.totalorder %s385, 15
      %s387 = scalar_select %p386, %s385, 15
      %p388 = scmp.lt.s32.totalorder %s23, 1
      %s389 = scalar_select %p388, %s23, 1
      %p390 = scmp.lt.s32.totalorder %s387, 15
      %s391 = scalar_select %p390, %s387, 15
      %s392 = smul.addr %s391, 2
      %s393 = smul.addr %s389, 32
      %s394 = sadd.s32 %s392, %s393
      %s395 = smul.addr %s394, 4
      %s396 = scalar_lea.vmem %s1, %s395
      %p397 = pneg %p104
      %p398 = pneg %p101
      %s399 = smul.u32 %s24, 2
      %s400 = sadd.s32 %s399, 1
      %p401 = scmp.gt.s32.totalorder %s400, 0
      %s402 = scalar_select %p401, %s400, 0
      %p403 = scmp.lt.s32.totalorder %s402, 15
      %s404 = scalar_select %p403, %s402, 15
      %p405 = scmp.lt.s32.totalorder %s23, 1
      %s406 = scalar_select %p405, %s23, 1
      %p407 = scmp.lt.s32.totalorder %s404, 15
      %s408 = scalar_select %p407, %s404, 15
      %s409 = smul.addr %s408, 2
      %s410 = smul.addr %s406, 32
      %s411 = sadd.s32 %s409, %s410
      %s412 = smul.addr %s411, 4
      %s413 = scalar_lea.vmem %s2, %s412
      %p414 = pneg %p144
      %p415 = pneg %p141
      %p416 = pneg %p165
      %p417 = pneg %p162
      %p418 = pneg %p186
      %p419 = pneg %p183
      %p420 = pneg %p207
      %p421 = pneg %p204
      %p422 = pneg %p235
      %p423 = pneg %p232
      %p424 = scmp.lt.s32.totalorder %s23, 1
      %s425 = scalar_select %p424, %s23, 1
      %p426 = scmp.lt.s32.totalorder %s24, 7
      %s427 = scalar_select %p426, %s24, 7
      %s428 = smul.addr %s425, 8
      %s429 = sadd.s32 %s427, %s428
      %s430 = smul.addr %s429, 4
      %s431 = scalar_lea.vmem %s6, %s430
      %p432 = pneg %p261
      %p433 = pneg %p258
      %p434 = scmp.lt.s32.totalorder %s23, 1
      %s435 = scalar_select %p434, %s23, 1
      %s436 = smul.addr %s435, 8
      %s437 = scalar_lea.vmem %s7, %s436
      %s438 = smul.u32 %s24, 2
      %s439 = sadd.s32 %s438, 4294967295
      %p440 = scmp.gt.s32.totalorder %s439, 0
      %s441 = scalar_select %p440, %s439, 0
      %p442 = scmp.lt.s32.totalorder %s441, 15
      %s443 = scalar_select %p442, %s441, 15
      %p444 = scmp.lt.s32.totalorder %s23, 1
      %s445 = scalar_select %p444, %s23, 1
      %p446 = scmp.lt.s32.totalorder %s443, 15
      %s447 = scalar_select %p446, %s443, 15
      %s448 = smul.addr %s447, 2
      %s449 = smul.addr %s445, 32
      %s450 = sadd.s32 %s448, %s449
      %s451 = smul.addr %s450, 4
      %s452 = scalar_lea.vmem %s0, %s451
      %s453 = smul.u32 %s24, 2
      %s454 = sadd.s32 %s453, 4294967295
      %p455 = scmp.gt.s32.totalorder %s454, 0
      %s456 = scalar_select %p455, %s454, 0
      %p457 = scmp.lt.s32.totalorder %s456, 15
      %s458 = scalar_select %p457, %s456, 15
      %s459 = smul.u32 %s24, 2
      %p460 = scmp.gt.s32.totalorder %s459, 0
      %s461 = scalar_select %p460, %s459, 0
      %p462 = scmp.lt.s32.totalorder %s461, 15
      %s463 = scalar_select %p462, %s461, 15
      %p464 = scmp.lt.s32.totalorder %s23, 1
      %s465 = scalar_select %p464, %s23, 1
      %p466 = scmp.lt.s32.totalorder %s463, 15
      %s467 = scalar_select %p466, %s463, 15
      %s468 = smul.addr %s467, 2
      %s469 = smul.addr %s465, 32
      %s470 = sadd.s32 %s468, %s469
      %s471 = smul.addr %s470, 4
      %s472 = scalar_lea.vmem %s1, %s471
      %s473 = smul.u32 %s24, 2
      %p474 = scmp.gt.s32.totalorder %s473, 0
      %s475 = scalar_select %p474, %s473, 0
      %p476 = scmp.lt.s32.totalorder %s475, 15
      %s477 = scalar_select %p476, %s475, 15
      %s478 = smul.u32 %s24, 2
      %s479 = sadd.s32 %s478, 1
      %p480 = scmp.gt.s32.totalorder %s479, 0
      %s481 = scalar_select %p480, %s479, 0
      %p482 = scmp.lt.s32.totalorder %s481, 15
      %s483 = scalar_select %p482, %s481, 15
      %p484 = scmp.lt.s32.totalorder %s23, 1
      %s485 = scalar_select %p484, %s23, 1
      %p486 = scmp.lt.s32.totalorder %s483, 15
      %s487 = scalar_select %p486, %s483, 15
      %s488 = smul.addr %s487, 2
      %s489 = smul.addr %s485, 32
      %s490 = sadd.s32 %s488, %s489
      %s491 = smul.addr %s490, 4
      %s492 = scalar_lea.vmem %s2, %s491
      %s493 = smul.u32 %s24, 2
      %s494 = sadd.s32 %s493, 1
      %p495 = scmp.gt.s32.totalorder %s494, 0
      %s496 = scalar_select %p495, %s494, 0
      %p497 = scmp.lt.s32.totalorder %s496, 15
      %s498 = scalar_select %p497, %s496, 15
      %p499 = scmp.lt.s32.totalorder %s23, 1
      %s500 = scalar_select %p499, %s23, 1
      %p501 = scmp.lt.s32.totalorder %s24, 7
      %s502 = scalar_select %p501, %s24, 7
      %s503 = smul.addr %s500, 8
      %s504 = sadd.s32 %s502, %s503
      %s505 = smul.addr %s504, 4
      %s506 = scalar_lea.vmem %s6, %s505
      %p507 = scmp.lt.s32.totalorder %s23, 1
      %s508 = scalar_select %p507, %s23, 1
      %s509 = smul.addr %s508, 8
      %s510 = scalar_lea.vmem %s7, %s509
      %p511 = scmp.eq.s32.totalorder %s24, 0
      // Predicated region
      $region45: #{bottleneck_forward.5} parent=43 // pred_check
        %p512 = pneg %p511
      $region46: #{bottleneck_forward.5} parent=43 // pred_check_branch
        %514 = sbr.rel (%p512) target = $region48
      $region47: #{bottleneck_forward.5} parent=43 // pred_region
        %515 = vst [vmem:[%s510] sm:$0xff] 0.0
      $region48: #{bottleneck_forward.5} parent=43 // pred_fallthru
        _
      %v516 = vld [vmem:[%s3] sm:$0xff]
      %v517 = vld [vmem:[%s3 + $0x8] sm:$0xff]
      %v518 = vld [vmem:[%s4] sm:$0xff]
      %v519 = vadd.f32 %v516, %v517
      %v520 = vmul.f32 %v519, 0.001953125
      %v521 = vmul.f32 %v520, %v520
      %v523 = vrot.slane %v521, 7
      %v525 = vsub.f32 %v520, %v523
      %v526 = vmax.f32 %v525, 0.0
      %v527 = vadd.f32 %v526, 1e-05
      %v528 = vrsqrt.pop %v527
      %v529 = vmul.f32 %v528, %v527
      %v530 = vmul.f32 %v529, %v528
      %v531 = vmul.f32 0.5, %v530
      %v532 = vsub.f32 1.5, %v531
      %v533 = vmul.f32 %v528, %v532
      %vm534 = vweird.f32 %v527
      %vm535 = vweird.f32 %v528
      %vm536 = vmor %vm534, %vm535
      %v537 = vsel %vm536, %v528, %v533
      %v539 = vrot.slane %v518, 7
      %v541 = vmul.f32 %v537, %v539
      %v543 = vrot.slane %v541, 1
      %v545 = vmul.f32 %v520, %v543
      %v547 = vrot.slane %v545, 7
      %v549 = vsub.f32 %v518, %v547
      %550 = vst [vmem:[#allocation2] sm:$0xff] 0.0
      %551 = vst [vmem:[#allocation2 + $0x8] sm:$0xff] 0.0
      %552 = vst [vmem:[#allocation2 + $0x10] sm:$0xff] 0.0
      %s553 = smul.u32 %s24, 2
      %s554 = sadd.s32 %s553, 4294967295
      %p555 = scmp.ge.s32.totalorder %s554, 0
      %p556 = scmp.lt.s32.totalorder %s554, 16
      %p557 = pnand %p555, %p556
      %p558 = pneg %p557
      %s559 = scalar_select %p558, 1, 0
      %s560 = scvt.s32.f32 %s559
      %v561 = vld [vmem:[%s452] sm:$0xf]
      %v562 = vld [vmem:[%s452 + $0x4] sm:$0xf]
      %v563 = vunpack.c.l.bf16 %v561
      %v564 = vunpack.c.l.bf16 %v562
      %v565 = vperm.slane %v541, 1
      %v566 = vmul.f32 %v563, %v565
      %v567 = vmul.f32 %v564, %v565
      %v568 = vperm.slane %v549, 1
      %v569 = vadd.f32 %v566, %v568
      %v570 = vadd.f32 %v567, %v568
      %v571 = vstv %s560
      %v572 = vmul.f32 %v569, %v571
      %v573 = vmul.f32 %v570, %v571
      %574 = vst [vmem:[#allocation2 + $0x1] sm:$0xff] %v572
      %575 = vst [vmem:[#allocation2 + $0x9] sm:$0xff] %v573
      %v576 = vld [vmem:[#allocation2] ss:$2 sm:$0xff]
      %v577 = vpack.c.bf16 %v576, %v576
      %v578 = vld [vmem:[%s5] sm:$0xf]
      %v579 = vld [vmem:[%s5 + $0x4] sm:$0xf]
      %v580 = vld [vmem:[%s5 + $0x8] sm:$0xf]
      %v581 = vld [vmem:[%s5 + $0xc] sm:$0xf]
      %v582 = vld [vmem:[%s5 + $0x10] sm:$0xf]
      %v583 = vld [vmem:[%s5 + $0x14] sm:$0xf]
      %v584 = vld [vmem:[%s5 + $0x18] sm:$0xf]
      %v585 = vld [vmem:[%s5 + $0x1c] sm:$0xf]
      %v586 = vld [vmem:[%s5 + $0x20] sm:$0xf]
      %v587 = vld [vmem:[%s5 + $0x24] sm:$0xf]
      %v588 = vld [vmem:[%s5 + $0x28] sm:$0xf]
      %v589 = vld [vmem:[%s5 + $0x2c] sm:$0xf]
      %v590 = vld [vmem:[%s5 + $0x30] sm:$0xf]
      %v591 = vld [vmem:[%s5 + $0x34] sm:$0xf]
      %v592 = vld [vmem:[%s5 + $0x38] sm:$0xf]
      %v593 = vld [vmem:[%s5 + $0x3c] sm:$0xf]
      %s594 = scalar_lea.vmem [#allocation2], 1
      %v595 = vld [vmem:[%s594] ss:$2 sm:$0xff]
      %v596 = vpack.c.bf16 %v595, %v595
      %s597 = scalar_lea.vmem %s5, 64
      %v598 = vld [vmem:[%s597] sm:$0xf]
      %v599 = vld [vmem:[%s597 + $0x4] sm:$0xf]
      %v600 = vld [vmem:[%s597 + $0x8] sm:$0xf]
      %v601 = vld [vmem:[%s597 + $0xc] sm:$0xf]
      %v602 = vld [vmem:[%s597 + $0x10] sm:$0xf]
      %v603 = vld [vmem:[%s597 + $0x14] sm:$0xf]
      %v604 = vld [vmem:[%s597 + $0x18] sm:$0xf]
      %v605 = vld [vmem:[%s597 + $0x1c] sm:$0xf]
      %v606 = vld [vmem:[%s597 + $0x20] sm:$0xf]
      %v607 = vld [vmem:[%s597 + $0x24] sm:$0xf]
      %v608 = vld [vmem:[%s597 + $0x28] sm:$0xf]
      %v609 = vld [vmem:[%s597 + $0x2c] sm:$0xf]
      %v610 = vld [vmem:[%s597 + $0x30] sm:$0xf]
      %v611 = vld [vmem:[%s597 + $0x34] sm:$0xf]
      %v612 = vld [vmem:[%s597 + $0x38] sm:$0xf]
      %v613 = vld [vmem:[%s597 + $0x3c] sm:$0xf]
      %v630 = vunpack.c.l.b16 %v598
      %v631 = vunpack.c.l.b16 %v599
      %v632 = vunpack.c.l.b16 %v600
      %v633 = vunpack.c.l.b16 %v601
      %v634 = vunpack.c.l.b16 %v602
      %v635 = vunpack.c.l.b16 %v603
      %v636 = vunpack.c.l.b16 %v604
      %v637 = vunpack.c.l.b16 %v605
      %v638 = vunpack.c.l.b16 %v606
      %v639 = vunpack.c.l.b16 %v607
      %v640 = vunpack.c.l.b16 %v608
      %v641 = vunpack.c.l.b16 %v609
      %v642 = vunpack.c.l.b16 %v610
      %v643 = vunpack.c.l.b16 %v611
      %v644 = vunpack.c.l.b16 %v612
      %v645 = vunpack.c.l.b16 %v613
      %v646 = vpack.c.b16 %v631, %v630
      %v647 = vpack.c.b16 %v633, %v632
      %v648 = vpack.c.b16 %v635, %v634
      %v649 = vpack.c.b16 %v637, %v636
      %v650 = vpack.c.b16 %v639, %v638
      %v651 = vpack.c.b16 %v641, %v640
      %v652 = vpack.c.b16 %v643, %v642
      %v653 = vpack.c.b16 %v645, %v644
      %662 = vmatpush.bf16.msra.mxu0 %v653
      %663 = vmatpush.bf16.msra.mxu0 %v652
      %664 = vmatpush.bf16.msra.mxu0 %v651
      %665 = vmatpush.bf16.msra.mxu0 %v650
      %666 = vmatpush.bf16.msra.mxu0 %v649
      %667 = vmatpush.bf16.msra.mxu0 %v648
      %668 = vmatpush.bf16.msra.mxu0 %v647
      %669 = vmatpush.bf16.msra.mxu0 %v646
      %670 = vmatmul.bf16.gmra.mxu0 %v596
      %v671 = vpop.f32.mrf.mxu0
      %v672 = vadd.f32 0.0, %v671
      %v673 = vpop.f32.mrf.mxu0
      %674 = vdwg.mxu0
      %v691 = vunpack.c.l.b16 %v578
      %v692 = vunpack.c.l.b16 %v579
      %v693 = vunpack.c.l.b16 %v580
      %v694 = vunpack.c.l.b16 %v581
      %v695 = vunpack.c.l.b16 %v582
      %v696 = vunpack.c.l.b16 %v583
      %v697 = vunpack.c.l.b16 %v584
      %v698 = vunpack.c.l.b16 %v585
      %v699 = vunpack.c.l.b16 %v586
      %v700 = vunpack.c.l.b16 %v587
      %v701 = vunpack.c.l.b16 %v588
      %v702 = vunpack.c.l.b16 %v589
      %v703 = vunpack.c.l.b16 %v590
      %v704 = vunpack.c.l.b16 %v591
      %v705 = vunpack.c.l.b16 %v592
      %v706 = vunpack.c.l.b16 %v593
      %v707 = vpack.c.b16 %v692, %v691
      %v708 = vpack.c.b16 %v694, %v693
      %v709 = vpack.c.b16 %v696, %v695
      %v710 = vpack.c.b16 %v698, %v697
      %v711 = vpack.c.b16 %v700, %v699
      %v712 = vpack.c.b16 %v702, %v701
      %v713 = vpack.c.b16 %v704, %v703
      %v714 = vpack.c.b16 %v706, %v705
      %723 = vmatpush.bf16.msra.mxu0 %v714
      %724 = vmatpush.bf16.msra.mxu0 %v713
      %725 = vmatpush.bf16.msra.mxu0 %v712
      %726 = vmatpush.bf16.msra.mxu0 %v711
      %727 = vmatpush.bf16.msra.mxu0 %v710
      %728 = vmatpush.bf16.msra.mxu0 %v709
      %729 = vmatpush.bf16.msra.mxu0 %v708
      %730 = vmatpush.bf16.msra.mxu0 %v707
      %731 = vmatmul.bf16.gmra.mxu0 %v577
      %v732 = vpop.f32.mrf.mxu0
      %v733 = vadd.f32 %v672, %v732
      %v734 = vpop.f32.mrf.mxu0
      %735 = vdwg.mxu0
      %s736 = scalar_lea.vmem [#allocation2], 2
      %v737 = vld [vmem:[%s736] ss:$2 sm:$0xff]
      %v738 = vpack.c.bf16 %v737, %v737
      %s739 = scalar_lea.vmem %s5, 128
      %v740 = vld [vmem:[%s739] sm:$0xf]
      %v741 = vld [vmem:[%s739 + $0x4] sm:$0xf]
      %v742 = vld [vmem:[%s739 + $0x8] sm:$0xf]
      %v743 = vld [vmem:[%s739 + $0xc] sm:$0xf]
      %v744 = vld [vmem:[%s739 + $0x10] sm:$0xf]
      %v745 = vld [vmem:[%s739 + $0x14] sm:$0xf]
      %v746 = vld [vmem:[%s739 + $0x18] sm:$0xf]
      %v747 = vld [vmem:[%s739 + $0x1c] sm:$0xf]
      %v748 = vld [vmem:[%s739 + $0x20] sm:$0xf]
      %v749 = vld [vmem:[%s739 + $0x24] sm:$0xf]
      %v750 = vld [vmem:[%s739 + $0x28] sm:$0xf]
      %v751 = vld [vmem:[%s739 + $0x2c] sm:$0xf]
      %v752 = vld [vmem:[%s739 + $0x30] sm:$0xf]
      %v753 = vld [vmem:[%s739 + $0x34] sm:$0xf]
      %v754 = vld [vmem:[%s739 + $0x38] sm:$0xf]
      %v755 = vld [vmem:[%s739 + $0x3c] sm:$0xf]
      %v772 = vunpack.c.l.b16 %v740
      %v773 = vunpack.c.l.b16 %v741
      %v774 = vunpack.c.l.b16 %v742
      %v775 = vunpack.c.l.b16 %v743
      %v776 = vunpack.c.l.b16 %v744
      %v777 = vunpack.c.l.b16 %v745
      %v778 = vunpack.c.l.b16 %v746
      %v779 = vunpack.c.l.b16 %v747
      %v780 = vunpack.c.l.b16 %v748
      %v781 = vunpack.c.l.b16 %v749
      %v782 = vunpack.c.l.b16 %v750
      %v783 = vunpack.c.l.b16 %v751
      %v784 = vunpack.c.l.b16 %v752
      %v785 = vunpack.c.l.b16 %v753
      %v786 = vunpack.c.l.b16 %v754
      %v787 = vunpack.c.l.b16 %v755
      %v788 = vpack.c.b16 %v773, %v772
      %v789 = vpack.c.b16 %v775, %v774
      %v790 = vpack.c.b16 %v777, %v776
      %v791 = vpack.c.b16 %v779, %v778
      %v792 = vpack.c.b16 %v781, %v780
      %v793 = vpack.c.b16 %v783, %v782
      %v794 = vpack.c.b16 %v785, %v784
      %v795 = vpack.c.b16 %v787, %v786
      %804 = vmatpush.bf16.msra.mxu0 %v795
      %805 = vmatpush.bf16.msra.mxu0 %v794
      %806 = vmatpush.bf16.msra.mxu0 %v793
      %807 = vmatpush.bf16.msra.mxu0 %v792
      %808 = vmatpush.bf16.msra.mxu0 %v791
      %809 = vmatpush.bf16.msra.mxu0 %v790
      %810 = vmatpush.bf16.msra.mxu0 %v789
      %811 = vmatpush.bf16.msra.mxu0 %v788
      %812 = vmatmul.bf16.gmra.mxu0 %v738
      %v813 = vpop.f32.mrf.mxu0
      %v814 = vadd.f32 0.0, %v813
      %v815 = vpop.f32.mrf.mxu0
      %816 = vdwg.mxu0
      %v817 = vadd.f32 %v733, %v814
      %p818 = scmp.ge.s32.totalorder %s553, 0
      %p819 = scmp.lt.s32.totalorder %s553, 16
      %p820 = pnand %p818, %p819
      %p821 = pneg %p820
      %s822 = scalar_select %p821, 1, 0
      %s823 = scvt.s32.f32 %s822
      %v824 = vld [vmem:[%s472] sm:$0xf]
      %v825 = vld [vmem:[%s472 + $0x4] sm:$0xf]
      %v826 = vunpack.c.l.bf16 %v824
      %v827 = vunpack.c.l.bf16 %v825
      %v828 = vmul.f32 %v826, %v565
      %v829 = vmul.f32 %v827, %v565
      %v830 = vadd.f32 %v828, %v568
      %v831 = vadd.f32 %v829, %v568
      %v832 = vstv %s823
      %v833 = vmul.f32 %v830, %v832
      %v834 = vmul.f32 %v831, %v832
      %835 = vst [vmem:[#allocation2 + $0x1] sm:$0xff] %v833
      %836 = vst [vmem:[#allocation2 + $0x9] sm:$0xff] %v834
      %v837 = vld [vmem:[#allocation2] ss:$2 sm:$0xff]
      %v838 = vpack.c.bf16 %v837, %v837
      %s839 = scalar_lea.vmem %s5, 192
      %v840 = vld [vmem:[%s839] sm:$0xf]
      %v841 = vld [vmem:[%s839 + $0x4] sm:$0xf]
      %v842 = vld [vmem:[%s839 + $0x8] sm:$0xf]
      %v843 = vld [vmem:[%s839 + $0xc] sm:$0xf]
      %v844 = vld [vmem:[%s839 + $0x10] sm:$0xf]
      %v845 = vld [vmem:[%s839 + $0x14] sm:$0xf]
      %v846 = vld [vmem:[%s839 + $0x18] sm:$0xf]
      %v847 = vld [vmem:[%s839 + $0x1c] sm:$0xf]
      %v848 = vld [vmem:[%s839 + $0x20] sm:$0xf]
      %v849 = vld [vmem:[%s839 + $0x24] sm:$0xf]
      %v850 = vld [vmem:[%s839 + $0x28] sm:$0xf]
      %v851 = vld [vmem:[%s839 + $0x2c] sm:$0xf]
      %v852 = vld [vmem:[%s839 + $0x30] sm:$0xf]
      %v853 = vld [vmem:[%s839 + $0x34] sm:$0xf]
      %v854 = vld [vmem:[%s839 + $0x38] sm:$0xf]
      %v855 = vld [vmem:[%s839 + $0x3c] sm:$0xf]
      %v872 = vunpack.c.l.b16 %v840
      %v873 = vunpack.c.l.b16 %v841
      %v874 = vunpack.c.l.b16 %v842
      %v875 = vunpack.c.l.b16 %v843
      %v876 = vunpack.c.l.b16 %v844
      %v877 = vunpack.c.l.b16 %v845
      %v878 = vunpack.c.l.b16 %v846
      %v879 = vunpack.c.l.b16 %v847
      %v880 = vunpack.c.l.b16 %v848
      %v881 = vunpack.c.l.b16 %v849
      %v882 = vunpack.c.l.b16 %v850
      %v883 = vunpack.c.l.b16 %v851
      %v884 = vunpack.c.l.b16 %v852
      %v885 = vunpack.c.l.b16 %v853
      %v886 = vunpack.c.l.b16 %v854
      %v887 = vunpack.c.l.b16 %v855
      %v888 = vpack.c.b16 %v873, %v872
      %v889 = vpack.c.b16 %v875, %v874
      %v890 = vpack.c.b16 %v877, %v876
      %v891 = vpack.c.b16 %v879, %v878
      %v892 = vpack.c.b16 %v881, %v880
      %v893 = vpack.c.b16 %v883, %v882
      %v894 = vpack.c.b16 %v885, %v884
      %v895 = vpack.c.b16 %v887, %v886
      %904 = vmatpush.bf16.msra.mxu0 %v895
      %905 = vmatpush.bf16.msra.mxu0 %v894
      %906 = vmatpush.bf16.msra.mxu0 %v893
      %907 = vmatpush.bf16.msra.mxu0 %v892
      %908 = vmatpush.bf16.msra.mxu0 %v891
      %909 = vmatpush.bf16.msra.mxu0 %v890
      %910 = vmatpush.bf16.msra.mxu0 %v889
      %911 = vmatpush.bf16.msra.mxu0 %v888
      %912 = vmatmul.bf16.gmra.mxu0 %v838
      %v913 = vpop.f32.mrf.mxu0
      %v914 = vadd.f32 0.0, %v913
      %v915 = vpop.f32.mrf.mxu0
      %916 = vdwg.mxu0
      %v917 = vadd.f32 %v817, %v914
      %v918 = vld [vmem:[%s594] ss:$2 sm:$0xff]
      %v919 = vpack.c.bf16 %v918, %v918
      %s920 = scalar_lea.vmem %s5, 256
      %v921 = vld [vmem:[%s920] sm:$0xf]
      %v922 = vld [vmem:[%s920 + $0x4] sm:$0xf]
      %v923 = vld [vmem:[%s920 + $0x8] sm:$0xf]
      %v924 = vld [vmem:[%s920 + $0xc] sm:$0xf]
      %v925 = vld [vmem:[%s920 + $0x10] sm:$0xf]
      %v926 = vld [vmem:[%s920 + $0x14] sm:$0xf]
      %v927 = vld [vmem:[%s920 + $0x18] sm:$0xf]
      %v928 = vld [vmem:[%s920 + $0x1c] sm:$0xf]
      %v929 = vld [vmem:[%s920 + $0x20] sm:$0xf]
      %v930 = vld [vmem:[%s920 + $0x24] sm:$0xf]
      %v931 = vld [vmem:[%s920 + $0x28] sm:$0xf]
      %v932 = vld [vmem:[%s920 + $0x2c] sm:$0xf]
      %v933 = vld [vmem:[%s920 + $0x30] sm:$0xf]
      %v934 = vld [vmem:[%s920 + $0x34] sm:$0xf]
      %v935 = vld [vmem:[%s920 + $0x38] sm:$0xf]
      %v936 = vld [vmem:[%s920 + $0x3c] sm:$0xf]
      %v953 = vunpack.c.l.b16 %v921
      %v954 = vunpack.c.l.b16 %v922
      %v955 = vunpack.c.l.b16 %v923
      %v956 = vunpack.c.l.b16 %v924
      %v957 = vunpack.c.l.b16 %v925
      %v958 = vunpack.c.l.b16 %v926
      %v959 = vunpack.c.l.b16 %v927
      %v960 = vunpack.c.l.b16 %v928
      %v961 = vunpack.c.l.b16 %v929
      %v962 = vunpack.c.l.b16 %v930
      %v963 = vunpack.c.l.b16 %v931
      %v964 = vunpack.c.l.b16 %v932
      %v965 = vunpack.c.l.b16 %v933
      %v966 = vunpack.c.l.b16 %v934
      %v967 = vunpack.c.l.b16 %v935
      %v968 = vunpack.c.l.b16 %v936
      %v969 = vpack.c.b16 %v954, %v953
      %v970 = vpack.c.b16 %v956, %v955
      %v971 = vpack.c.b16 %v958, %v957
      %v972 = vpack.c.b16 %v960, %v959
      %v973 = vpack.c.b16 %v962, %v961
      %v974 = vpack.c.b16 %v964, %v963
      %v975 = vpack.c.b16 %v966, %v965
      %v976 = vpack.c.b16 %v968, %v967
      %985 = vmatpush.bf16.msra.mxu0 %v976
      %986 = vmatpush.bf16.msra.mxu0 %v975
      %987 = vmatpush.bf16.msra.mxu0 %v974
      %988 = vmatpush.bf16.msra.mxu0 %v973
      %989 = vmatpush.bf16.msra.mxu0 %v972
      %990 = vmatpush.bf16.msra.mxu0 %v971
      %991 = vmatpush.bf16.msra.mxu0 %v970
      %992 = vmatpush.bf16.msra.mxu0 %v969
      %993 = vmatmul.bf16.gmra.mxu0 %v919
      %v994 = vpop.f32.mrf.mxu0
      %v995 = vadd.f32 0.0, %v994
      %v996 = vpop.f32.mrf.mxu0
      %997 = vdwg.mxu0
      %v998 = vadd.f32 %v917, %v995
      %v999 = vld [vmem:[%s736] ss:$2 sm:$0xff]
      %v1000 = vpack.c.bf16 %v999, %v999
      %s1001 = scalar_lea.vmem %s5, 320
      %v1002 = vld [vmem:[%s1001] sm:$0xf]
      %v1003 = vld [vmem:[%s1001 + $0x4] sm:$0xf]
      %v1004 = vld [vmem:[%s1001 + $0x8] sm:$0xf]
      %v1005 = vld [vmem:[%s1001 + $0xc] sm:$0xf]
      %v1006 = vld [vmem:[%s1001 + $0x10] sm:$0xf]
      %v1007 = vld [vmem:[%s1001 + $0x14] sm:$0xf]
      %v1008 = vld [vmem:[%s1001 + $0x18] sm:$0xf]
      %v1009 = vld [vmem:[%s1001 + $0x1c] sm:$0xf]
      %v1010 = vld [vmem:[%s1001 + $0x20] sm:$0xf]
      %v1011 = vld [vmem:[%s1001 + $0x24] sm:$0xf]
      %v1012 = vld [vmem:[%s1001 + $0x28] sm:$0xf]
      %v1013 = vld [vmem:[%s1001 + $0x2c] sm:$0xf]
      %v1014 = vld [vmem:[%s1001 + $0x30] sm:$0xf]
      %v1015 = vld [vmem:[%s1001 + $0x34] sm:$0xf]
      %v1016 = vld [vmem:[%s1001 + $0x38] sm:$0xf]
      %v1017 = vld [vmem:[%s1001 + $0x3c] sm:$0xf]
      %v1034 = vunpack.c.l.b16 %v1002
      %v1035 = vunpack.c.l.b16 %v1003
      %v1036 = vunpack.c.l.b16 %v1004
      %v1037 = vunpack.c.l.b16 %v1005
      %v1038 = vunpack.c.l.b16 %v1006
      %v1039 = vunpack.c.l.b16 %v1007
      %v1040 = vunpack.c.l.b16 %v1008
      %v1041 = vunpack.c.l.b16 %v1009
      %v1042 = vunpack.c.l.b16 %v1010
      %v1043 = vunpack.c.l.b16 %v1011
      %v1044 = vunpack.c.l.b16 %v1012
      %v1045 = vunpack.c.l.b16 %v1013
      %v1046 = vunpack.c.l.b16 %v1014
      %v1047 = vunpack.c.l.b16 %v1015
      %v1048 = vunpack.c.l.b16 %v1016
      %v1049 = vunpack.c.l.b16 %v1017
      %v1050 = vpack.c.b16 %v1035, %v1034
      %v1051 = vpack.c.b16 %v1037, %v1036
      %v1052 = vpack.c.b16 %v1039, %v1038
      %v1053 = vpack.c.b16 %v1041, %v1040
      %v1054 = vpack.c.b16 %v1043, %v1042
      %v1055 = vpack.c.b16 %v1045, %v1044
      %v1056 = vpack.c.b16 %v1047, %v1046
      %v1057 = vpack.c.b16 %v1049, %v1048
      %1066 = vmatpush.bf16.msra.mxu0 %v1057
      %1067 = vmatpush.bf16.msra.mxu0 %v1056
      %1068 = vmatpush.bf16.msra.mxu0 %v1055
      %1069 = vmatpush.bf16.msra.mxu0 %v1054
      %1070 = vmatpush.bf16.msra.mxu0 %v1053
      %1071 = vmatpush.bf16.msra.mxu0 %v1052
      %1072 = vmatpush.bf16.msra.mxu0 %v1051
      %1073 = vmatpush.bf16.msra.mxu0 %v1050
      %1074 = vmatmul.bf16.gmra.mxu0 %v1000
      %v1075 = vpop.f32.mrf.mxu0
      %v1076 = vadd.f32 0.0, %v1075
      %v1077 = vpop.f32.mrf.mxu0
      %1078 = vdwg.mxu0
      %v1079 = vadd.f32 %v998, %v1076
      %s1080 = sadd.s32 %s553, 1
      %p1081 = scmp.ge.s32.totalorder %s1080, 0
      %p1082 = scmp.lt.s32.totalorder %s1080, 16
      %p1083 = pnand %p1081, %p1082
      %p1084 = pneg %p1083
      %s1085 = scalar_select %p1084, 1, 0
      %s1086 = scvt.s32.f32 %s1085
      %v1087 = vld [vmem:[%s492] sm:$0xf]
      %v1088 = vld [vmem:[%s492 + $0x4] sm:$0xf]
      %v1089 = vunpack.c.l.bf16 %v1087
      %v1090 = vunpack.c.l.bf16 %v1088
      %v1091 = vmul.f32 %v1089, %v565
      %v1092 = vmul.f32 %v1090, %v565
      %v1093 = vadd.f32 %v1091, %v568
      %v1094 = vadd.f32 %v1092, %v568
      %v1095 = vstv %s1086
      %v1096 = vmul.f32 %v1093, %v1095
      %v1097 = vmul.f32 %v1094, %v1095
      %1098 = vst [vmem:[#allocation2 + $0x1] sm:$0xff] %v1096
      %1099 = vst [vmem:[#allocation2 + $0x9] sm:$0xff] %v1097
      %v1100 = vld [vmem:[#allocation2] ss:$2 sm:$0xff]
      %v1101 = vpack.c.bf16 %v1100, %v1100
      %s1102 = scalar_lea.vmem %s5, 384
      %v1103 = vld [vmem:[%s1102] sm:$0xf]
      %v1104 = vld [vmem:[%s1102 + $0x4] sm:$0xf]
      %v1105 = vld [vmem:[%s1102 + $0x8] sm:$0xf]
      %v1106 = vld [vmem:[%s1102 + $0xc] sm:$0xf]
      %v1107 = vld [vmem:[%s1102 + $0x10] sm:$0xf]
      %v1108 = vld [vmem:[%s1102 + $0x14] sm:$0xf]
      %v1109 = vld [vmem:[%s1102 + $0x18] sm:$0xf]
      %v1110 = vld [vmem:[%s1102 + $0x1c] sm:$0xf]
      %v1111 = vld [vmem:[%s1102 + $0x20] sm:$0xf]
      %v1112 = vld [vmem:[%s1102 + $0x24] sm:$0xf]
      %v1113 = vld [vmem:[%s1102 + $0x28] sm:$0xf]
      %v1114 = vld [vmem:[%s1102 + $0x2c] sm:$0xf]
      %v1115 = vld [vmem:[%s1102 + $0x30] sm:$0xf]
      %v1116 = vld [vmem:[%s1102 + $0x34] sm:$0xf]
      %v1117 = vld [vmem:[%s1102 + $0x38] sm:$0xf]
      %v1118 = vld [vmem:[%s1102 + $0x3c] sm:$0xf]
      %v1135 = vunpack.c.l.b16 %v1103
      %v1136 = vunpack.c.l.b16 %v1104
      %v1137 = vunpack.c.l.b16 %v1105
      %v1138 = vunpack.c.l.b16 %v1106
      %v1139 = vunpack.c.l.b16 %v1107
      %v1140 = vunpack.c.l.b16 %v1108
      %v1141 = vunpack.c.l.b16 %v1109
      %v1142 = vunpack.c.l.b16 %v1110
      %v1143 = vunpack.c.l.b16 %v1111
      %v1144 = vunpack.c.l.b16 %v1112
      %v1145 = vunpack.c.l.b16 %v1113
      %v1146 = vunpack.c.l.b16 %v1114
      %v1147 = vunpack.c.l.b16 %v1115
      %v1148 = vunpack.c.l.b16 %v1116
      %v1149 = vunpack.c.l.b16 %v1117
      %v1150 = vunpack.c.l.b16 %v1118
      %v1151 = vpack.c.b16 %v1136, %v1135
      %v1152 = vpack.c.b16 %v1138, %v1137
      %v1153 = vpack.c.b16 %v1140, %v1139
      %v1154 = vpack.c.b16 %v1142, %v1141
      %v1155 = vpack.c.b16 %v1144, %v1143
      %v1156 = vpack.c.b16 %v1146, %v1145
      %v1157 = vpack.c.b16 %v1148, %v1147
      %v1158 = vpack.c.b16 %v1150, %v1149
      %1167 = vmatpush.bf16.msra.mxu0 %v1158
      %1168 = vmatpush.bf16.msra.mxu0 %v1157
      %1169 = vmatpush.bf16.msra.mxu0 %v1156
      %1170 = vmatpush.bf16.msra.mxu0 %v1155
      %1171 = vmatpush.bf16.msra.mxu0 %v1154
      %1172 = vmatpush.bf16.msra.mxu0 %v1153
      %1173 = vmatpush.bf16.msra.mxu0 %v1152
      %1174 = vmatpush.bf16.msra.mxu0 %v1151
      %1175 = vmatmul.bf16.gmra.mxu0 %v1101
      %v1176 = vpop.f32.mrf.mxu0
      %v1177 = vadd.f32 0.0, %v1176
      %v1178 = vpop.f32.mrf.mxu0
      %1179 = vdwg.mxu0
      %v1180 = vadd.f32 %v1079, %v1177
      %v1181 = vld [vmem:[%s594] ss:$2 sm:$0xff]
      %v1182 = vpack.c.bf16 %v1181, %v1181
      %s1183 = scalar_lea.vmem %s5, 448
      %v1184 = vld [vmem:[%s1183] sm:$0xf]
      %v1185 = vld [vmem:[%s1183 + $0x4] sm:$0xf]
      %v1186 = vld [vmem:[%s1183 + $0x8] sm:$0xf]
      %v1187 = vld [vmem:[%s1183 + $0xc] sm:$0xf]
      %v1188 = vld [vmem:[%s1183 + $0x10] sm:$0xf]
      %v1189 = vld [vmem:[%s1183 + $0x14] sm:$0xf]
      %v1190 = vld [vmem:[%s1183 + $0x18] sm:$0xf]
      %v1191 = vld [vmem:[%s1183 + $0x1c] sm:$0xf]
      %v1192 = vld [vmem:[%s1183 + $0x20] sm:$0xf]
      %v1193 = vld [vmem:[%s1183 + $0x24] sm:$0xf]
      %v1194 = vld [vmem:[%s1183 + $0x28] sm:$0xf]
      %v1195 = vld [vmem:[%s1183 + $0x2c] sm:$0xf]
      %v1196 = vld [vmem:[%s1183 + $0x30] sm:$0xf]
      %v1197 = vld [vmem:[%s1183 + $0x34] sm:$0xf]
      %v1198 = vld [vmem:[%s1183 + $0x38] sm:$0xf]
      %v1199 = vld [vmem:[%s1183 + $0x3c] sm:$0xf]
      %v1216 = vunpack.c.l.b16 %v1184
      %v1217 = vunpack.c.l.b16 %v1185
      %v1218 = vunpack.c.l.b16 %v1186
      %v1219 = vunpack.c.l.b16 %v1187
      %v1220 = vunpack.c.l.b16 %v1188
      %v1221 = vunpack.c.l.b16 %v1189
      %v1222 = vunpack.c.l.b16 %v1190
      %v1223 = vunpack.c.l.b16 %v1191
      %v1224 = vunpack.c.l.b16 %v1192
      %v1225 = vunpack.c.l.b16 %v1193
      %v1226 = vunpack.c.l.b16 %v1194
      %v1227 = vunpack.c.l.b16 %v1195
      %v1228 = vunpack.c.l.b16 %v1196
      %v1229 = vunpack.c.l.b16 %v1197
      %v1230 = vunpack.c.l.b16 %v1198
      %v1231 = vunpack.c.l.b16 %v1199
      %v1232 = vpack.c.b16 %v1217, %v1216
      %v1233 = vpack.c.b16 %v1219, %v1218
      %v1234 = vpack.c.b16 %v1221, %v1220
      %v1235 = vpack.c.b16 %v1223, %v1222
      %v1236 = vpack.c.b16 %v1225, %v1224
      %v1237 = vpack.c.b16 %v1227, %v1226
      %v1238 = vpack.c.b16 %v1229, %v1228
      %v1239 = vpack.c.b16 %v1231, %v1230
      %1248 = vmatpush.bf16.msra.mxu0 %v1239
      %1249 = vmatpush.bf16.msra.mxu0 %v1238
      %1250 = vmatpush.bf16.msra.mxu0 %v1237
      %1251 = vmatpush.bf16.msra.mxu0 %v1236
      %1252 = vmatpush.bf16.msra.mxu0 %v1235
      %1253 = vmatpush.bf16.msra.mxu0 %v1234
      %1254 = vmatpush.bf16.msra.mxu0 %v1233
      %1255 = vmatpush.bf16.msra.mxu0 %v1232
      %1256 = vmatmul.bf16.gmra.mxu0 %v1182
      %v1257 = vpop.f32.mrf.mxu0
      %v1258 = vadd.f32 0.0, %v1257
      %v1259 = vpop.f32.mrf.mxu0
      %1260 = vdwg.mxu0
      %v1261 = vadd.f32 %v1180, %v1258
      %v1262 = vld [vmem:[%s736] ss:$2 sm:$0xff]
      %v1263 = vpack.c.bf16 %v1262, %v1262
      %s1264 = scalar_lea.vmem %s5, 512
      %v1265 = vld [vmem:[%s1264] sm:$0xf]
      %v1266 = vld [vmem:[%s1264 + $0x4] sm:$0xf]
      %v1267 = vld [vmem:[%s1264 + $0x8] sm:$0xf]
      %v1268 = vld [vmem:[%s1264 + $0xc] sm:$0xf]
      %v1269 = vld [vmem:[%s1264 + $0x10] sm:$0xf]
      %v1270 = vld [vmem:[%s1264 + $0x14] sm:$0xf]
      %v1271 = vld [vmem:[%s1264 + $0x18] sm:$0xf]
      %v1272 = vld [vmem:[%s1264 + $0x1c] sm:$0xf]
      %v1273 = vld [vmem:[%s1264 + $0x20] sm:$0xf]
      %v1274 = vld [vmem:[%s1264 + $0x24] sm:$0xf]
      %v1275 = vld [vmem:[%s1264 + $0x28] sm:$0xf]
      %v1276 = vld [vmem:[%s1264 + $0x2c] sm:$0xf]
      %v1277 = vld [vmem:[%s1264 + $0x30] sm:$0xf]
      %v1278 = vld [vmem:[%s1264 + $0x34] sm:$0xf]
      %v1279 = vld [vmem:[%s1264 + $0x38] sm:$0xf]
      %v1280 = vld [vmem:[%s1264 + $0x3c] sm:$0xf]
      %v1297 = vunpack.c.l.b16 %v1265
      %v1298 = vunpack.c.l.b16 %v1266
      %v1299 = vunpack.c.l.b16 %v1267
      %v1300 = vunpack.c.l.b16 %v1268
      %v1301 = vunpack.c.l.b16 %v1269
      %v1302 = vunpack.c.l.b16 %v1270
      %v1303 = vunpack.c.l.b16 %v1271
      %v1304 = vunpack.c.l.b16 %v1272
      %v1305 = vunpack.c.l.b16 %v1273
      %v1306 = vunpack.c.l.b16 %v1274
      %v1307 = vunpack.c.l.b16 %v1275
      %v1308 = vunpack.c.l.b16 %v1276
      %v1309 = vunpack.c.l.b16 %v1277
      %v1310 = vunpack.c.l.b16 %v1278
      %v1311 = vunpack.c.l.b16 %v1279
      %v1312 = vunpack.c.l.b16 %v1280
      %v1313 = vpack.c.b16 %v1298, %v1297
      %v1314 = vpack.c.b16 %v1300, %v1299
      %v1315 = vpack.c.b16 %v1302, %v1301
      %v1316 = vpack.c.b16 %v1304, %v1303
      %v1317 = vpack.c.b16 %v1306, %v1305
      %v1318 = vpack.c.b16 %v1308, %v1307
      %v1319 = vpack.c.b16 %v1310, %v1309
      %v1320 = vpack.c.b16 %v1312, %v1311
      %1329 = vmatpush.bf16.msra.mxu0 %v1320
      %1330 = vmatpush.bf16.msra.mxu0 %v1319
      %1331 = vmatpush.bf16.msra.mxu0 %v1318
      %1332 = vmatpush.bf16.msra.mxu0 %v1317
      %1333 = vmatpush.bf16.msra.mxu0 %v1316
      %1334 = vmatpush.bf16.msra.mxu0 %v1315
      %1335 = vmatpush.bf16.msra.mxu0 %v1314
      %1336 = vmatpush.bf16.msra.mxu0 %v1313
      %1337 = vmatmul.bf16.gmra.mxu0 %v1263
      %v1338 = vpop.f32.mrf.mxu0
      %v1339 = vadd.f32 0.0, %v1338
      %v1340 = vpop.f32.mrf.mxu0
      %1341 = vdwg.mxu0
      %v1342 = vadd.f32 %v1261, %v1339
      %v1343 = vpack.c.bf16 %v1342, %v1342
      %1344 = vst [vmem:[%s506] sm:$0xf] %v1343
      %v1345 = vunpack.c.l.bf16 %v1343
      %v1346 = vld [vmem:[%s510] sm:$0x1]
      %v1347 = vrot.slane %v1345, 4
      %v1348 = vadd.f32 %v1345, %v1347
      %v1349 = vrot.slane %v1348, 2
      %v1350 = vadd.f32 %v1348, %v1349
      %v1351 = vrot.slane %v1350, 1
      %v1352 = vadd.f32 %v1350, %v1351
      %v1353 = vadd.f32 %v1346, %v1352
      %1354 = vst [vmem:[%s510] sm:$0x1] %v1353
      %v1355 = vld [vmem:[%s510 + $0x1] sm:$0x1]
      %v1356 = vmul.f32 %v1345, %v1345
      %v1357 = vrot.slane %v1356, 4
      %v1358 = vadd.f32 %v1356, %v1357
      %v1359 = vrot.slane %v1358, 2
      %v1360 = vadd.f32 %v1358, %v1359
      %v1361 = vrot.slane %v1360, 1
      %v1362 = vadd.f32 %v1360, %v1361
      %v1363 = vadd.f32 %v1355, %v1362
      %1364 = vst [vmem:[%s510 + $0x1] sm:$0x1] %v1363
      %p1365 = scmp.lt.s32.totalorder %s23, 1
      %s1366 = scalar_select %p1365, %s23, 1
      %p1367 = scmp.lt.s32.totalorder %s24, 7
      %s1368 = scalar_select %p1367, %s24, 7
      %s1369 = smul.addr %s1366, 8
      %s1370 = sadd.s32 %s1368, %s1369
      %s1371 = smul.addr %s1370, 4
      %s1372 = scalar_lea.vmem %s6, %s1371
      %p1373 = scmp.lt.s32.totalorder %s23, 1
      %s1374 = scalar_select %p1373, %s23, 1
      %s1375 = smul.addr %s1374, 8
      %s1376 = scalar_lea.vmem %s7, %s1375
      // Predicated region
      $region49: #{bottleneck_forward.5} parent=43 // pred_check
        %p1377 = pneg %p232
      $region50: #{bottleneck_forward.5} parent=43 // pred_check_branch
        %1379 = sbr.rel (%p1377) target = $region52
      $region51: #{bottleneck_forward.5} parent=43 // pred_region
        _
      $region52: #{bottleneck_forward.5} parent=43 // pred_fallthru
        _
      // Predicated region
      $region53: #{bottleneck_forward.5} parent=43 // pred_check
        %p1380 = pneg %p258
      $region54: #{bottleneck_forward.5} parent=43 // pred_check_branch
        %1382 = sbr.rel (%p1380) target = $region56
      $region55: #{bottleneck_forward.5} parent=43 // pred_region
        _
      $region56: #{bottleneck_forward.5} parent=43 // pred_fallthru
        _
    $region44: #{bottleneck_forward.5} parent=5 // pred_fallthru
      _
    %p1383 = scmp.le.s32.totalorder 2, %s14
    // Predicated region
    $region57: #{bottleneck_forward.5} parent=5 // pred_check
      %p1384 = pneg %p1383
    $region58: #{bottleneck_forward.5} parent=5 // pred_check_branch
      %1386 = sbr.rel (%p1384) target = $region60
    $region59: #{bottleneck_forward.5} parent=5 // pred_region
      %s1387 = ssub.s32 %s14, 2
      // Predicated region
      $region61: #{bottleneck_forward.5} parent=59 // pred_check
        %p1388 = pneg %p238
      $region62: #{bottleneck_forward.5} parent=59 // pred_check_branch
        %1390 = sbr.rel (%p1388) target = $region64
      $region63: #{bottleneck_forward.5} parent=59 // pred_region
        %p1391 = scmp.lt.s32.totalorder %s25, 1
        %s1392 = scalar_select %p1391, %s25, 1
        %p1393 = scmp.lt.s32.totalorder %s26, 7
        %s1394 = scalar_select %p1393, %s26, 7
        %s1395 = smul.addr %s1392, 8
        %s1396 = sadd.s32 %s1394, %s1395
        %s1397 = smul.addr %s1396, 4
        %s1398 = scalar_lea.vmem %s6, %s1397
      $region64: #{bottleneck_forward.5} parent=59 // pred_fallthru
        _
      // Predicated region
      $region65: #{bottleneck_forward.5} parent=59 // pred_check
        %p1399 = pneg %p264
      $region66: #{bottleneck_forward.5} parent=59 // pred_check_branch
        %1401 = sbr.rel (%p1399) target = $region68
      $region67: #{bottleneck_forward.5} parent=59 // pred_region
        %p1402 = scmp.lt.s32.totalorder %s25, 1
        %s1403 = scalar_select %p1402, %s25, 1
        %s1404 = smul.addr %s1403, 8
        %s1405 = scalar_lea.vmem %s7, %s1404
      $region68: #{bottleneck_forward.5} parent=59 // pred_fallthru
        _
    $region60: #{bottleneck_forward.5} parent=5 // pred_fallthru
      _
  $region6: #{bottleneck_forward.5} parent=0 // loop_footer
    %s18 = sadd.s32 1, %s14
  $region7: #{bottleneck_forward.5} parent=0 // loop_footer_branch
    %13 = sbr.rel target = $region3
  $region8: #{bottleneck_forward.5} parent=0 // loop_exit
    _

</llo_original>
